<compile_context>
chip_gen: v7x
topology: tpu7x:2x2x1
jax: 0.10.0
libtpu: 0.0.40
codegen_flags: <defaults>
</compile_context>

<pallas_src>
import functools

import jax
import jax.numpy as jnp
from jax import lax
from jax.experimental import pallas as pl
from jax.experimental.pallas import tpu as pltpu

LANES = 128
BN_EPS = 1e-5


def _round_up(x, m):
    return (x + m - 1) // m * m


def _pad2(x, rows, cols):
    return jnp.pad(x, ((0, rows - x.shape[0]), (0, cols - x.shape[1])))


# ---------------------------------------------------------------------------
# Kernel 1: relu(maxpool3x3(conv(x)))  -- pool folded into the conv matmuls.
# ---------------------------------------------------------------------------
def _conv_pool_relu_kernel(p_ref, w_ref, b_ref, o_ref, *, n_views):
    w = w_ref[...]
    # All V matmuls are independent -> the MXU streams them back-to-back; the
    # max runs as a VPU tree afterwards (no serial pop->max->push chain).
    ys = [jnp.dot(p_ref[v], w, preferred_element_type=jnp.float32)
          for v in range(n_views)]
    while len(ys) > 1:
        nxt = [jnp.maximum(ys[i], ys[i + 1]) for i in range(0, len(ys) - 1, 2)]
        if len(ys) % 2:
            nxt.append(ys[-1])
        ys = nxt
    o_ref[...] = jnp.maximum(ys[0] + b_ref[...], 0.0).astype(o_ref.dtype)


def conv_pool_relu(views, w_mat, bias, *, tm=128):
    """views: (V, M, K) bf16 per-pool-offset im2col rows. Returns (Mp,128) bf16."""
    V, M, K = views.shape
    Kp = _round_up(K, LANES)
    tm = min(tm, _round_up(M, 8))
    Mp = _round_up(M, tm)
    p = jnp.pad(views.astype(jnp.bfloat16), ((0, 0), (0, Mp - M), (0, Kp - K)))
    wp = _pad2(w_mat, Kp, LANES).astype(jnp.bfloat16)
    bp = _pad2(bias.reshape(1, -1), 1, LANES).astype(jnp.float32)
    return pl.pallas_call(
        functools.partial(_conv_pool_relu_kernel, n_views=V),
        out_shape=jax.ShapeDtypeStruct((Mp, LANES), jnp.bfloat16),
        grid=(Mp // tm,),
        in_specs=[
            pl.BlockSpec((V, tm, Kp), lambda i: (0, i, 0)),
            pl.BlockSpec((Kp, LANES), lambda i: (0, 0)),
            pl.BlockSpec((1, LANES), lambda i: (0, 0)),
        ],
        out_specs=pl.BlockSpec((tm, LANES), lambda i: (i, 0)),
        compiler_params=pltpu.CompilerParams(
            dimension_semantics=("parallel",)),
    )(p, wp, bp)


# ---------------------------------------------------------------------------
# Kernel 2: relu(batchnorm(conv))  -- training-mode (batch-stat, biased var) BN.
# ---------------------------------------------------------------------------
def _conv_bn_relu_kernel(p_ref, w_ref, b_ref, g_ref, bt_ref, o_ref,
                         *, eps, m_valid):
    y = jnp.dot(p_ref[...], w_ref[...],
                preferred_element_type=jnp.float32) + b_ref[...]
    # One-pass stats over the VALID rows only (padded rows would contribute
    # y == bias and skew the statistics).
    valid = lax.broadcasted_iota(jnp.int32, y.shape, 0) < m_valid
    ym = jnp.where(valid, y, 0.0)
    s1 = jnp.sum(ym, axis=0, keepdims=True)
    s2 = jnp.sum(ym * ym, axis=0, keepdims=True)
    inv_m = 1.0 / float(m_valid)
    mean = s1 * inv_m
    var = jnp.maximum(s2 * inv_m - mean * mean, 0.0)
    scale = lax.rsqrt(var + eps) * g_ref[...]
    shift = bt_ref[...] - mean * scale
    o_ref[...] = jnp.maximum(y * scale + shift, 0.0).astype(o_ref.dtype)


def conv_bn_relu(patches, w_mat, bias, gamma, beta, *, eps=BN_EPS):
    """patches: (M, K) bf16 im2col rows (whole batch -> exact batch stats)."""
    M, K = patches.shape
    Kp = _round_up(K, LANES)
    Mp = _round_up(M, 32)  # dense bf16 sublane tiles, unmasked stores
    p = _pad2(patches.astype(jnp.bfloat16), Mp, Kp)
    wp = _pad2(w_mat, Kp, LANES).astype(jnp.bfloat16)
    bp = _pad2(bias.reshape(1, -1), 1, LANES).astype(jnp.float32)
    gp = _pad2(gamma.reshape(1, -1), 1, LANES).astype(jnp.float32)
    bt = _pad2(beta.reshape(1, -1), 1, LANES).astype(jnp.float32)
    return pl.pallas_call(
        functools.partial(_conv_bn_relu_kernel, eps=eps, m_valid=M),
        out_shape=jax.ShapeDtypeStruct((Mp, LANES), jnp.bfloat16),
        grid=(1,),
        in_specs=[
            pl.BlockSpec((Mp, Kp), lambda i: (0, 0)),
            pl.BlockSpec((Kp, LANES), lambda i: (0, 0)),
            pl.BlockSpec((1, LANES), lambda i: (0, 0)),
            pl.BlockSpec((1, LANES), lambda i: (0, 0)),
            pl.BlockSpec((1, LANES), lambda i: (0, 0)),
        ],
        out_specs=pl.BlockSpec((Mp, LANES), lambda i: (0, 0)),
        compiler_params=pltpu.CompilerParams(
            dimension_semantics=("arbitrary",)),
    )(p, wp, bp, gp, bt)


# ---------------------------------------------------------------------------
# Kernel 3 (fused tail): relu(pool3(conv4)) -> relu(bn2(conv5 1x1 p1)) -> fc1.
# ---------------------------------------------------------------------------
def _tail_kernel(v_ref, w4_ref, b4_ref, w5_ref, b5_ref, g_ref, bt_ref,
                 wfi_ref, wfb_ref, bf_ref, o_ref,
                 *, n_views, m4, n_batch, n_total, n_border, eps):
    # conv4 with the 3x3 max-pool folded in: ONE matmul over all pool-offset
    # views stacked in the rows, then a VPU max over the per-view row groups.
    y4 = jnp.dot(v_ref[...], w4_ref[...], preferred_element_type=jnp.float32)
    acc = y4[0:m4]
    for v in range(1, n_views):
        acc = jnp.maximum(acc, y4[v * m4:(v + 1) * m4])
    a4 = jnp.maximum(acc + b4_ref[...], 0.0)                      # (m4, 128)

    # conv5 (1x1, padding=1): only the interior 2x2 positions see real data;
    # every border position of the 4x4 output is exactly the bias.
    b5 = b5_ref[...]
    y5 = jnp.dot(a4.astype(jnp.bfloat16), w5_ref[...],
                 preferred_element_type=jnp.float32) + b5         # (m4, 128)

    # BatchNorm2 (training-mode batch stats, biased var) over all N*4*4
    # positions in one pass; the bias-only border rows enter analytically.
    s1 = jnp.sum(y5, axis=0, keepdims=True) + n_border * b5
    s2 = jnp.sum(y5 * y5, axis=0, keepdims=True) + n_border * (b5 * b5)
    mean = s1 * (1.0 / n_total)
    var = jnp.maximum(s2 * (1.0 / n_total) - mean * mean, 0.0)
    scale = lax.rsqrt(var + eps) * g_ref[...]
    shift = bt_ref[...] - mean * scale
    a5i = jnp.maximum(y5 * scale + shift, 0.0)                    # interior rows
    a5b = jnp.maximum(b5 * scale + shift, 0.0)                    # any border row

    # fc1 over the NCHW-flattened 24*4*4 feature. fc1 weights were pre-permuted
    # per spatial position at trace time; the 12 border positions (identical
    # activation) are collapsed into a single summed weight.
    logits = jnp.dot(a5i[0:n_batch].astype(jnp.bfloat16), wfi_ref[0],
                     preferred_element_type=jnp.float32)
    for k in range(1, m4 // n_batch):
        logits = logits + jnp.dot(
            a5i[k * n_batch:(k + 1) * n_batch].astype(jnp.bfloat16),
            wfi_ref[k], preferred_element_type=jnp.float32)
    border = jnp.dot(jnp.broadcast_to(a5b, (n_batch, a5b.shape[1])
                                      ).astype(jnp.bfloat16),
                     wfb_ref[...], preferred_element_type=jnp.float32)
    o_ref[...] = logits + border + bf_ref[...]


def tail_fused(v4, w4_mat, b4, w5_mat, b5, gamma2, beta2,
               wfc_int, wfc_border, fc_bias, *, n_batch, n_pos, n_border,
               eps=BN_EPS):
    """v4: (V, M4, K4) per-pool-offset im2col rows, M4 rows ordered (ph,pw,n)."""
    V, M4, K4 = v4.shape
    Kp = _round_up(K4, LANES)
    vr = jnp.pad(v4.astype(jnp.bfloat16),
                 ((0, 0), (0, 0), (0, Kp - K4))).reshape(V * M4, Kp)
    w4p = _pad2(w4_mat, Kp, LANES).astype(jnp.bfloat16)
    b4p = _pad2(b4.reshape(1, -1), 1, LANES).astype(jnp.float32)
    w5p = _pad2(w5_mat, LANES, LANES).astype(jnp.bfloat16)
    b5p = _pad2(b5.reshape(1, -1), 1, LANES).astype(jnp.float32)
    g2p = _pad2(gamma2.reshape(1, -1), 1, LANES).astype(jnp.float32)
    bt2p = _pad2(beta2.reshape(1, -1), 1, LANES).astype(jnp.float32)
    bfp = _pad2(fc_bias.reshape(1, -1), 1, LANES).astype(jnp.float32)

    vec = pl.BlockSpec((1, LANES), lambda i: (0, 0))
    sq = pl.BlockSpec((LANES, LANES), lambda i: (0, 0))
    kern = functools.partial(
        _tail_kernel, n_views=V, m4=M4, n_batch=n_batch,
        n_total=float(n_pos), n_border=float(n_border), eps=eps)
    return pl.pallas_call(
        kern,
        out_shape=jax.ShapeDtypeStruct((n_batch, LANES), jnp.float32),
        grid=(1,),
        in_specs=[
            pl.BlockSpec((V * M4, Kp), lambda i: (0, 0)),
            pl.BlockSpec((Kp, LANES), lambda i: (0, 0)), vec,   # conv4 w, b
            sq, vec,                                            # conv5 w, b
            vec, vec,                                           # bn2 gamma, beta
            pl.BlockSpec(wfc_int.shape, lambda i: (0, 0, 0)),   # fc1 interior
            sq, vec,                                            # fc1 border, bias
        ],
        out_specs=pl.BlockSpec((n_batch, LANES), lambda i: (0, 0)),
        compiler_params=pltpu.CompilerParams(
            dimension_semantics=("arbitrary",)),
    )(vr, w4p, b4p, w5p, b5p, g2p, bt2p, wfc_int, wfc_border, bfp)


# ---------------------------------------------------------------------------
# XLA glue: window extraction (tiny tensors, fuses with slicing / padding).
# ---------------------------------------------------------------------------
def _im2col(xp, KH, KW, stride, OH, OW):
    """Rows ordered (n, oh, ow); K ordered (kh, kw, cin)."""
    N, _, _, Cin = xp.shape
    taps = []
    for i in range(KH):
        for j in range(KW):
            taps.append(xp[:, i:i + (OH - 1) * stride + 1:stride,
                              j:j + (OW - 1) * stride + 1:stride, :])
    p = jnp.stack(taps, axis=3)
    return p.reshape(N * OH * OW, KH * KW * Cin)


def _im2col_pooled(xp, KH, KW, stride, pool, PH, PW):
    """Per-pool-offset im2col: (pool*pool, N*PH*PW, KH*KW*Cin)."""
    N, _, _, Cin = xp.shape
    step = stride * pool
    views = []
    for dh in range(pool):
        for dw in range(pool):
            taps = []
            for i in range(KH):
                for j in range(KW):
                    h0 = stride * dh + i
                    w0 = stride * dw + j
                    taps.append(xp[:, h0:h0 + step * (PH - 1) + 1:step,
                                      w0:w0 + step * (PW - 1) + 1:step, :])
            pv = jnp.stack(taps, axis=3)
            views.append(pv.reshape(N * PH * PW, KH * KW * Cin))
    return jnp.stack(views, axis=0)


def _w_mat(w):
    """PyTorch (Cout,Cin,KH,KW) -> (KH*KW*Cin, Cout) matching im2col K order."""
    Cout, Cin, KH, KW = w.shape
    return w.transpose(2, 3, 1, 0).reshape(KH * KW * Cin, Cout)


# ---------------------------------------------------------------------------
# parameters & forward
# ---------------------------------------------------------------------------
def init_params(key):
    ks = jax.random.split(key, 10)

    def conv_w(k, cout, cin, kh, kw):
        bound = 1.0 / float(cin * kh * kw) ** 0.5
        return jax.random.uniform(k, (cout, cin, kh, kw), jnp.float32, -bound, bound)

    def vec(k, n, fan_in):
        bound = 1.0 / float(fan_in) ** 0.5
        return jax.random.uniform(k, (n,), jnp.float32, -bound, bound)

    return {
        "conv1_w": conv_w(ks[0], 12, 3, 5, 5), "conv1_b": vec(ks[1], 12, 3 * 5 * 5),
        "conv2_w": conv_w(ks[2], 12, 12, 2, 2), "conv2_b": vec(ks[3], 12, 12 * 2 * 2),
        "conv4_w": conv_w(ks[4], 24, 12, 3, 3), "conv4_b": vec(ks[5], 24, 12 * 3 * 3),
        "conv5_w": conv_w(ks[6], 24, 24, 1, 1), "conv5_b": vec(ks[7], 24, 24 * 1 * 1),
        "fc1_w": jax.random.uniform(ks[8], (4, 384), jnp.float32,
                                    -1.0 / 384.0 ** 0.5, 1.0 / 384.0 ** 0.5),
        "fc1_b": vec(ks[9], 4, 384),
        "bn1_gamma": jnp.ones((12,), jnp.float32), "bn1_beta": jnp.zeros((12,), jnp.float32),
        "bn2_gamma": jnp.ones((24,), jnp.float32), "bn2_beta": jnp.zeros((24,), jnp.float32),
    }


def network_forward(params, x_nchw):
    # NCHW -> NHWC at the boundary; cast to bf16 BEFORE any im2col glue so the
    # glue tensors and kernel DMAs move half the bytes (MXU takes bf16 anyway).
    x = jnp.transpose(x_nchw, (0, 2, 3, 1)).astype(jnp.bfloat16)
    N, H, _, _ = x.shape

    # stage 1: relu(pool1(conv1(x)))  -- conv 5x5 s4 p1, maxpool 3x3
    H1 = (H + 2 - 5) // 4 + 1                                   # 48
    P1 = H1 // 3                                                # 16
    xp1 = jnp.pad(x, ((0, 0), (1, 1), (1, 1), (0, 0)))
    v1 = _im2col_pooled(xp1, 5, 5, 4, 3, P1, P1)                # (9, N*P1*P1, 75)
    a1 = conv_pool_relu(v1, _w_mat(params["conv1_w"]), params["conv1_b"])
    a1 = a1[:N * P1 * P1, :12].reshape(N, P1, P1, 12)           # bf16

    # stage 2: relu(bn1(conv2(.)))  -- conv 2x2 s1 p2 + batch-stat BN + relu
    H2 = P1 + 4 - 2 + 1                                         # 19
    xp2 = jnp.pad(a1, ((0, 0), (2, 2), (2, 2), (0, 0)))
    p2 = _im2col(xp2, 2, 2, 1, H2, H2)                          # (N*H2*H2, 48)
    a2 = conv_bn_relu(p2, _w_mat(params["conv2_w"]), params["conv2_b"],
                      params["bn1_gamma"], params["bn1_beta"])
    a2 = a2[:N * H2 * H2, :12].reshape(N, H2, H2, 12)           # bf16

    # stage 3: pool2 3x3 -- folded into XLA glue (max over 9 strided views
    # fuses with the slicing; no dedicated kernel launch / HBM stack).
    P2 = H2 // 3                                                # 6
    a3 = functools.reduce(
        jnp.maximum,
        [a2[:, dh:dh + 3 * P2:3, dw:dw + 3 * P2:3, :]
         for dh in range(3) for dw in range(3)])                # (N, P2, P2, 12)

    # stages 4-6 fused in ONE kernel:
    #   relu(pool3(conv4 3x3 p1)), relu(bn2(conv5 1x1 p1)), fc1
    P3 = P2 // 3                                                # 2
    H5 = P3 + 2                                                 # 4
    xp4 = jnp.pad(a3, ((0, 0), (1, 1), (1, 1), (0, 0)))
    v4 = _im2col_pooled(xp4, 3, 3, 1, 3, P3, P3)                # (9, N*P3*P3, 108)
    V4, _, K4 = v4.shape
    # reorder rows (n, ph, pw) -> (ph, pw, n): the kernel's fc1 stage consumes
    # contiguous per-position row groups.
    v4 = v4.reshape(V4, N, P3 * P3, K4).transpose(0, 2, 1, 3)
    v4 = v4.reshape(V4, P3 * P3 * N, K4)

    # fc1 weight pre-permuted at trace time (PyTorch NCHW flatten order baked
    # in): one (24->4) slice per interior spatial position, plus the summed
    # slice for the 12 border positions (whose activation is identical).
    Wfc = params["fc1_w"].reshape(4, 24, H5, H5)                # [o, c, h, w]
    Whw = jnp.transpose(Wfc, (2, 3, 1, 0))                      # [h, w, c, o]
    w_int = Whw[1:1 + P3, 1:1 + P3].reshape(P3 * P3, 24, 4)
    w_bord = jnp.sum(Whw, axis=(0, 1)) - jnp.sum(w_int, axis=0)
    wfc_int = jnp.pad(w_int, ((0, 0), (0, LANES - 24), (0, LANES - 4))
                      ).astype(jnp.bfloat16)
    wfc_border = _pad2(w_bord, LANES, LANES).astype(jnp.bfloat16)

    logits = tail_fused(
        v4, _w_mat(params["conv4_w"]), params["conv4_b"],
        _w_mat(params["conv5_w"]), params["conv5_b"],
        params["bn2_gamma"], params["bn2_beta"],
        wfc_int, wfc_border, params["fc1_b"],
        n_batch=N, n_pos=N * H5 * H5, n_border=N * (H5 * H5 - P3 * P3))
    return logits[:, :4]


if __name__ == "__main__":
    key = jax.random.PRNGKey(0)
    pkey, xkey = jax.random.split(key)
    params = init_params(pkey)
    # 192x192 input traces to the 4x4 feature map fc1 requires (24*4*4 = 384).
    x = jax.random.normal(xkey, (2, 3, 192, 192), jnp.float32)
    out = jax.jit(network_forward)(params, x)
    out = jax.block_until_ready(out)
    assert out.shape == (2, 4), out.shape
    assert bool(jnp.all(jnp.isfinite(out)))
    print("KERNEL_OK")
</pallas_src>

<mosaic_0001>
module attributes {stable_mosaic.version = 11 : i64} {
  func.func @_conv_pool_relu_kernel(%arg0: i32, %arg1: memref<9x128x128xbf16, #tpu.memory_space<vmem>>, %arg2: memref<128x128xbf16, #tpu.memory_space<vmem>>, %arg3: memref<1x128xf32, #tpu.memory_space<vmem>>, %arg4: memref<128x128xbf16, #tpu.memory_space<vmem>>) attributes {dimension_semantics = [#tpu.dimension_semantics<parallel>], iteration_bounds = array<i64: 4>, scalar_prefetch = 0 : i64, scratch_operands = 0 : i64, tpu.core_type = #tpu.core_type<tc>, window_params = [{transform_indices = @transform_0, window_bounds = array<i64: 9, 128, 128>}, {pipeline_mode = #tpu.pipeline_mode<synchronous>, transform_indices = @transform_1, window_bounds = array<i64: 128, 128>}, {pipeline_mode = #tpu.pipeline_mode<synchronous>, transform_indices = @transform_2, window_bounds = array<i64: 1, 128>}, {transform_indices = @transform_3, window_bounds = array<i64: 128, 128>}]} {
    %c0 = arith.constant 0 : index
    %c0_0 = arith.constant 0 : index
    %0 = vector.load %arg2[%c0, %c0_0] : memref<128x128xbf16, #tpu.memory_space<vmem>>, vector<128x128xbf16>
    %c0_1 = arith.constant 0 : index
    %c0_2 = arith.constant 0 : index
    %c0_3 = arith.constant 0 : index
    %1 = vector.load %arg1[%c0_1, %c0_2, %c0_3] : memref<9x128x128xbf16, #tpu.memory_space<vmem>>, vector<1x128x128xbf16>
    %2 = vector.shape_cast %1 : vector<1x128x128xbf16> to vector<128x128xbf16>
    %cst = arith.constant dense<0.000000e+00> : vector<128x128xf32>
    %3 = tpu.matmul %2, %0, %cst {dimension_numbers = #tpu.dot_dimension_numbers<[1], [0], [0], [1], [0, 0, 1, 1], [], []>} : vector<128x128xbf16>, vector<128x128xbf16>, vector<128x128xf32> -> vector<128x128xf32>
    %c1 = arith.constant 1 : index
    %c0_4 = arith.constant 0 : index
    %c0_5 = arith.constant 0 : index
    %4 = vector.load %arg1[%c1, %c0_4, %c0_5] : memref<9x128x128xbf16, #tpu.memory_space<vmem>>, vector<1x128x128xbf16>
    %5 = vector.shape_cast %4 : vector<1x128x128xbf16> to vector<128x128xbf16>
    %cst_6 = arith.constant dense<0.000000e+00> : vector<128x128xf32>
    %6 = tpu.matmul %5, %0, %cst_6 {dimension_numbers = #tpu.dot_dimension_numbers<[1], [0], [0], [1], [0, 0, 1, 1], [], []>} : vector<128x128xbf16>, vector<128x128xbf16>, vector<128x128xf32> -> vector<128x128xf32>
    %c2 = arith.constant 2 : index
    %c0_7 = arith.constant 0 : index
    %c0_8 = arith.constant 0 : index
    %7 = vector.load %arg1[%c2, %c0_7, %c0_8] : memref<9x128x128xbf16, #tpu.memory_space<vmem>>, vector<1x128x128xbf16>
    %8 = vector.shape_cast %7 : vector<1x128x128xbf16> to vector<128x128xbf16>
    %cst_9 = arith.constant dense<0.000000e+00> : vector<128x128xf32>
    %9 = tpu.matmul %8, %0, %cst_9 {dimension_numbers = #tpu.dot_dimension_numbers<[1], [0], [0], [1], [0, 0, 1, 1], [], []>} : vector<128x128xbf16>, vector<128x128xbf16>, vector<128x128xf32> -> vector<128x128xf32>
    %c3 = arith.constant 3 : index
    %c0_10 = arith.constant 0 : index
    %c0_11 = arith.constant 0 : index
    %10 = vector.load %arg1[%c3, %c0_10, %c0_11] : memref<9x128x128xbf16, #tpu.memory_space<vmem>>, vector<1x128x128xbf16>
    %11 = vector.shape_cast %10 : vector<1x128x128xbf16> to vector<128x128xbf16>
    %cst_12 = arith.constant dense<0.000000e+00> : vector<128x128xf32>
    %12 = tpu.matmul %11, %0, %cst_12 {dimension_numbers = #tpu.dot_dimension_numbers<[1], [0], [0], [1], [0, 0, 1, 1], [], []>} : vector<128x128xbf16>, vector<128x128xbf16>, vector<128x128xf32> -> vector<128x128xf32>
    %c4 = arith.constant 4 : index
    %c0_13 = arith.constant 0 : index
    %c0_14 = arith.constant 0 : index
    %13 = vector.load %arg1[%c4, %c0_13, %c0_14] : memref<9x128x128xbf16, #tpu.memory_space<vmem>>, vector<1x128x128xbf16>
    %14 = vector.shape_cast %13 : vector<1x128x128xbf16> to vector<128x128xbf16>
    %cst_15 = arith.constant dense<0.000000e+00> : vector<128x128xf32>
    %15 = tpu.matmul %14, %0, %cst_15 {dimension_numbers = #tpu.dot_dimension_numbers<[1], [0], [0], [1], [0, 0, 1, 1], [], []>} : vector<128x128xbf16>, vector<128x128xbf16>, vector<128x128xf32> -> vector<128x128xf32>
    %c5 = arith.constant 5 : index
    %c0_16 = arith.constant 0 : index
    %c0_17 = arith.constant 0 : index
    %16 = vector.load %arg1[%c5, %c0_16, %c0_17] : memref<9x128x128xbf16, #tpu.memory_space<vmem>>, vector<1x128x128xbf16>
    %17 = vector.shape_cast %16 : vector<1x128x128xbf16> to vector<128x128xbf16>
    %cst_18 = arith.constant dense<0.000000e+00> : vector<128x128xf32>
    %18 = tpu.matmul %17, %0, %cst_18 {dimension_numbers = #tpu.dot_dimension_numbers<[1], [0], [0], [1], [0, 0, 1, 1], [], []>} : vector<128x128xbf16>, vector<128x128xbf16>, vector<128x128xf32> -> vector<128x128xf32>
    %c6 = arith.constant 6 : index
    %c0_19 = arith.constant 0 : index
    %c0_20 = arith.constant 0 : index
    %19 = vector.load %arg1[%c6, %c0_19, %c0_20] : memref<9x128x128xbf16, #tpu.memory_space<vmem>>, vector<1x128x128xbf16>
    %20 = vector.shape_cast %19 : vector<1x128x128xbf16> to vector<128x128xbf16>
    %cst_21 = arith.constant dense<0.000000e+00> : vector<128x128xf32>
    %21 = tpu.matmul %20, %0, %cst_21 {dimension_numbers = #tpu.dot_dimension_numbers<[1], [0], [0], [1], [0, 0, 1, 1], [], []>} : vector<128x128xbf16>, vector<128x128xbf16>, vector<128x128xf32> -> vector<128x128xf32>
    %c7 = arith.constant 7 : index
    %c0_22 = arith.constant 0 : index
    %c0_23 = arith.constant 0 : index
    %22 = vector.load %arg1[%c7, %c0_22, %c0_23] : memref<9x128x128xbf16, #tpu.memory_space<vmem>>, vector<1x128x128xbf16>
    %23 = vector.shape_cast %22 : vector<1x128x128xbf16> to vector<128x128xbf16>
    %cst_24 = arith.constant dense<0.000000e+00> : vector<128x128xf32>
    %24 = tpu.matmul %23, %0, %cst_24 {dimension_numbers = #tpu.dot_dimension_numbers<[1], [0], [0], [1], [0, 0, 1, 1], [], []>} : vector<128x128xbf16>, vector<128x128xbf16>, vector<128x128xf32> -> vector<128x128xf32>
    %c8 = arith.constant 8 : index
    %c0_25 = arith.constant 0 : index
    %c0_26 = arith.constant 0 : index
    %25 = vector.load %arg1[%c8, %c0_25, %c0_26] : memref<9x128x128xbf16, #tpu.memory_space<vmem>>, vector<1x128x128xbf16>
    %26 = vector.shape_cast %25 : vector<1x128x128xbf16> to vector<128x128xbf16>
    %cst_27 = arith.constant dense<0.000000e+00> : vector<128x128xf32>
    %27 = tpu.matmul %26, %0, %cst_27 {dimension_numbers = #tpu.dot_dimension_numbers<[1], [0], [0], [1], [0, 0, 1, 1], [], []>} : vector<128x128xbf16>, vector<128x128xbf16>, vector<128x128xf32> -> vector<128x128xf32>
    %28 = arith.maximumf %3, %6 : vector<128x128xf32>
    %29 = arith.maximumf %9, %12 : vector<128x128xf32>
    %30 = arith.maximumf %15, %18 : vector<128x128xf32>
    %31 = arith.maximumf %21, %24 : vector<128x128xf32>
    %32 = arith.maximumf %28, %29 : vector<128x128xf32>
    %33 = arith.maximumf %30, %31 : vector<128x128xf32>
    %34 = arith.maximumf %32, %33 : vector<128x128xf32>
    %35 = arith.maximumf %34, %27 : vector<128x128xf32>
    %c0_28 = arith.constant 0 : index
    %c0_29 = arith.constant 0 : index
    %36 = vector.load %arg3[%c0_28, %c0_29] : memref<1x128xf32, #tpu.memory_space<vmem>>, vector<1x128xf32>
    %37 = vector.broadcast %36 : vector<1x128xf32> to vector<128x128xf32>
    %38 = arith.addf %35, %37 : vector<128x128xf32>
    %cst_30 = arith.constant 0.000000e+00 : f32
    %39 = vector.broadcast %cst_30 : f32 to vector<128x128xf32>
    %40 = arith.maximumf %38, %39 : vector<128x128xf32>
    %41 = arith.truncf %40 : vector<128x128xf32> to vector<128x128xbf16>
    %c0_31 = arith.constant 0 : index
    %c0_32 = arith.constant 0 : index
    %42 = vector.load %arg4[%c0_31, %c0_32] : memref<128x128xbf16, #tpu.memory_space<vmem>>, vector<128x128xbf16>
    tpu.vector_store %arg4[%c0_31, %c0_32], %41 {strides = array<i32>} : memref<128x128xbf16, #tpu.memory_space<vmem>>, vector<128x128xbf16>,
    return
  }
  func.func @transform_0(%arg0: i32) -> (i32, i32, i32) {
    %c0_i32 = arith.constant 0 : i32
    %c0_i32_0 = arith.constant 0 : i32
    %c0_i32_1 = arith.constant 0 : i32
    return %c0_i32, %arg0, %c0_i32_0 : i32, i32, i32
  }
  func.func @transform_1(%arg0: i32) -> (i32, i32) {
    %c0_i32 = arith.constant 0 : i32
    %c0_i32_0 = arith.constant 0 : i32
    %c0_i32_1 = arith.constant 0 : i32
    return %c0_i32, %c0_i32_0 : i32, i32
  }
  func.func @transform_2(%arg0: i32) -> (i32, i32) {
    %c0_i32 = arith.constant 0 : i32
    %c0_i32_0 = arith.constant 0 : i32
    %c0_i32_1 = arith.constant 0 : i32
    return %c0_i32, %c0_i32_0 : i32, i32
  }
  func.func @transform_3(%arg0: i32) -> (i32, i32) {
    %c0_i32 = arith.constant 0 : i32
    %c0_i32_0 = arith.constant 0 : i32
    return %arg0, %c0_i32 : i32, i32
  }
}

module attributes {stable_mosaic.version = 11 : i64} {
  func.func @_conv_bn_relu_kernel(%arg0: i32, %arg1: memref<736x128xbf16, #tpu.memory_space<vmem>>, %arg2: memref<128x128xbf16, #tpu.memory_space<vmem>>, %arg3: memref<1x128xf32, #tpu.memory_space<vmem>>, %arg4: memref<1x128xf32, #tpu.memory_space<vmem>>, %arg5: memref<1x128xf32, #tpu.memory_space<vmem>>, %arg6: memref<736x128xbf16, #tpu.memory_space<vmem>>) attributes {dimension_semantics = [#tpu.dimension_semantics<arbitrary>], iteration_bounds = array<i64: 1>, scalar_prefetch = 0 : i64, scratch_operands = 0 : i64, tpu.core_type = #tpu.core_type<tc>, window_params = [{pipeline_mode = #tpu.pipeline_mode<synchronous>, transform_indices = @transform_0, window_bounds = array<i64: 736, 128>}, {pipeline_mode = #tpu.pipeline_mode<synchronous>, transform_indices = @transform_1, window_bounds = array<i64: 128, 128>}, {pipeline_mode = #tpu.pipeline_mode<synchronous>, transform_indices = @transform_2, window_bounds = array<i64: 1, 128>}, {pipeline_mode = #tpu.pipeline_mode<synchronous>, transform_indices = @transform_3, window_bounds = array<i64: 1, 128>}, {pipeline_mode = #tpu.pipeline_mode<synchronous>, transform_indices = @transform_4, window_bounds = array<i64: 1, 128>}, {pipeline_mode = #tpu.pipeline_mode<synchronous>, transform_indices = @transform_5, window_bounds = array<i64: 736, 128>}]} {
    %c0 = arith.constant 0 : index
    %c0_0 = arith.constant 0 : index
    %0 = vector.load %arg1[%c0, %c0_0] : memref<736x128xbf16, #tpu.memory_space<vmem>>, vector<736x128xbf16>
    %c0_1 = arith.constant 0 : index
    %c0_2 = arith.constant 0 : index
    %1 = vector.load %arg2[%c0_1, %c0_2] : memref<128x128xbf16, #tpu.memory_space<vmem>>, vector<128x128xbf16>
    %cst = arith.constant dense<0.000000e+00> : vector<736x128xf32>
    %2 = tpu.matmul %0, %1, %cst {dimension_numbers = #tpu.dot_dimension_numbers<[1], [0], [0], [1], [0, 0, 1, 1], [], []>} : vector<736x128xbf16>, vector<128x128xbf16>, vector<736x128xf32> -> vector<736x128xf32>
    %c0_3 = arith.constant 0 : index
    %c0_4 = arith.constant 0 : index
    %3 = vector.load %arg3[%c0_3, %c0_4] : memref<1x128xf32, #tpu.memory_space<vmem>>, vector<1x128xf32>
    %4 = vector.broadcast %3 : vector<1x128xf32> to vector<736x128xf32>
    %5 = arith.addf %2, %4 : vector<736x128xf32>
    %6 = tpu.iota {dimensions = array<i32: 0>} : vector<736x128xi32>
    %c722_i32 = arith.constant 722 : i32
    %7 = vector.broadcast %c722_i32 : i32 to vector<736x128xi32>
    %8 = arith.cmpi slt, %6, %7 : vector<736x128xi32>
    %cst_5 = arith.constant 0.000000e+00 : f32
    %9 = vector.broadcast %cst_5 : f32 to vector<736x128xf32>
    %10 = arith.select %8, %5, %9 : vector<736x128xi1>, vector<736x128xf32>
    %cst_6 = arith.constant dense<0.000000e+00> : vector<128xf32>
    %11 = vector.multi_reduction <add>, %10, %cst_6 [0] : vector<736x128xf32> to vector<128xf32>
    %12 = vector.shape_cast %11 : vector<128xf32> to vector<1x128xf32>
    %13 = arith.mulf %10, %10 : vector<736x128xf32>
    %cst_7 = arith.constant dense<0.000000e+00> : vector<128xf32>
    %14 = vector.multi_reduction <add>, %13, %cst_7 [0] : vector<736x128xf32> to vector<128xf32>
    %15 = vector.shape_cast %14 : vector<128xf32> to vector<1x128xf32>
    %cst_8 = arith.constant 0.00138504151 : f32
    %16 = vector.broadcast %cst_8 : f32 to vector<1x128xf32>
    %17 = arith.mulf %12, %16 : vector<1x128xf32>
    %cst_9 = arith.constant 0.00138504151 : f32
    %18 = vector.broadcast %cst_9 : f32 to vector<1x128xf32>
    %19 = arith.mulf %15, %18 : vector<1x128xf32>
    %20 = arith.mulf %17, %17 : vector<1x128xf32>
    %21 = arith.subf %19, %20 : vector<1x128xf32>
    %cst_10 = arith.constant 0.000000e+00 : f32
    %22 = vector.broadcast %cst_10 : f32 to vector<1x128xf32>
    %23 = arith.maximumf %21, %22 : vector<1x128xf32>
    %cst_11 = arith.constant 9.99999974E-6 : f32
    %24 = vector.broadcast %cst_11 : f32 to vector<1x128xf32>
    %25 = arith.addf %23, %24 : vector<1x128xf32>
    %26 = math.rsqrt %25 : vector<1x128xf32>
    %c0_12 = arith.constant 0 : index
    %c0_13 = arith.constant 0 : index
    %27 = vector.load %arg4[%c0_12, %c0_13] : memref<1x128xf32, #tpu.memory_space<vmem>>, vector<1x128xf32>
    %28 = arith.mulf %26, %27 : vector<1x128xf32>
    %c0_14 = arith.constant 0 : index
    %c0_15 = arith.constant 0 : index
    %29 = vector.load %arg5[%c0_14, %c0_15] : memref<1x128xf32, #tpu.memory_space<vmem>>, vector<1x128xf32>
    %30 = arith.mulf %17, %28 : vector<1x128xf32>
    %31 = arith.subf %29, %30 : vector<1x128xf32>
    %32 = vector.broadcast %28 : vector<1x128xf32> to vector<736x128xf32>
    %33 = arith.mulf %5, %32 : vector<736x128xf32>
    %34 = vector.broadcast %31 : vector<1x128xf32> to vector<736x128xf32>
    %35 = arith.addf %33, %34 : vector<736x128xf32>
    %cst_16 = arith.constant 0.000000e+00 : f32
    %36 = vector.broadcast %cst_16 : f32 to vector<736x128xf32>
    %37 = arith.maximumf %35, %36 : vector<736x128xf32>
    %38 = arith.truncf %37 : vector<736x128xf32> to vector<736x128xbf16>
    %c0_17 = arith.constant 0 : index
    %c0_18 = arith.constant 0 : index
    %39 = vector.load %arg6[%c0_17, %c0_18] : memref<736x128xbf16, #tpu.memory_space<vmem>>, vector<736x128xbf16>
    tpu.vector_store %arg6[%c0_17, %c0_18], %38 {strides = array<i32>} : memref<736x128xbf16, #tpu.memory_space<vmem>>, vector<736x128xbf16>,
    return
  }
  func.func @transform_0(%arg0: i32) -> (i32, i32) {
    %c0_i32 = arith.constant 0 : i32
    %c0_i32_0 = arith.constant 0 : i32
    %c0_i32_1 = arith.constant 0 : i32
    return %c0_i32, %c0_i32_0 : i32, i32
  }
  func.func @transform_1(%arg0: i32) -> (i32, i32) {
    %c0_i32 = arith.constant 0 : i32
    %c0_i32_0 = arith.constant 0 : i32
    %c0_i32_1 = arith.constant 0 : i32
    return %c0_i32, %c0_i32_0 : i32, i32
  }
  func.func @transform_2(%arg0: i32) -> (i32, i32) {
    %c0_i32 = arith.constant 0 : i32
    %c0_i32_0 = arith.constant 0 : i32
    %c0_i32_1 = arith.constant 0 : i32
    return %c0_i32, %c0_i32_0 : i32, i32
  }
  func.func @transform_3(%arg0: i32) -> (i32, i32) {
    %c0_i32 = arith.constant 0 : i32
    %c0_i32_0 = arith.constant 0 : i32
    %c0_i32_1 = arith.constant 0 : i32
    return %c0_i32, %c0_i32_0 : i32, i32
  }
  func.func @transform_4(%arg0: i32) -> (i32, i32) {
    %c0_i32 = arith.constant 0 : i32
    %c0_i32_0 = arith.constant 0 : i32
    %c0_i32_1 = arith.constant 0 : i32
    return %c0_i32, %c0_i32_0 : i32, i32
  }
  func.func @transform_5(%arg0: i32) -> (i32, i32) {
    %c0_i32 = arith.constant 0 : i32
    %c0_i32_0 = arith.constant 0 : i32
    %c0_i32_1 = arith.constant 0 : i32
    return %c0_i32, %c0_i32_0 : i32, i32
  }
}

module attributes {stable_mosaic.version = 11 : i64} {
  func.func @_tail_kernel(%arg0: i32, %arg1: memref<72x128xbf16, #tpu.memory_space<vmem>>, %arg2: memref<128x128xbf16, #tpu.memory_space<vmem>>, %arg3: memref<1x128xf32, #tpu.memory_space<vmem>>, %arg4: memref<128x128xbf16, #tpu.memory_space<vmem>>, %arg5: memref<1x128xf32, #tpu.memory_space<vmem>>, %arg6: memref<1x128xf32, #tpu.memory_space<vmem>>, %arg7: memref<1x128xf32, #tpu.memory_space<vmem>>, %arg8: memref<4x128x128xbf16, #tpu.memory_space<vmem>>, %arg9: memref<128x128xbf16, #tpu.memory_space<vmem>>, %arg10: memref<1x128xf32, #tpu.memory_space<vmem>>, %arg11: memref<2x128xf32, #tpu.memory_space<vmem>>) attributes {dimension_semantics = [#tpu.dimension_semantics<arbitrary>], iteration_bounds = array<i64: 1>, scalar_prefetch = 0 : i64, scratch_operands = 0 : i64, tpu.core_type = #tpu.core_type<tc>, window_params = [{pipeline_mode = #tpu.pipeline_mode<synchronous>, transform_indices = @transform_0, window_bounds = array<i64: 72, 128>}, {pipeline_mode = #tpu.pipeline_mode<synchronous>, transform_indices = @transform_1, window_bounds = array<i64: 128, 128>}, {pipeline_mode = #tpu.pipeline_mode<synchronous>, transform_indices = @transform_2, window_bounds = array<i64: 1, 128>}, {pipeline_mode = #tpu.pipeline_mode<synchronous>, transform_indices = @transform_3, window_bounds = array<i64: 128, 128>}, {pipeline_mode = #tpu.pipeline_mode<synchronous>, transform_indices = @transform_4, window_bounds = array<i64: 1, 128>}, {pipeline_mode = #tpu.pipeline_mode<synchronous>, transform_indices = @transform_5, window_bounds = array<i64: 1, 128>}, {pipeline_mode = #tpu.pipeline_mode<synchronous>, transform_indices = @transform_6, window_bounds = array<i64: 1, 128>}, {pipeline_mode = #tpu.pipeline_mode<synchronous>, transform_indices = @transform_7, window_bounds = array<i64: 4, 128, 128>}, {pipeline_mode = #tpu.pipeline_mode<synchronous>, transform_indices = @transform_8, window_bounds = array<i64: 128, 128>}, {pipeline_mode = #tpu.pipeline_mode<synchronous>, transform_indices = @transform_9, window_bounds = array<i64: 1, 128>}, {pipeline_mode = #tpu.pipeline_mode<synchronous>, transform_indices = @transform_10, window_bounds = array<i64: 2, 128>}]} {
    %c0 = arith.constant 0 : index
    %c0_0 = arith.constant 0 : index
    %0 = vector.load %arg1[%c0, %c0_0] : memref<72x128xbf16, #tpu.memory_space<vmem>>, vector<72x128xbf16>
    %c0_1 = arith.constant 0 : index
    %c0_2 = arith.constant 0 : index
    %1 = vector.load %arg2[%c0_1, %c0_2] : memref<128x128xbf16, #tpu.memory_space<vmem>>, vector<128x128xbf16>
    %cst = arith.constant dense<0.000000e+00> : vector<72x128xf32>
    %2 = tpu.matmul %0, %1, %cst {dimension_numbers = #tpu.dot_dimension_numbers<[1], [0], [0], [1], [0, 0, 1, 1], [], []>} : vector<72x128xbf16>, vector<128x128xbf16>, vector<72x128xf32> -> vector<72x128xf32>
    %3 = vector.extract_strided_slice %2 {offsets = [0, 0], sizes = [8, 128], strides = [1, 1]} : vector<72x128xf32> to vector<8x128xf32>
    %4 = vector.extract_strided_slice %2 {offsets = [8, 0], sizes = [8, 128], strides = [1, 1]} : vector<72x128xf32> to vector<8x128xf32>
    %5 = arith.maximumf %3, %4 : vector<8x128xf32>
    %6 = vector.extract_strided_slice %2 {offsets = [16, 0], sizes = [8, 128], strides = [1, 1]} : vector<72x128xf32> to vector<8x128xf32>
    %7 = arith.maximumf %5, %6 : vector<8x128xf32>
    %8 = vector.extract_strided_slice %2 {offsets = [24, 0], sizes = [8, 128], strides = [1, 1]} : vector<72x128xf32> to vector<8x128xf32>
    %9 = arith.maximumf %7, %8 : vector<8x128xf32>
    %10 = vector.extract_strided_slice %2 {offsets = [32, 0], sizes = [8, 128], strides = [1, 1]} : vector<72x128xf32> to vector<8x128xf32>
    %11 = arith.maximumf %9, %10 : vector<8x128xf32>
    %12 = vector.extract_strided_slice %2 {offsets = [40, 0], sizes = [8, 128], strides = [1, 1]} : vector<72x128xf32> to vector<8x128xf32>
    %13 = arith.maximumf %11, %12 : vector<8x128xf32>
    %14 = vector.extract_strided_slice %2 {offsets = [48, 0], sizes = [8, 128], strides = [1, 1]} : vector<72x128xf32> to vector<8x128xf32>
    %15 = arith.maximumf %13, %14 : vector<8x128xf32>
    %16 = vector.extract_strided_slice %2 {offsets = [56, 0], sizes = [8, 128], strides = [1, 1]} : vector<72x128xf32> to vector<8x128xf32>
    %17 = arith.maximumf %15, %16 : vector<8x128xf32>
    %18 = vector.extract_strided_slice %2 {offsets = [64, 0], sizes = [8, 128], strides = [1, 1]} : vector<72x128xf32> to vector<8x128xf32>
    %19 = arith.maximumf %17, %18 : vector<8x128xf32>
    %c0_3 = arith.constant 0 : index
    %c0_4 = arith.constant 0 : index
    %20 = vector.load %arg3[%c0_3, %c0_4] : memref<1x128xf32, #tpu.memory_space<vmem>>, vector<1x128xf32>
    %21 = vector.broadcast %20 : vector<1x128xf32> to vector<8x128xf32>
    %22 = arith.addf %19, %21 : vector<8x128xf32>
    %cst_5 = arith.constant 0.000000e+00 : f32
    %23 = vector.broadcast %cst_5 : f32 to vector<8x128xf32>
    %24 = arith.maximumf %22, %23 : vector<8x128xf32>
    %c0_6 = arith.constant 0 : index
    %c0_7 = arith.constant 0 : index
    %25 = vector.load %arg5[%c0_6, %c0_7] : memref<1x128xf32, #tpu.memory_space<vmem>>, vector<1x128xf32>
    %26 = arith.truncf %24 : vector<8x128xf32> to vector<8x128xbf16>
    %c0_8 = arith.constant 0 : index
    %c0_9 = arith.constant 0 : index
    %27 = vector.load %arg4[%c0_8, %c0_9] : memref<128x128xbf16, #tpu.memory_space<vmem>>, vector<128x128xbf16>
    %cst_10 = arith.constant dense<0.000000e+00> : vector<8x128xf32>
    %28 = tpu.matmul %26, %27, %cst_10 {dimension_numbers = #tpu.dot_dimension_numbers<[1], [0], [0], [1], [0, 0, 1, 1], [], []>} : vector<8x128xbf16>, vector<128x128xbf16>, vector<8x128xf32> -> vector<8x128xf32>
    %29 = vector.broadcast %25 : vector<1x128xf32> to vector<8x128xf32>
    %30 = arith.addf %28, %29 : vector<8x128xf32>
    %cst_11 = arith.constant dense<0.000000e+00> : vector<128xf32>
    %31 = vector.multi_reduction <add>, %30, %cst_11 [0] : vector<8x128xf32> to vector<128xf32>
    %32 = vector.shape_cast %31 : vector<128xf32> to vector<1x128xf32>
    %cst_12 = arith.constant 2.400000e+01 : f32
    %33 = vector.broadcast %cst_12 : f32 to vector<1x128xf32>
    %34 = arith.mulf %33, %25 : vector<1x128xf32>
    %35 = arith.addf %32, %34 : vector<1x128xf32>
    %36 = arith.mulf %30, %30 : vector<8x128xf32>
    %cst_13 = arith.constant dense<0.000000e+00> : vector<128xf32>
    %37 = vector.multi_reduction <add>, %36, %cst_13 [0] : vector<8x128xf32> to vector<128xf32>
    %38 = vector.shape_cast %37 : vector<128xf32> to vector<1x128xf32>
    %39 = arith.mulf %25, %25 : vector<1x128xf32>
    %cst_14 = arith.constant 2.400000e+01 : f32
    %40 = vector.broadcast %cst_14 : f32 to vector<1x128xf32>
    %41 = arith.mulf %40, %39 : vector<1x128xf32>
    %42 = arith.addf %38, %41 : vector<1x128xf32>
    %cst_15 = arith.constant 3.125000e-02 : f32
    %43 = vector.broadcast %cst_15 : f32 to vector<1x128xf32>
    %44 = arith.mulf %35, %43 : vector<1x128xf32>
    %cst_16 = arith.constant 3.125000e-02 : f32
    %45 = vector.broadcast %cst_16 : f32 to vector<1x128xf32>
    %46 = arith.mulf %42, %45 : vector<1x128xf32>
    %47 = arith.mulf %44, %44 : vector<1x128xf32>
    %48 = arith.subf %46, %47 : vector<1x128xf32>
    %cst_17 = arith.constant 0.000000e+00 : f32
    %49 = vector.broadcast %cst_17 : f32 to vector<1x128xf32>
    %50 = arith.maximumf %48, %49 : vector<1x128xf32>
    %cst_18 = arith.constant 9.99999974E-6 : f32
    %51 = vector.broadcast %cst_18 : f32 to vector<1x128xf32>
    %52 = arith.addf %50, %51 : vector<1x128xf32>
    %53 = math.rsqrt %52 : vector<1x128xf32>
    %c0_19 = arith.constant 0 : index
    %c0_20 = arith.constant 0 : index
    %54 = vector.load %arg6[%c0_19, %c0_20] : memref<1x128xf32, #tpu.memory_space<vmem>>, vector<1x128xf32>
    %55 = arith.mulf %53, %54 : vector<1x128xf32>
    %c0_21 = arith.constant 0 : index
    %c0_22 = arith.constant 0 : index
    %56 = vector.load %arg7[%c0_21, %c0_22] : memref<1x128xf32, #tpu.memory_space<vmem>>, vector<1x128xf32>
    %57 = arith.mulf %44, %55 : vector<1x128xf32>
    %58 = arith.subf %56, %57 : vector<1x128xf32>
    %59 = vector.broadcast %55 : vector<1x128xf32> to vector<8x128xf32>
    %60 = arith.mulf %30, %59 : vector<8x128xf32>
    %61 = vector.broadcast %58 : vector<1x128xf32> to vector<8x128xf32>
    %62 = arith.addf %60, %61 : vector<8x128xf32>
    %cst_23 = arith.constant 0.000000e+00 : f32
    %63 = vector.broadcast %cst_23 : f32 to vector<8x128xf32>
    %64 = arith.maximumf %62, %63 : vector<8x128xf32>
    %65 = arith.mulf %25, %55 : vector<1x128xf32>
    %66 = arith.addf %65, %58 : vector<1x128xf32>
    %cst_24 = arith.constant 0.000000e+00 : f32
    %67 = vector.broadcast %cst_24 : f32 to vector<1x128xf32>
    %68 = arith.maximumf %66, %67 : vector<1x128xf32>
    %69 = vector.extract_strided_slice %64 {offsets = [0, 0], sizes = [2, 128], strides = [1, 1]} : vector<8x128xf32> to vector<2x128xf32>
    %70 = arith.truncf %69 : vector<2x128xf32> to vector<2x128xbf16>
    %c0_25 = arith.constant 0 : index
    %c0_26 = arith.constant 0 : index
    %c0_27 = arith.constant 0 : index
    %71 = vector.load %arg8[%c0_25, %c0_26, %c0_27] : memref<4x128x128xbf16, #tpu.memory_space<vmem>>, vector<1x128x128xbf16>
    %72 = vector.shape_cast %71 : vector<1x128x128xbf16> to vector<128x128xbf16>
    %cst_28 = arith.constant dense<0.000000e+00> : vector<2x128xf32>
    %73 = tpu.matmul %70, %72, %cst_28 {dimension_numbers = #tpu.dot_dimension_numbers<[1], [0], [0], [1], [0, 0, 1, 1], [], []>} : vector<2x128xbf16>, vector<128x128xbf16>, vector<2x128xf32> -> vector<2x128xf32>
    %74 = vector.extract_strided_slice %64 {offsets = [2, 0], sizes = [2, 128], strides = [1, 1]} : vector<8x128xf32> to vector<2x128xf32>
    %75 = arith.truncf %74 : vector<2x128xf32> to vector<2x128xbf16>
    %c1 = arith.constant 1 : index
    %c0_29 = arith.constant 0 : index
    %c0_30 = arith.constant 0 : index
    %76 = vector.load %arg8[%c1, %c0_29, %c0_30] : memref<4x128x128xbf16, #tpu.memory_space<vmem>>, vector<1x128x128xbf16>
    %77 = vector.shape_cast %76 : vector<1x128x128xbf16> to vector<128x128xbf16>
    %cst_31 = arith.constant dense<0.000000e+00> : vector<2x128xf32>
    %78 = tpu.matmul %75, %77, %cst_31 {dimension_numbers = #tpu.dot_dimension_numbers<[1], [0], [0], [1], [0, 0, 1, 1], [], []>} : vector<2x128xbf16>, vector<128x128xbf16>, vector<2x128xf32> -> vector<2x128xf32>
    %79 = arith.addf %73, %78 : vector<2x128xf32>
    %80 = vector.extract_strided_slice %64 {offsets = [4, 0], sizes = [2, 128], strides = [1, 1]} : vector<8x128xf32> to vector<2x128xf32>
    %81 = arith.truncf %80 : vector<2x128xf32> to vector<2x128xbf16>
    %c2 = arith.constant 2 : index
    %c0_32 = arith.constant 0 : index
    %c0_33 = arith.constant 0 : index
    %82 = vector.load %arg8[%c2, %c0_32, %c0_33] : memref<4x128x128xbf16, #tpu.memory_space<vmem>>, vector<1x128x128xbf16>
    %83 = vector.shape_cast %82 : vector<1x128x128xbf16> to vector<128x128xbf16>
    %cst_34 = arith.constant dense<0.000000e+00> : vector<2x128xf32>
    %84 = tpu.matmul %81, %83, %cst_34 {dimension_numbers = #tpu.dot_dimension_numbers<[1], [0], [0], [1], [0, 0, 1, 1], [], []>} : vector<2x128xbf16>, vector<128x128xbf16>, vector<2x128xf32> -> vector<2x128xf32>
    %85 = arith.addf %79, %84 : vector<2x128xf32>
    %86 = vector.extract_strided_slice %64 {offsets = [6, 0], sizes = [2, 128], strides = [1, 1]} : vector<8x128xf32> to vector<2x128xf32>
    %87 = arith.truncf %86 : vector<2x128xf32> to vector<2x128xbf16>
    %c3 = arith.constant 3 : index
    %c0_35 = arith.constant 0 : index
    %c0_36 = arith.constant 0 : index
    %88 = vector.load %arg8[%c3, %c0_35, %c0_36] : memref<4x128x128xbf16, #tpu.memory_space<vmem>>, vector<1x128x128xbf16>
    %89 = vector.shape_cast %88 : vector<1x128x128xbf16> to vector<128x128xbf16>
    %cst_37 = arith.constant dense<0.000000e+00> : vector<2x128xf32>
    %90 = tpu.matmul %87, %89, %cst_37 {dimension_numbers = #tpu.dot_dimension_numbers<[1], [0], [0], [1], [0, 0, 1, 1], [], []>} : vector<2x128xbf16>, vector<128x128xbf16>, vector<2x128xf32> -> vector<2x128xf32>
    %91 = arith.addf %85, %90 : vector<2x128xf32>
    %92 = vector.shape_cast %68 : vector<1x128xf32> to vector<1x128xf32>
    %93 = vector.broadcast %92 : vector<1x128xf32> to vector<2x128xf32>
    %94 = arith.truncf %93 : vector<2x128xf32> to vector<2x128xbf16>
    %c0_38 = arith.constant 0 : index
    %c0_39 = arith.constant 0 : index
    %95 = vector.load %arg9[%c0_38, %c0_39] : memref<128x128xbf16, #tpu.memory_space<vmem>>, vector<128x128xbf16>
    %cst_40 = arith.constant dense<0.000000e+00> : vector<2x128xf32>
    %96 = tpu.matmul %94, %95, %cst_40 {dimension_numbers = #tpu.dot_dimension_numbers<[1], [0], [0], [1], [0, 0, 1, 1], [], []>} : vector<2x128xbf16>, vector<128x128xbf16>, vector<2x128xf32> -> vector<2x128xf32>
    %97 = arith.addf %91, %96 : vector<2x128xf32>
    %c0_41 = arith.constant 0 : index
    %c0_42 = arith.constant 0 : index
    %98 = vector.load %arg10[%c0_41, %c0_42] : memref<1x128xf32, #tpu.memory_space<vmem>>, vector<1x128xf32>
    %99 = vector.broadcast %98 : vector<1x128xf32> to vector<2x128xf32>
    %100 = arith.addf %97, %99 : vector<2x128xf32>
    %c0_43 = arith.constant 0 : index
    %c0_44 = arith.constant 0 : index
    %101 = vector.load %arg11[%c0_43, %c0_44] : memref<2x128xf32, #tpu.memory_space<vmem>>, vector<2x128xf32>
    tpu.vector_store %arg11[%c0_43, %c0_44], %100 {strides = array<i32>} : memref<2x128xf32, #tpu.memory_space<vmem>>, vector<2x128xf32>,
    return
  }
  func.func @transform_0(%arg0: i32) -> (i32, i32) {
    %c0_i32 = arith.constant 0 : i32
    %c0_i32_0 = arith.constant 0 : i32
    %c0_i32_1 = arith.constant 0 : i32
    return %c0_i32, %c0_i32_0 : i32, i32
  }
  func.func @transform_1(%arg0: i32) -> (i32, i32) {
    %c0_i32 = arith.constant 0 : i32
    %c0_i32_0 = arith.constant 0 : i32
    %c0_i32_1 = arith.constant 0 : i32
    return %c0_i32, %c0_i32_0 : i32, i32
  }
  func.func @transform_2(%arg0: i32) -> (i32, i32) {
    %c0_i32 = arith.constant 0 : i32
    %c0_i32_0 = arith.constant 0 : i32
    %c0_i32_1 = arith.constant 0 : i32
    return %c0_i32, %c0_i32_0 : i32, i32
  }
  func.func @transform_3(%arg0: i32) -> (i32, i32) {
    %c0_i32 = arith.constant 0 : i32
    %c0_i32_0 = arith.constant 0 : i32
    %c0_i32_1 = arith.constant 0 : i32
    return %c0_i32, %c0_i32_0 : i32, i32
  }
  func.func @transform_4(%arg0: i32) -> (i32, i32) {
    %c0_i32 = arith.constant 0 : i32
    %c0_i32_0 = arith.constant 0 : i32
    %c0_i32_1 = arith.constant 0 : i32
    return %c0_i32, %c0_i32_0 : i32, i32
  }
  func.func @transform_5(%arg0: i32) -> (i32, i32) {
    %c0_i32 = arith.constant 0 : i32
    %c0_i32_0 = arith.constant 0 : i32
    %c0_i32_1 = arith.constant 0 : i32
    return %c0_i32, %c0_i32_0 : i32, i32
  }
  func.func @transform_6(%arg0: i32) -> (i32, i32) {
    %c0_i32 = arith.constant 0 : i32
    %c0_i32_0 = arith.constant 0 : i32
    %c0_i32_1 = arith.constant 0 : i32
    return %c0_i32, %c0_i32_0 : i32, i32
  }
  func.func @transform_7(%arg0: i32) -> (i32, i32, i32) {
    %c0_i32 = arith.constant 0 : i32
    %c0_i32_0 = arith.constant 0 : i32
    %c0_i32_1 = arith.constant 0 : i32
    %c0_i32_2 = arith.constant 0 : i32
    return %c0_i32, %c0_i32_0, %c0_i32_1 : i32, i32, i32
  }
  func.func @transform_8(%arg0: i32) -> (i32, i32) {
    %c0_i32 = arith.constant 0 : i32
    %c0_i32_0 = arith.constant 0 : i32
    %c0_i32_1 = arith.constant 0 : i32
    return %c0_i32, %c0_i32_0 : i32, i32
  }
  func.func @transform_9(%arg0: i32) -> (i32, i32) {
    %c0_i32 = arith.constant 0 : i32
    %c0_i32_0 = arith.constant 0 : i32
    %c0_i32_1 = arith.constant 0 : i32
    return %c0_i32, %c0_i32_0 : i32, i32
  }
  func.func @transform_10(%arg0: i32) -> (i32, i32) {
    %c0_i32 = arith.constant 0 : i32
    %c0_i32_0 = arith.constant 0 : i32
    %c0_i32_1 = arith.constant 0 : i32
    return %c0_i32, %c0_i32_0 : i32, i32
  }
}

</mosaic_0001>

<llo_original>
// kernel: network_forward.3
$region0: #{network_forward.3}
  #allocation0 [shape = 'u32[]', space=smem, size = 0x4, offset = 0x4, fixed_abs, tag = 'smem constant byte address 0x4 - core index']
  #allocation1 [shape = 'u32[144,128]{1,0:T(1,128)}', space=vmem, size = 0x12000, scoped, tag = 'internal scratch']
  %s0 = inlined_call_operand.vmem [shape: bf16[9,512,128], index: 0, kind: input, shape index: {}]
  %s1 = inlined_call_operand.vmem [shape: bf16[128,128], index: 1, kind: input, shape index: {}]
  %s2 = inlined_call_operand.vmem [shape: f32[1,128], index: 2, kind: input, shape index: {}]
  %s3 = inlined_call_operand.vmem [shape: bf16[512,128], index: 3, kind: output, shape index: {}]
  %s4 = sld [smem:[#allocation0]]
  $region86: #{network_forward.3} parent=0
    _
  %s6 = ssub.s32 1, %s4
  %s7 = scalar_select 0, %s6, %s4
  $region1: #{network_forward.3} parent=0
    #allocation2 [shape = 'u8[589824]{0}', space=vmem, size = 0x90000, scoped, tag = 'input window, operand 0']
    loop: start=0, step=1, limit=6
    $region2: #{network_forward.3} parent=1 // loop_pre_header
      _
    $region3: #{network_forward.3} parent=1 // loop_header
      %s9 = sphi 0, %s13
      %p10 = scmp.ge.s32.totalorder %s9, 6
      %s19 = sphi 0, %s21
      %s22 = sphi 0, %s19
      %s23 = sphi 0, %s22
      %s39 = sphi 0, %s23
      %s43 = sphi 0, %s43
      %s45 = sphi 0, %s43
      %s46 = sphi 0, %s45
      %s60 = sphi 0, %s46
      %s64 = sphi 0, %s64
      %s66 = sphi 0, %s64
      %s67 = sphi 0, %s66
      %s81 = sphi 0, %s67
      %s87 = sphi 0, %s89
      %s90 = sphi 0, %s87
      %s91 = sphi 0, %s90
      %s107 = sphi 0, %s91
    $region4: #{network_forward.3} parent=1 // loop_header_branch
      %12 = sbr.rel (%p10) target = $region8
    $region5: #{network_forward.3} parent=1 // loop_body
      %s14 = ssub.s32 %s9, 1
      %s15 = ssub.s32 %s9, 2
      %s16 = sadd.s32 %s9, 1
      %s17 = ssub.s32 %s9, %s16
      %p18 = scmp.eq.s32.totalorder %s17, 0
      %s20 = sadd.s32 %s19, 1
      %s21 = scalar_select %p18, %s19, %s20
      %p24 = pneg %p18
      %p25 = scmp.eq.s32.totalorder %s9, 3
      %p26 = por %p24, %p25
      %p27 = scmp.ne.s32.totalorder %s19, %s22
      %p28 = scmp.eq.s32.totalorder %s9, 0
      %p29 = por %p27, %p28
      %p30 = scmp.ne.s32.totalorder %s19, %s22
      %p31 = scmp.eq.s32.totalorder %s14, 3
      %p32 = por %p30, %p31
      %p33 = scmp.ne.s32.totalorder %s22, %s23
      %p34 = scmp.eq.s32.totalorder %s14, 0
      %p35 = por %p33, %p34
      %p36 = scmp.ne.s32.totalorder %s22, %s23
      %p37 = scmp.eq.s32.totalorder %s15, 3
      %p38 = por %p36, %p37
      %p40 = scmp.ne.s32.totalorder %s23, %s39
      %p41 = scmp.eq.s32.totalorder %s15, 0
      %p42 = por %p40, %p41
      %s44 = sadd.s32 %s43, 1
      %p47 = scmp.eq.s32.totalorder %s9, 3
      %p48 = scmp.ne.s32.totalorder %s43, %s45
      %p49 = scmp.eq.s32.totalorder %s9, 0
      %p50 = por %p48, %p49
      %p51 = scmp.ne.s32.totalorder %s43, %s45
      %p52 = scmp.eq.s32.totalorder %s14, 3
      %p53 = por %p51, %p52
      %p54 = scmp.ne.s32.totalorder %s45, %s46
      %p55 = scmp.eq.s32.totalorder %s14, 0
      %p56 = por %p54, %p55
      %p57 = scmp.ne.s32.totalorder %s45, %s46
      %p58 = scmp.eq.s32.totalorder %s15, 3
      %p59 = por %p57, %p58
      %p61 = scmp.ne.s32.totalorder %s46, %s60
      %p62 = scmp.eq.s32.totalorder %s15, 0
      %p63 = por %p61, %p62
      %s65 = sadd.s32 %s64, 1
      %p68 = scmp.eq.s32.totalorder %s9, 3
      %p69 = scmp.ne.s32.totalorder %s64, %s66
      %p70 = scmp.eq.s32.totalorder %s9, 0
      %p71 = por %p69, %p70
      %p72 = scmp.ne.s32.totalorder %s64, %s66
      %p73 = scmp.eq.s32.totalorder %s14, 3
      %p74 = por %p72, %p73
      %p75 = scmp.ne.s32.totalorder %s66, %s67
      %p76 = scmp.eq.s32.totalorder %s14, 0
      %p77 = por %p75, %p76
      %p78 = scmp.ne.s32.totalorder %s66, %s67
      %p79 = scmp.eq.s32.totalorder %s15, 3
      %p80 = por %p78, %p79
      %p82 = scmp.ne.s32.totalorder %s67, %s81
      %p83 = scmp.eq.s32.totalorder %s15, 0
      %p84 = por %p82, %p83
      %s85 = ssub.s32 %s9, %s16
      %p86 = scmp.eq.s32.totalorder %s85, 0
      %s88 = sadd.s32 %s87, 1
      %s89 = scalar_select %p86, %s87, %s88
      %p92 = pneg %p86
      %p93 = scmp.eq.s32.totalorder %s9, 3
      %p94 = por %p92, %p93
      %p95 = scmp.ne.s32.totalorder %s87, %s90
      %p96 = scmp.eq.s32.totalorder %s9, 0
      %p97 = por %p95, %p96
      %p98 = scmp.ne.s32.totalorder %s87, %s90
      %p99 = scmp.eq.s32.totalorder %s14, 3
      %p100 = por %p98, %p99
      %p101 = scmp.ne.s32.totalorder %s90, %s91
      %p102 = scmp.eq.s32.totalorder %s14, 0
      %p103 = por %p101, %p102
      %p104 = scmp.ne.s32.totalorder %s90, %s91
      %p105 = scmp.eq.s32.totalorder %s15, 3
      %p106 = por %p104, %p105
      %p108 = scmp.ne.s32.totalorder %s91, %s107
      %p109 = scmp.eq.s32.totalorder %s15, 0
      %p110 = por %p108, %p109
      %p111 = scmp.le.s32.totalorder 1, %s9
      %p112 = scmp.lt.s32.totalorder %s9, 5
      %p113 = pnand %p111, %p112
      %p114 = pneg %p113
      // Predicated region
      $region9: #{network_forward.3} parent=5 // pred_check
        _
      $region10: #{network_forward.3} parent=5 // pred_check_branch
        %116 = sbr.rel (%p113) target = $region12
      $region11: #{network_forward.3} parent=5 // pred_region
        %s117 = ssub.s32 %s9, 1
        // Predicated region
        $region13: #{network_forward.3} parent=11 // pred_check
          %p118 = pneg %p56
        $region14: #{network_forward.3} parent=11 // pred_check_branch
          %120 = sbr.rel (%p118) target = $region16
        $region15: #{network_forward.3} parent=11 // pred_region
          _
        $region16: #{network_forward.3} parent=11 // pred_fallthru
          _
        // Predicated region
        $region17: #{network_forward.3} parent=11 // pred_check
          %p121 = pneg %p77
        $region18: #{network_forward.3} parent=11 // pred_check_branch
          %123 = sbr.rel (%p121) target = $region20
        $region19: #{network_forward.3} parent=11 // pred_region
          _
        $region20: #{network_forward.3} parent=11 // pred_fallthru
          _
      $region12: #{network_forward.3} parent=5 // pred_fallthru
        _
      %p124 = scmp.lt.s32.totalorder %s9, 4
      // Predicated region
      $region21: #{network_forward.3} parent=5 // pred_check
        %p125 = pneg %p124
      $region22: #{network_forward.3} parent=5 // pred_check_branch
        %127 = sbr.rel (%p125) target = $region24
      $region23: #{network_forward.3} parent=5 // pred_region
        // Predicated region
        $region25: #{network_forward.3} parent=23 // pred_check
          %p128 = pneg %p29
        $region26: #{network_forward.3} parent=23 // pred_check_branch
          %130 = sbr.rel (%p128) target = $region28
        $region27: #{network_forward.3} parent=23 // pred_region
          %s131 = sand.u32 %s19, 1
          %s132 = sand.u32 %s19, 1
          %s133 = smul.addr %s132, 576
          %s134 = scalar_lea.vmem [#allocation2], %s133
          %s135 = smul.u32 16, %s9
          %s136 = smul.addr %s135, 4
          %s137 = scalar_lea.vmem %s0, %s136
          // Predicated region
          $region29: #{network_forward.3} parent=27 // pred_check
            _
          $region30: #{network_forward.3} parent=27 // pred_check_branch
            %139 = sbr.rel (0) target = $region32
          $region31: #{network_forward.3} parent=27 // pred_region
            // Predicated region
            $region33: #{network_forward.3} parent=31 // pred_check
              _
            $region34: #{network_forward.3} parent=31 // pred_check_branch
              %141 = sbr.rel target = $region36
            $region35: #{network_forward.3} parent=31 // pred_region
              // Predicated region
              $region48: #{network_forward.3} parent=35 // pred_check
                _
              $region49: #{network_forward.3} parent=35 // pred_check_branch
                %442 = sbr.rel (0) target = $region51
              $region50: #{network_forward.3} parent=35 // pred_region
                loop: start=0, step=1, limit=1
                $region52: #{network_forward.3} parent=50 // loop_pre_header
                  _
                $region53: #{network_forward.3} parent=50 // loop_header
                  %s444 = sphi 0, %s448
                  %p445 = scmp.ge.s32.totalorder %s444, 1
                  %s449 = sphi %s137, %s137
                  %s450 = sphi %s134, %s134
                $region54: #{network_forward.3} parent=50 // loop_header_branch
                  %447 = sbr.rel (%p445) target = $region58
                $region55: #{network_forward.3} parent=50 // loop_body
                  _
                $region56: #{network_forward.3} parent=50 // loop_footer
                  %s448 = sadd.s32 1, %s444
                $region57: #{network_forward.3} parent=50 // loop_footer_branch
                  %443 = sbr.rel target = $region53
                $region58: #{network_forward.3} parent=50 // loop_exit
                  _
                loop: start=0, step=1, limit=1
                $region59: #{network_forward.3} parent=50 // loop_pre_header
                  _
                $region60: #{network_forward.3} parent=50 // loop_header
                  %s453 = sphi 0, %s457
                  %p454 = scmp.ge.s32.totalorder %s453, 1
                  %s458 = sphi %s137, %s137
                  %s459 = sphi %s134, %s134
                $region61: #{network_forward.3} parent=50 // loop_header_branch
                  %456 = sbr.rel (%p454) target = $region65
                $region62: #{network_forward.3} parent=50 // loop_body
                  %v460 = vld [vmem:[%s458] sm:$0xf]
                  %461 = vst [vmem:[%s459] sm:$0xf] %v460
                  %v462 = vld [vmem:[%s458 + $0x4] sm:$0xf]
                  %463 = vst [vmem:[%s459 + $0x4] sm:$0xf] %v462
                  %v464 = vld [vmem:[%s458 + $0x8] sm:$0xf]
                  %465 = vst [vmem:[%s459 + $0x8] sm:$0xf] %v464
                  %v466 = vld [vmem:[%s458 + $0xc] sm:$0xf]
                  %467 = vst [vmem:[%s459 + $0xc] sm:$0xf] %v466
                  %v468 = vld [vmem:[%s458 + $0x10] sm:$0xf]
                  %469 = vst [vmem:[%s459 + $0x10] sm:$0xf] %v468
                  %v470 = vld [vmem:[%s458 + $0x14] sm:$0xf]
                  %471 = vst [vmem:[%s459 + $0x14] sm:$0xf] %v470
                  %v472 = vld [vmem:[%s458 + $0x18] sm:$0xf]
                  %473 = vst [vmem:[%s459 + $0x18] sm:$0xf] %v472
                  %v474 = vld [vmem:[%s458 + $0x1c] sm:$0xf]
                  %475 = vst [vmem:[%s459 + $0x1c] sm:$0xf] %v474
                  %v476 = vld [vmem:[%s458 + $0x20] sm:$0xf]
                  %477 = vst [vmem:[%s459 + $0x20] sm:$0xf] %v476
                  %v478 = vld [vmem:[%s458 + $0x24] sm:$0xf]
                  %479 = vst [vmem:[%s459 + $0x24] sm:$0xf] %v478
                  %v480 = vld [vmem:[%s458 + $0x28] sm:$0xf]
                  %481 = vst [vmem:[%s459 + $0x28] sm:$0xf] %v480
                  %v482 = vld [vmem:[%s458 + $0x2c] sm:$0xf]
                  %483 = vst [vmem:[%s459 + $0x2c] sm:$0xf] %v482
                  %v484 = vld [vmem:[%s458 + $0x30] sm:$0xf]
                  %485 = vst [vmem:[%s459 + $0x30] sm:$0xf] %v484
                  %v486 = vld [vmem:[%s458 + $0x34] sm:$0xf]
                  %487 = vst [vmem:[%s459 + $0x34] sm:$0xf] %v486
                  %v488 = vld [vmem:[%s458 + $0x38] sm:$0xf]
                  %489 = vst [vmem:[%s459 + $0x38] sm:$0xf] %v488
                  %v490 = vld [vmem:[%s458 + $0x3c] sm:$0xf]
                  %491 = vst [vmem:[%s459 + $0x3c] sm:$0xf] %v490
                  %v492 = vld [vmem:[%s458 + $0x100] sm:$0xf]
                  %493 = vst [vmem:[%s459 + $0x40] sm:$0xf] %v492
                  %v494 = vld [vmem:[%s458 + $0x104] sm:$0xf]
                  %495 = vst [vmem:[%s459 + $0x44] sm:$0xf] %v494
                  %v496 = vld [vmem:[%s458 + $0x108] sm:$0xf]
                  %497 = vst [vmem:[%s459 + $0x48] sm:$0xf] %v496
                  %v498 = vld [vmem:[%s458 + $0x10c] sm:$0xf]
                  %499 = vst [vmem:[%s459 + $0x4c] sm:$0xf] %v498
                  %v500 = vld [vmem:[%s458 + $0x110] sm:$0xf]
                  %501 = vst [vmem:[%s459 + $0x50] sm:$0xf] %v500
                  %v502 = vld [vmem:[%s458 + $0x114] sm:$0xf]
                  %503 = vst [vmem:[%s459 + $0x54] sm:$0xf] %v502
                  %v504 = vld [vmem:[%s458 + $0x118] sm:$0xf]
                  %505 = vst [vmem:[%s459 + $0x58] sm:$0xf] %v504
                  %v506 = vld [vmem:[%s458 + $0x11c] sm:$0xf]
                  %507 = vst [vmem:[%s459 + $0x5c] sm:$0xf] %v506
                  %v508 = vld [vmem:[%s458 + $0x120] sm:$0xf]
                  %509 = vst [vmem:[%s459 + $0x60] sm:$0xf] %v508
                  %v510 = vld [vmem:[%s458 + $0x124] sm:$0xf]
                  %511 = vst [vmem:[%s459 + $0x64] sm:$0xf] %v510
                  %v512 = vld [vmem:[%s458 + $0x128] sm:$0xf]
                  %513 = vst [vmem:[%s459 + $0x68] sm:$0xf] %v512
                  %v514 = vld [vmem:[%s458 + $0x12c] sm:$0xf]
                  %515 = vst [vmem:[%s459 + $0x6c] sm:$0xf] %v514
                  %v516 = vld [vmem:[%s458 + $0x130] sm:$0xf]
                  %517 = vst [vmem:[%s459 + $0x70] sm:$0xf] %v516
                  %v518 = vld [vmem:[%s458 + $0x134] sm:$0xf]
                  %519 = vst [vmem:[%s459 + $0x74] sm:$0xf] %v518
                  %v520 = vld [vmem:[%s458 + $0x138] sm:$0xf]
                  %521 = vst [vmem:[%s459 + $0x78] sm:$0xf] %v520
                  %v522 = vld [vmem:[%s458 + $0x13c] sm:$0xf]
                  %523 = vst [vmem:[%s459 + $0x7c] sm:$0xf] %v522
                  %v524 = vld [vmem:[%s458 + $0x200] sm:$0xf]
                  %525 = vst [vmem:[%s459 + $0x80] sm:$0xf] %v524
                  %v526 = vld [vmem:[%s458 + $0x204] sm:$0xf]
                  %527 = vst [vmem:[%s459 + $0x84] sm:$0xf] %v526
                  %v528 = vld [vmem:[%s458 + $0x208] sm:$0xf]
                  %529 = vst [vmem:[%s459 + $0x88] sm:$0xf] %v528
                  %v530 = vld [vmem:[%s458 + $0x20c] sm:$0xf]
                  %531 = vst [vmem:[%s459 + $0x8c] sm:$0xf] %v530
                  %v532 = vld [vmem:[%s458 + $0x210] sm:$0xf]
                  %533 = vst [vmem:[%s459 + $0x90] sm:$0xf] %v532
                  %v534 = vld [vmem:[%s458 + $0x214] sm:$0xf]
                  %535 = vst [vmem:[%s459 + $0x94] sm:$0xf] %v534
                  %v536 = vld [vmem:[%s458 + $0x218] sm:$0xf]
                  %537 = vst [vmem:[%s459 + $0x98] sm:$0xf] %v536
                  %v538 = vld [vmem:[%s458 + $0x21c] sm:$0xf]
                  %539 = vst [vmem:[%s459 + $0x9c] sm:$0xf] %v538
                  %v540 = vld [vmem:[%s458 + $0x220] sm:$0xf]
                  %541 = vst [vmem:[%s459 + $0xa0] sm:$0xf] %v540
                  %v542 = vld [vmem:[%s458 + $0x224] sm:$0xf]
                  %543 = vst [vmem:[%s459 + $0xa4] sm:$0xf] %v542
                  %v544 = vld [vmem:[%s458 + $0x228] sm:$0xf]
                  %545 = vst [vmem:[%s459 + $0xa8] sm:$0xf] %v544
                  %v546 = vld [vmem:[%s458 + $0x22c] sm:$0xf]
                  %547 = vst [vmem:[%s459 + $0xac] sm:$0xf] %v546
                  %v548 = vld [vmem:[%s458 + $0x230] sm:$0xf]
                  %549 = vst [vmem:[%s459 + $0xb0] sm:$0xf] %v548
                  %v550 = vld [vmem:[%s458 + $0x234] sm:$0xf]
                  %551 = vst [vmem:[%s459 + $0xb4] sm:$0xf] %v550
                  %v552 = vld [vmem:[%s458 + $0x238] sm:$0xf]
                  %553 = vst [vmem:[%s459 + $0xb8] sm:$0xf] %v552
                  %v554 = vld [vmem:[%s458 + $0x23c] sm:$0xf]
                  %555 = vst [vmem:[%s459 + $0xbc] sm:$0xf] %v554
                  %v556 = vld [vmem:[%s458 + $0x300] sm:$0xf]
                  %557 = vst [vmem:[%s459 + $0xc0] sm:$0xf] %v556
                  %v558 = vld [vmem:[%s458 + $0x304] sm:$0xf]
                  %559 = vst [vmem:[%s459 + $0xc4] sm:$0xf] %v558
                  %v560 = vld [vmem:[%s458 + $0x308] sm:$0xf]
                  %561 = vst [vmem:[%s459 + $0xc8] sm:$0xf] %v560
                  %v562 = vld [vmem:[%s458 + $0x30c] sm:$0xf]
                  %563 = vst [vmem:[%s459 + $0xcc] sm:$0xf] %v562
                  %v564 = vld [vmem:[%s458 + $0x310] sm:$0xf]
                  %565 = vst [vmem:[%s459 + $0xd0] sm:$0xf] %v564
                  %v566 = vld [vmem:[%s458 + $0x314] sm:$0xf]
                  %567 = vst [vmem:[%s459 + $0xd4] sm:$0xf] %v566
                  %v568 = vld [vmem:[%s458 + $0x318] sm:$0xf]
                  %569 = vst [vmem:[%s459 + $0xd8] sm:$0xf] %v568
                  %v570 = vld [vmem:[%s458 + $0x31c] sm:$0xf]
                  %571 = vst [vmem:[%s459 + $0xdc] sm:$0xf] %v570
                  %v572 = vld [vmem:[%s458 + $0x320] sm:$0xf]
                  %573 = vst [vmem:[%s459 + $0xe0] sm:$0xf] %v572
                  %v574 = vld [vmem:[%s458 + $0x324] sm:$0xf]
                  %575 = vst [vmem:[%s459 + $0xe4] sm:$0xf] %v574
                  %v576 = vld [vmem:[%s458 + $0x328] sm:$0xf]
                  %577 = vst [vmem:[%s459 + $0xe8] sm:$0xf] %v576
                  %v578 = vld [vmem:[%s458 + $0x32c] sm:$0xf]
                  %579 = vst [vmem:[%s459 + $0xec] sm:$0xf] %v578
                  %v580 = vld [vmem:[%s458 + $0x330] sm:$0xf]
                  %581 = vst [vmem:[%s459 + $0xf0] sm:$0xf] %v580
                  %v582 = vld [vmem:[%s458 + $0x334] sm:$0xf]
                  %583 = vst [vmem:[%s459 + $0xf4] sm:$0xf] %v582
                  %v584 = vld [vmem:[%s458 + $0x338] sm:$0xf]
                  %585 = vst [vmem:[%s459 + $0xf8] sm:$0xf] %v584
                  %v586 = vld [vmem:[%s458 + $0x33c] sm:$0xf]
                  %587 = vst [vmem:[%s459 + $0xfc] sm:$0xf] %v586
                  %v588 = vld [vmem:[%s458 + $0x400] sm:$0xf]
                  %589 = vst [vmem:[%s459 + $0x100] sm:$0xf] %v588
                  %v590 = vld [vmem:[%s458 + $0x404] sm:$0xf]
                  %591 = vst [vmem:[%s459 + $0x104] sm:$0xf] %v590
                  %v592 = vld [vmem:[%s458 + $0x408] sm:$0xf]
                  %593 = vst [vmem:[%s459 + $0x108] sm:$0xf] %v592
                  %v594 = vld [vmem:[%s458 + $0x40c] sm:$0xf]
                  %595 = vst [vmem:[%s459 + $0x10c] sm:$0xf] %v594
                  %v596 = vld [vmem:[%s458 + $0x410] sm:$0xf]
                  %597 = vst [vmem:[%s459 + $0x110] sm:$0xf] %v596
                  %v598 = vld [vmem:[%s458 + $0x414] sm:$0xf]
                  %599 = vst [vmem:[%s459 + $0x114] sm:$0xf] %v598
                  %v600 = vld [vmem:[%s458 + $0x418] sm:$0xf]
                  %601 = vst [vmem:[%s459 + $0x118] sm:$0xf] %v600
                  %v602 = vld [vmem:[%s458 + $0x41c] sm:$0xf]
                  %603 = vst [vmem:[%s459 + $0x11c] sm:$0xf] %v602
                  %v604 = vld [vmem:[%s458 + $0x420] sm:$0xf]
                  %605 = vst [vmem:[%s459 + $0x120] sm:$0xf] %v604
                  %v606 = vld [vmem:[%s458 + $0x424] sm:$0xf]
                  %607 = vst [vmem:[%s459 + $0x124] sm:$0xf] %v606
                  %v608 = vld [vmem:[%s458 + $0x428] sm:$0xf]
                  %609 = vst [vmem:[%s459 + $0x128] sm:$0xf] %v608
                  %v610 = vld [vmem:[%s458 + $0x42c] sm:$0xf]
                  %611 = vst [vmem:[%s459 + $0x12c] sm:$0xf] %v610
                  %v612 = vld [vmem:[%s458 + $0x430] sm:$0xf]
                  %613 = vst [vmem:[%s459 + $0x130] sm:$0xf] %v612
                  %v614 = vld [vmem:[%s458 + $0x434] sm:$0xf]
                  %615 = vst [vmem:[%s459 + $0x134] sm:$0xf] %v614
                  %v616 = vld [vmem:[%s458 + $0x438] sm:$0xf]
                  %617 = vst [vmem:[%s459 + $0x138] sm:$0xf] %v616
                  %v618 = vld [vmem:[%s458 + $0x43c] sm:$0xf]
                  %619 = vst [vmem:[%s459 + $0x13c] sm:$0xf] %v618
                  %v620 = vld [vmem:[%s458 + $0x500] sm:$0xf]
                  %621 = vst [vmem:[%s459 + $0x140] sm:$0xf] %v620
                  %v622 = vld [vmem:[%s458 + $0x504] sm:$0xf]
                  %623 = vst [vmem:[%s459 + $0x144] sm:$0xf] %v622
                  %v624 = vld [vmem:[%s458 + $0x508] sm:$0xf]
                  %625 = vst [vmem:[%s459 + $0x148] sm:$0xf] %v624
                  %v626 = vld [vmem:[%s458 + $0x50c] sm:$0xf]
                  %627 = vst [vmem:[%s459 + $0x14c] sm:$0xf] %v626
                  %v628 = vld [vmem:[%s458 + $0x510] sm:$0xf]
                  %629 = vst [vmem:[%s459 + $0x150] sm:$0xf] %v628
                  %v630 = vld [vmem:[%s458 + $0x514] sm:$0xf]
                  %631 = vst [vmem:[%s459 + $0x154] sm:$0xf] %v630
                  %v632 = vld [vmem:[%s458 + $0x518] sm:$0xf]
                  %633 = vst [vmem:[%s459 + $0x158] sm:$0xf] %v632
                  %v634 = vld [vmem:[%s458 + $0x51c] sm:$0xf]
                  %635 = vst [vmem:[%s459 + $0x15c] sm:$0xf] %v634
                  %v636 = vld [vmem:[%s458 + $0x520] sm:$0xf]
                  %637 = vst [vmem:[%s459 + $0x160] sm:$0xf] %v636
                  %v638 = vld [vmem:[%s458 + $0x524] sm:$0xf]
                  %639 = vst [vmem:[%s459 + $0x164] sm:$0xf] %v638
                  %v640 = vld [vmem:[%s458 + $0x528] sm:$0xf]
                  %641 = vst [vmem:[%s459 + $0x168] sm:$0xf] %v640
                  %v642 = vld [vmem:[%s458 + $0x52c] sm:$0xf]
                  %643 = vst [vmem:[%s459 + $0x16c] sm:$0xf] %v642
                  %v644 = vld [vmem:[%s458 + $0x530] sm:$0xf]
                  %645 = vst [vmem:[%s459 + $0x170] sm:$0xf] %v644
                  %v646 = vld [vmem:[%s458 + $0x534] sm:$0xf]
                  %647 = vst [vmem:[%s459 + $0x174] sm:$0xf] %v646
                  %v648 = vld [vmem:[%s458 + $0x538] sm:$0xf]
                  %649 = vst [vmem:[%s459 + $0x178] sm:$0xf] %v648
                  %v650 = vld [vmem:[%s458 + $0x53c] sm:$0xf]
                  %651 = vst [vmem:[%s459 + $0x17c] sm:$0xf] %v650
                  %v652 = vld [vmem:[%s458 + $0x600] sm:$0xf]
                  %653 = vst [vmem:[%s459 + $0x180] sm:$0xf] %v652
                  %v654 = vld [vmem:[%s458 + $0x604] sm:$0xf]
                  %655 = vst [vmem:[%s459 + $0x184] sm:$0xf] %v654
                  %v656 = vld [vmem:[%s458 + $0x608] sm:$0xf]
                  %657 = vst [vmem:[%s459 + $0x188] sm:$0xf] %v656
                  %v658 = vld [vmem:[%s458 + $0x60c] sm:$0xf]
                  %659 = vst [vmem:[%s459 + $0x18c] sm:$0xf] %v658
                  %v660 = vld [vmem:[%s458 + $0x610] sm:$0xf]
                  %661 = vst [vmem:[%s459 + $0x190] sm:$0xf] %v660
                  %v662 = vld [vmem:[%s458 + $0x614] sm:$0xf]
                  %663 = vst [vmem:[%s459 + $0x194] sm:$0xf] %v662
                  %v664 = vld [vmem:[%s458 + $0x618] sm:$0xf]
                  %665 = vst [vmem:[%s459 + $0x198] sm:$0xf] %v664
                  %v666 = vld [vmem:[%s458 + $0x61c] sm:$0xf]
                  %667 = vst [vmem:[%s459 + $0x19c] sm:$0xf] %v666
                  %v668 = vld [vmem:[%s458 + $0x620] sm:$0xf]
                  %669 = vst [vmem:[%s459 + $0x1a0] sm:$0xf] %v668
                  %v670 = vld [vmem:[%s458 + $0x624] sm:$0xf]
                  %671 = vst [vmem:[%s459 + $0x1a4] sm:$0xf] %v670
                  %v672 = vld [vmem:[%s458 + $0x628] sm:$0xf]
                  %673 = vst [vmem:[%s459 + $0x1a8] sm:$0xf] %v672
                  %v674 = vld [vmem:[%s458 + $0x62c] sm:$0xf]
                  %675 = vst [vmem:[%s459 + $0x1ac] sm:$0xf] %v674
                  %v676 = vld [vmem:[%s458 + $0x630] sm:$0xf]
                  %677 = vst [vmem:[%s459 + $0x1b0] sm:$0xf] %v676
                  %v678 = vld [vmem:[%s458 + $0x634] sm:$0xf]
                  %679 = vst [vmem:[%s459 + $0x1b4] sm:$0xf] %v678
                  %v680 = vld [vmem:[%s458 + $0x638] sm:$0xf]
                  %681 = vst [vmem:[%s459 + $0x1b8] sm:$0xf] %v680
                  %v682 = vld [vmem:[%s458 + $0x63c] sm:$0xf]
                  %683 = vst [vmem:[%s459 + $0x1bc] sm:$0xf] %v682
                  %v684 = vld [vmem:[%s458 + $0x700] sm:$0xf]
                  %685 = vst [vmem:[%s459 + $0x1c0] sm:$0xf] %v684
                  %v686 = vld [vmem:[%s458 + $0x704] sm:$0xf]
                  %687 = vst [vmem:[%s459 + $0x1c4] sm:$0xf] %v686
                  %v688 = vld [vmem:[%s458 + $0x708] sm:$0xf]
                  %689 = vst [vmem:[%s459 + $0x1c8] sm:$0xf] %v688
                  %v690 = vld [vmem:[%s458 + $0x70c] sm:$0xf]
                  %691 = vst [vmem:[%s459 + $0x1cc] sm:$0xf] %v690
                  %v692 = vld [vmem:[%s458 + $0x710] sm:$0xf]
                  %693 = vst [vmem:[%s459 + $0x1d0] sm:$0xf] %v692
                  %v694 = vld [vmem:[%s458 + $0x714] sm:$0xf]
                  %695 = vst [vmem:[%s459 + $0x1d4] sm:$0xf] %v694
                  %v696 = vld [vmem:[%s458 + $0x718] sm:$0xf]
                  %697 = vst [vmem:[%s459 + $0x1d8] sm:$0xf] %v696
                  %v698 = vld [vmem:[%s458 + $0x71c] sm:$0xf]
                  %699 = vst [vmem:[%s459 + $0x1dc] sm:$0xf] %v698
                  %v700 = vld [vmem:[%s458 + $0x720] sm:$0xf]
                  %701 = vst [vmem:[%s459 + $0x1e0] sm:$0xf] %v700
                  %v702 = vld [vmem:[%s458 + $0x724] sm:$0xf]
                  %703 = vst [vmem:[%s459 + $0x1e4] sm:$0xf] %v702
                  %v704 = vld [vmem:[%s458 + $0x728] sm:$0xf]
                  %705 = vst [vmem:[%s459 + $0x1e8] sm:$0xf] %v704
                  %v706 = vld [vmem:[%s458 + $0x72c] sm:$0xf]
                  %707 = vst [vmem:[%s459 + $0x1ec] sm:$0xf] %v706
                  %v708 = vld [vmem:[%s458 + $0x730] sm:$0xf]
                  %709 = vst [vmem:[%s459 + $0x1f0] sm:$0xf] %v708
                  %v710 = vld [vmem:[%s458 + $0x734] sm:$0xf]
                  %711 = vst [vmem:[%s459 + $0x1f4] sm:$0xf] %v710
                  %v712 = vld [vmem:[%s458 + $0x738] sm:$0xf]
                  %713 = vst [vmem:[%s459 + $0x1f8] sm:$0xf] %v712
                  %v714 = vld [vmem:[%s458 + $0x73c] sm:$0xf]
                  %715 = vst [vmem:[%s459 + $0x1fc] sm:$0xf] %v714
                  %v716 = vld [vmem:[%s458 + $0x800] sm:$0xf]
                  %717 = vst [vmem:[%s459 + $0x200] sm:$0xf] %v716
                  %v718 = vld [vmem:[%s458 + $0x804] sm:$0xf]
                  %719 = vst [vmem:[%s459 + $0x204] sm:$0xf] %v718
                  %v720 = vld [vmem:[%s458 + $0x808] sm:$0xf]
                  %721 = vst [vmem:[%s459 + $0x208] sm:$0xf] %v720
                  %v722 = vld [vmem:[%s458 + $0x80c] sm:$0xf]
                  %723 = vst [vmem:[%s459 + $0x20c] sm:$0xf] %v722
                  %v724 = vld [vmem:[%s458 + $0x810] sm:$0xf]
                  %725 = vst [vmem:[%s459 + $0x210] sm:$0xf] %v724
                  %v726 = vld [vmem:[%s458 + $0x814] sm:$0xf]
                  %727 = vst [vmem:[%s459 + $0x214] sm:$0xf] %v726
                  %v728 = vld [vmem:[%s458 + $0x818] sm:$0xf]
                  %729 = vst [vmem:[%s459 + $0x218] sm:$0xf] %v728
                  %v730 = vld [vmem:[%s458 + $0x81c] sm:$0xf]
                  %731 = vst [vmem:[%s459 + $0x21c] sm:$0xf] %v730
                  %v732 = vld [vmem:[%s458 + $0x820] sm:$0xf]
                  %733 = vst [vmem:[%s459 + $0x220] sm:$0xf] %v732
                  %v734 = vld [vmem:[%s458 + $0x824] sm:$0xf]
                  %735 = vst [vmem:[%s459 + $0x224] sm:$0xf] %v734
                  %v736 = vld [vmem:[%s458 + $0x828] sm:$0xf]
                  %737 = vst [vmem:[%s459 + $0x228] sm:$0xf] %v736
                  %v738 = vld [vmem:[%s458 + $0x82c] sm:$0xf]
                  %739 = vst [vmem:[%s459 + $0x22c] sm:$0xf] %v738
                  %v740 = vld [vmem:[%s458 + $0x830] sm:$0xf]
                  %741 = vst [vmem:[%s459 + $0x230] sm:$0xf] %v740
                  %v742 = vld [vmem:[%s458 + $0x834] sm:$0xf]
                  %743 = vst [vmem:[%s459 + $0x234] sm:$0xf] %v742
                  %v744 = vld [vmem:[%s458 + $0x838] sm:$0xf]
                  %745 = vst [vmem:[%s459 + $0x238] sm:$0xf] %v744
                  %v746 = vld [vmem:[%s458 + $0x83c] sm:$0xf]
                  %747 = vst [vmem:[%s459 + $0x23c] sm:$0xf] %v746
                $region63: #{network_forward.3} parent=50 // loop_footer
                  %s457 = sadd.s32 1, %s453
                $region64: #{network_forward.3} parent=50 // loop_footer_branch
                  %452 = sbr.rel target = $region60
                $region65: #{network_forward.3} parent=50 // loop_exit
                  _
              $region51: #{network_forward.3} parent=35 // pred_fallthru
                _
            $region36: #{network_forward.3} parent=31 // pred_fallthru
              _
            // Predicated region
            $region37: #{network_forward.3} parent=31 // pred_check
              _
            $region38: #{network_forward.3} parent=31 // pred_check_branch
              %143 = sbr.rel (0) target = $region40
            $region39: #{network_forward.3} parent=31 // pred_region
              loop: start=0, step=1, limit=1
              $region41: #{network_forward.3} parent=39 // loop_pre_header
                _
              $region42: #{network_forward.3} parent=39 // loop_header
                %s146 = sphi 0, %s150
                %p147 = scmp.ge.s32.totalorder %s146, 1
                %s151 = sphi %s137, %s137
                %s152 = sphi %s134, %s134
              $region43: #{network_forward.3} parent=39 // loop_header_branch
                %149 = sbr.rel (%p147) target = $region47
              $region44: #{network_forward.3} parent=39 // loop_body
                %v153 = vld [vmem:[%s151] sm:$0xf]
                %154 = vst [vmem:[%s152] sm:$0xf] %v153
                %v155 = vld [vmem:[%s151 + $0x4] sm:$0xf]
                %156 = vst [vmem:[%s152 + $0x4] sm:$0xf] %v155
                %v157 = vld [vmem:[%s151 + $0x8] sm:$0xf]
                %158 = vst [vmem:[%s152 + $0x8] sm:$0xf] %v157
                %v159 = vld [vmem:[%s151 + $0xc] sm:$0xf]
                %160 = vst [vmem:[%s152 + $0xc] sm:$0xf] %v159
                %v161 = vld [vmem:[%s151 + $0x10] sm:$0xf]
                %162 = vst [vmem:[%s152 + $0x10] sm:$0xf] %v161
                %v163 = vld [vmem:[%s151 + $0x14] sm:$0xf]
                %164 = vst [vmem:[%s152 + $0x14] sm:$0xf] %v163
                %v165 = vld [vmem:[%s151 + $0x18] sm:$0xf]
                %166 = vst [vmem:[%s152 + $0x18] sm:$0xf] %v165
                %v167 = vld [vmem:[%s151 + $0x1c] sm:$0xf]
                %168 = vst [vmem:[%s152 + $0x1c] sm:$0xf] %v167
                %v169 = vld [vmem:[%s151 + $0x20] sm:$0xf]
                %170 = vst [vmem:[%s152 + $0x20] sm:$0xf] %v169
                %v171 = vld [vmem:[%s151 + $0x24] sm:$0xf]
                %172 = vst [vmem:[%s152 + $0x24] sm:$0xf] %v171
                %v173 = vld [vmem:[%s151 + $0x28] sm:$0xf]
                %174 = vst [vmem:[%s152 + $0x28] sm:$0xf] %v173
                %v175 = vld [vmem:[%s151 + $0x2c] sm:$0xf]
                %176 = vst [vmem:[%s152 + $0x2c] sm:$0xf] %v175
                %v177 = vld [vmem:[%s151 + $0x30] sm:$0xf]
                %178 = vst [vmem:[%s152 + $0x30] sm:$0xf] %v177
                %v179 = vld [vmem:[%s151 + $0x34] sm:$0xf]
                %180 = vst [vmem:[%s152 + $0x34] sm:$0xf] %v179
                %v181 = vld [vmem:[%s151 + $0x38] sm:$0xf]
                %182 = vst [vmem:[%s152 + $0x38] sm:$0xf] %v181
                %v183 = vld [vmem:[%s151 + $0x3c] sm:$0xf]
                %184 = vst [vmem:[%s152 + $0x3c] sm:$0xf] %v183
                %v185 = vld [vmem:[%s151 + $0x100] sm:$0xf]
                %186 = vst [vmem:[%s152 + $0x40] sm:$0xf] %v185
                %v187 = vld [vmem:[%s151 + $0x104] sm:$0xf]
                %188 = vst [vmem:[%s152 + $0x44] sm:$0xf] %v187
                %v189 = vld [vmem:[%s151 + $0x108] sm:$0xf]
                %190 = vst [vmem:[%s152 + $0x48] sm:$0xf] %v189
                %v191 = vld [vmem:[%s151 + $0x10c] sm:$0xf]
                %192 = vst [vmem:[%s152 + $0x4c] sm:$0xf] %v191
                %v193 = vld [vmem:[%s151 + $0x110] sm:$0xf]
                %194 = vst [vmem:[%s152 + $0x50] sm:$0xf] %v193
                %v195 = vld [vmem:[%s151 + $0x114] sm:$0xf]
                %196 = vst [vmem:[%s152 + $0x54] sm:$0xf] %v195
                %v197 = vld [vmem:[%s151 + $0x118] sm:$0xf]
                %198 = vst [vmem:[%s152 + $0x58] sm:$0xf] %v197
                %v199 = vld [vmem:[%s151 + $0x11c] sm:$0xf]
                %200 = vst [vmem:[%s152 + $0x5c] sm:$0xf] %v199
                %v201 = vld [vmem:[%s151 + $0x120] sm:$0xf]
                %202 = vst [vmem:[%s152 + $0x60] sm:$0xf] %v201
                %v203 = vld [vmem:[%s151 + $0x124] sm:$0xf]
                %204 = vst [vmem:[%s152 + $0x64] sm:$0xf] %v203
                %v205 = vld [vmem:[%s151 + $0x128] sm:$0xf]
                %206 = vst [vmem:[%s152 + $0x68] sm:$0xf] %v205
                %v207 = vld [vmem:[%s151 + $0x12c] sm:$0xf]
                %208 = vst [vmem:[%s152 + $0x6c] sm:$0xf] %v207
                %v209 = vld [vmem:[%s151 + $0x130] sm:$0xf]
                %210 = vst [vmem:[%s152 + $0x70] sm:$0xf] %v209
                %v211 = vld [vmem:[%s151 + $0x134] sm:$0xf]
                %212 = vst [vmem:[%s152 + $0x74] sm:$0xf] %v211
                %v213 = vld [vmem:[%s151 + $0x138] sm:$0xf]
                %214 = vst [vmem:[%s152 + $0x78] sm:$0xf] %v213
                %v215 = vld [vmem:[%s151 + $0x13c] sm:$0xf]
                %216 = vst [vmem:[%s152 + $0x7c] sm:$0xf] %v215
                %v217 = vld [vmem:[%s151 + $0x200] sm:$0xf]
                %218 = vst [vmem:[%s152 + $0x80] sm:$0xf] %v217
                %v219 = vld [vmem:[%s151 + $0x204] sm:$0xf]
                %220 = vst [vmem:[%s152 + $0x84] sm:$0xf] %v219
                %v221 = vld [vmem:[%s151 + $0x208] sm:$0xf]
                %222 = vst [vmem:[%s152 + $0x88] sm:$0xf] %v221
                %v223 = vld [vmem:[%s151 + $0x20c] sm:$0xf]
                %224 = vst [vmem:[%s152 + $0x8c] sm:$0xf] %v223
                %v225 = vld [vmem:[%s151 + $0x210] sm:$0xf]
                %226 = vst [vmem:[%s152 + $0x90] sm:$0xf] %v225
                %v227 = vld [vmem:[%s151 + $0x214] sm:$0xf]
                %228 = vst [vmem:[%s152 + $0x94] sm:$0xf] %v227
                %v229 = vld [vmem:[%s151 + $0x218] sm:$0xf]
                %230 = vst [vmem:[%s152 + $0x98] sm:$0xf] %v229
                %v231 = vld [vmem:[%s151 + $0x21c] sm:$0xf]
                %232 = vst [vmem:[%s152 + $0x9c] sm:$0xf] %v231
                %v233 = vld [vmem:[%s151 + $0x220] sm:$0xf]
                %234 = vst [vmem:[%s152 + $0xa0] sm:$0xf] %v233
                %v235 = vld [vmem:[%s151 + $0x224] sm:$0xf]
                %236 = vst [vmem:[%s152 + $0xa4] sm:$0xf] %v235
                %v237 = vld [vmem:[%s151 + $0x228] sm:$0xf]
                %238 = vst [vmem:[%s152 + $0xa8] sm:$0xf] %v237
                %v239 = vld [vmem:[%s151 + $0x22c] sm:$0xf]
                %240 = vst [vmem:[%s152 + $0xac] sm:$0xf] %v239
                %v241 = vld [vmem:[%s151 + $0x230] sm:$0xf]
                %242 = vst [vmem:[%s152 + $0xb0] sm:$0xf] %v241
                %v243 = vld [vmem:[%s151 + $0x234] sm:$0xf]
                %244 = vst [vmem:[%s152 + $0xb4] sm:$0xf] %v243
                %v245 = vld [vmem:[%s151 + $0x238] sm:$0xf]
                %246 = vst [vmem:[%s152 + $0xb8] sm:$0xf] %v245
                %v247 = vld [vmem:[%s151 + $0x23c] sm:$0xf]
                %248 = vst [vmem:[%s152 + $0xbc] sm:$0xf] %v247
                %v249 = vld [vmem:[%s151 + $0x300] sm:$0xf]
                %250 = vst [vmem:[%s152 + $0xc0] sm:$0xf] %v249
                %v251 = vld [vmem:[%s151 + $0x304] sm:$0xf]
                %252 = vst [vmem:[%s152 + $0xc4] sm:$0xf] %v251
                %v253 = vld [vmem:[%s151 + $0x308] sm:$0xf]
                %254 = vst [vmem:[%s152 + $0xc8] sm:$0xf] %v253
                %v255 = vld [vmem:[%s151 + $0x30c] sm:$0xf]
                %256 = vst [vmem:[%s152 + $0xcc] sm:$0xf] %v255
                %v257 = vld [vmem:[%s151 + $0x310] sm:$0xf]
                %258 = vst [vmem:[%s152 + $0xd0] sm:$0xf] %v257
                %v259 = vld [vmem:[%s151 + $0x314] sm:$0xf]
                %260 = vst [vmem:[%s152 + $0xd4] sm:$0xf] %v259
                %v261 = vld [vmem:[%s151 + $0x318] sm:$0xf]
                %262 = vst [vmem:[%s152 + $0xd8] sm:$0xf] %v261
                %v263 = vld [vmem:[%s151 + $0x31c] sm:$0xf]
                %264 = vst [vmem:[%s152 + $0xdc] sm:$0xf] %v263
                %v265 = vld [vmem:[%s151 + $0x320] sm:$0xf]
                %266 = vst [vmem:[%s152 + $0xe0] sm:$0xf] %v265
                %v267 = vld [vmem:[%s151 + $0x324] sm:$0xf]
                %268 = vst [vmem:[%s152 + $0xe4] sm:$0xf] %v267
                %v269 = vld [vmem:[%s151 + $0x328] sm:$0xf]
                %270 = vst [vmem:[%s152 + $0xe8] sm:$0xf] %v269
                %v271 = vld [vmem:[%s151 + $0x32c] sm:$0xf]
                %272 = vst [vmem:[%s152 + $0xec] sm:$0xf] %v271
                %v273 = vld [vmem:[%s151 + $0x330] sm:$0xf]
                %274 = vst [vmem:[%s152 + $0xf0] sm:$0xf] %v273
                %v275 = vld [vmem:[%s151 + $0x334] sm:$0xf]
                %276 = vst [vmem:[%s152 + $0xf4] sm:$0xf] %v275
                %v277 = vld [vmem:[%s151 + $0x338] sm:$0xf]
                %278 = vst [vmem:[%s152 + $0xf8] sm:$0xf] %v277
                %v279 = vld [vmem:[%s151 + $0x33c] sm:$0xf]
                %280 = vst [vmem:[%s152 + $0xfc] sm:$0xf] %v279
                %v281 = vld [vmem:[%s151 + $0x400] sm:$0xf]
                %282 = vst [vmem:[%s152 + $0x100] sm:$0xf] %v281
                %v283 = vld [vmem:[%s151 + $0x404] sm:$0xf]
                %284 = vst [vmem:[%s152 + $0x104] sm:$0xf] %v283
                %v285 = vld [vmem:[%s151 + $0x408] sm:$0xf]
                %286 = vst [vmem:[%s152 + $0x108] sm:$0xf] %v285
                %v287 = vld [vmem:[%s151 + $0x40c] sm:$0xf]
                %288 = vst [vmem:[%s152 + $0x10c] sm:$0xf] %v287
                %v289 = vld [vmem:[%s151 + $0x410] sm:$0xf]
                %290 = vst [vmem:[%s152 + $0x110] sm:$0xf] %v289
                %v291 = vld [vmem:[%s151 + $0x414] sm:$0xf]
                %292 = vst [vmem:[%s152 + $0x114] sm:$0xf] %v291
                %v293 = vld [vmem:[%s151 + $0x418] sm:$0xf]
                %294 = vst [vmem:[%s152 + $0x118] sm:$0xf] %v293
                %v295 = vld [vmem:[%s151 + $0x41c] sm:$0xf]
                %296 = vst [vmem:[%s152 + $0x11c] sm:$0xf] %v295
                %v297 = vld [vmem:[%s151 + $0x420] sm:$0xf]
                %298 = vst [vmem:[%s152 + $0x120] sm:$0xf] %v297
                %v299 = vld [vmem:[%s151 + $0x424] sm:$0xf]
                %300 = vst [vmem:[%s152 + $0x124] sm:$0xf] %v299
                %v301 = vld [vmem:[%s151 + $0x428] sm:$0xf]
                %302 = vst [vmem:[%s152 + $0x128] sm:$0xf] %v301
                %v303 = vld [vmem:[%s151 + $0x42c] sm:$0xf]
                %304 = vst [vmem:[%s152 + $0x12c] sm:$0xf] %v303
                %v305 = vld [vmem:[%s151 + $0x430] sm:$0xf]
                %306 = vst [vmem:[%s152 + $0x130] sm:$0xf] %v305
                %v307 = vld [vmem:[%s151 + $0x434] sm:$0xf]
                %308 = vst [vmem:[%s152 + $0x134] sm:$0xf] %v307
                %v309 = vld [vmem:[%s151 + $0x438] sm:$0xf]
                %310 = vst [vmem:[%s152 + $0x138] sm:$0xf] %v309
                %v311 = vld [vmem:[%s151 + $0x43c] sm:$0xf]
                %312 = vst [vmem:[%s152 + $0x13c] sm:$0xf] %v311
                %v313 = vld [vmem:[%s151 + $0x500] sm:$0xf]
                %314 = vst [vmem:[%s152 + $0x140] sm:$0xf] %v313
                %v315 = vld [vmem:[%s151 + $0x504] sm:$0xf]
                %316 = vst [vmem:[%s152 + $0x144] sm:$0xf] %v315
                %v317 = vld [vmem:[%s151 + $0x508] sm:$0xf]
                %318 = vst [vmem:[%s152 + $0x148] sm:$0xf] %v317
                %v319 = vld [vmem:[%s151 + $0x50c] sm:$0xf]
                %320 = vst [vmem:[%s152 + $0x14c] sm:$0xf] %v319
                %v321 = vld [vmem:[%s151 + $0x510] sm:$0xf]
                %322 = vst [vmem:[%s152 + $0x150] sm:$0xf] %v321
                %v323 = vld [vmem:[%s151 + $0x514] sm:$0xf]
                %324 = vst [vmem:[%s152 + $0x154] sm:$0xf] %v323
                %v325 = vld [vmem:[%s151 + $0x518] sm:$0xf]
                %326 = vst [vmem:[%s152 + $0x158] sm:$0xf] %v325
                %v327 = vld [vmem:[%s151 + $0x51c] sm:$0xf]
                %328 = vst [vmem:[%s152 + $0x15c] sm:$0xf] %v327
                %v329 = vld [vmem:[%s151 + $0x520] sm:$0xf]
                %330 = vst [vmem:[%s152 + $0x160] sm:$0xf] %v329
                %v331 = vld [vmem:[%s151 + $0x524] sm:$0xf]
                %332 = vst [vmem:[%s152 + $0x164] sm:$0xf] %v331
                %v333 = vld [vmem:[%s151 + $0x528] sm:$0xf]
                %334 = vst [vmem:[%s152 + $0x168] sm:$0xf] %v333
                %v335 = vld [vmem:[%s151 + $0x52c] sm:$0xf]
                %336 = vst [vmem:[%s152 + $0x16c] sm:$0xf] %v335
                %v337 = vld [vmem:[%s151 + $0x530] sm:$0xf]
                %338 = vst [vmem:[%s152 + $0x170] sm:$0xf] %v337
                %v339 = vld [vmem:[%s151 + $0x534] sm:$0xf]
                %340 = vst [vmem:[%s152 + $0x174] sm:$0xf] %v339
                %v341 = vld [vmem:[%s151 + $0x538] sm:$0xf]
                %342 = vst [vmem:[%s152 + $0x178] sm:$0xf] %v341
                %v343 = vld [vmem:[%s151 + $0x53c] sm:$0xf]
                %344 = vst [vmem:[%s152 + $0x17c] sm:$0xf] %v343
                %v345 = vld [vmem:[%s151 + $0x600] sm:$0xf]
                %346 = vst [vmem:[%s152 + $0x180] sm:$0xf] %v345
                %v347 = vld [vmem:[%s151 + $0x604] sm:$0xf]
                %348 = vst [vmem:[%s152 + $0x184] sm:$0xf] %v347
                %v349 = vld [vmem:[%s151 + $0x608] sm:$0xf]
                %350 = vst [vmem:[%s152 + $0x188] sm:$0xf] %v349
                %v351 = vld [vmem:[%s151 + $0x60c] sm:$0xf]
                %352 = vst [vmem:[%s152 + $0x18c] sm:$0xf] %v351
                %v353 = vld [vmem:[%s151 + $0x610] sm:$0xf]
                %354 = vst [vmem:[%s152 + $0x190] sm:$0xf] %v353
                %v355 = vld [vmem:[%s151 + $0x614] sm:$0xf]
                %356 = vst [vmem:[%s152 + $0x194] sm:$0xf] %v355
                %v357 = vld [vmem:[%s151 + $0x618] sm:$0xf]
                %358 = vst [vmem:[%s152 + $0x198] sm:$0xf] %v357
                %v359 = vld [vmem:[%s151 + $0x61c] sm:$0xf]
                %360 = vst [vmem:[%s152 + $0x19c] sm:$0xf] %v359
                %v361 = vld [vmem:[%s151 + $0x620] sm:$0xf]
                %362 = vst [vmem:[%s152 + $0x1a0] sm:$0xf] %v361
                %v363 = vld [vmem:[%s151 + $0x624] sm:$0xf]
                %364 = vst [vmem:[%s152 + $0x1a4] sm:$0xf] %v363
                %v365 = vld [vmem:[%s151 + $0x628] sm:$0xf]
                %366 = vst [vmem:[%s152 + $0x1a8] sm:$0xf] %v365
                %v367 = vld [vmem:[%s151 + $0x62c] sm:$0xf]
                %368 = vst [vmem:[%s152 + $0x1ac] sm:$0xf] %v367
                %v369 = vld [vmem:[%s151 + $0x630] sm:$0xf]
                %370 = vst [vmem:[%s152 + $0x1b0] sm:$0xf] %v369
                %v371 = vld [vmem:[%s151 + $0x634] sm:$0xf]
                %372 = vst [vmem:[%s152 + $0x1b4] sm:$0xf] %v371
                %v373 = vld [vmem:[%s151 + $0x638] sm:$0xf]
                %374 = vst [vmem:[%s152 + $0x1b8] sm:$0xf] %v373
                %v375 = vld [vmem:[%s151 + $0x63c] sm:$0xf]
                %376 = vst [vmem:[%s152 + $0x1bc] sm:$0xf] %v375
                %v377 = vld [vmem:[%s151 + $0x700] sm:$0xf]
                %378 = vst [vmem:[%s152 + $0x1c0] sm:$0xf] %v377
                %v379 = vld [vmem:[%s151 + $0x704] sm:$0xf]
                %380 = vst [vmem:[%s152 + $0x1c4] sm:$0xf] %v379
                %v381 = vld [vmem:[%s151 + $0x708] sm:$0xf]
                %382 = vst [vmem:[%s152 + $0x1c8] sm:$0xf] %v381
                %v383 = vld [vmem:[%s151 + $0x70c] sm:$0xf]
                %384 = vst [vmem:[%s152 + $0x1cc] sm:$0xf] %v383
                %v385 = vld [vmem:[%s151 + $0x710] sm:$0xf]
                %386 = vst [vmem:[%s152 + $0x1d0] sm:$0xf] %v385
                %v387 = vld [vmem:[%s151 + $0x714] sm:$0xf]
                %388 = vst [vmem:[%s152 + $0x1d4] sm:$0xf] %v387
                %v389 = vld [vmem:[%s151 + $0x718] sm:$0xf]
                %390 = vst [vmem:[%s152 + $0x1d8] sm:$0xf] %v389
                %v391 = vld [vmem:[%s151 + $0x71c] sm:$0xf]
                %392 = vst [vmem:[%s152 + $0x1dc] sm:$0xf] %v391
                %v393 = vld [vmem:[%s151 + $0x720] sm:$0xf]
                %394 = vst [vmem:[%s152 + $0x1e0] sm:$0xf] %v393
                %v395 = vld [vmem:[%s151 + $0x724] sm:$0xf]
                %396 = vst [vmem:[%s152 + $0x1e4] sm:$0xf] %v395
                %v397 = vld [vmem:[%s151 + $0x728] sm:$0xf]
                %398 = vst [vmem:[%s152 + $0x1e8] sm:$0xf] %v397
                %v399 = vld [vmem:[%s151 + $0x72c] sm:$0xf]
                %400 = vst [vmem:[%s152 + $0x1ec] sm:$0xf] %v399
                %v401 = vld [vmem:[%s151 + $0x730] sm:$0xf]
                %402 = vst [vmem:[%s152 + $0x1f0] sm:$0xf] %v401
                %v403 = vld [vmem:[%s151 + $0x734] sm:$0xf]
                %404 = vst [vmem:[%s152 + $0x1f4] sm:$0xf] %v403
                %v405 = vld [vmem:[%s151 + $0x738] sm:$0xf]
                %406 = vst [vmem:[%s152 + $0x1f8] sm:$0xf] %v405
                %v407 = vld [vmem:[%s151 + $0x73c] sm:$0xf]
                %408 = vst [vmem:[%s152 + $0x1fc] sm:$0xf] %v407
                %v409 = vld [vmem:[%s151 + $0x800] sm:$0xf]
                %410 = vst [vmem:[%s152 + $0x200] sm:$0xf] %v409
                %v411 = vld [vmem:[%s151 + $0x804] sm:$0xf]
                %412 = vst [vmem:[%s152 + $0x204] sm:$0xf] %v411
                %v413 = vld [vmem:[%s151 + $0x808] sm:$0xf]
                %414 = vst [vmem:[%s152 + $0x208] sm:$0xf] %v413
                %v415 = vld [vmem:[%s151 + $0x80c] sm:$0xf]
                %416 = vst [vmem:[%s152 + $0x20c] sm:$0xf] %v415
                %v417 = vld [vmem:[%s151 + $0x810] sm:$0xf]
                %418 = vst [vmem:[%s152 + $0x210] sm:$0xf] %v417
                %v419 = vld [vmem:[%s151 + $0x814] sm:$0xf]
                %420 = vst [vmem:[%s152 + $0x214] sm:$0xf] %v419
                %v421 = vld [vmem:[%s151 + $0x818] sm:$0xf]
                %422 = vst [vmem:[%s152 + $0x218] sm:$0xf] %v421
                %v423 = vld [vmem:[%s151 + $0x81c] sm:$0xf]
                %424 = vst [vmem:[%s152 + $0x21c] sm:$0xf] %v423
                %v425 = vld [vmem:[%s151 + $0x820] sm:$0xf]
                %426 = vst [vmem:[%s152 + $0x220] sm:$0xf] %v425
                %v427 = vld [vmem:[%s151 + $0x824] sm:$0xf]
                %428 = vst [vmem:[%s152 + $0x224] sm:$0xf] %v427
                %v429 = vld [vmem:[%s151 + $0x828] sm:$0xf]
                %430 = vst [vmem:[%s152 + $0x228] sm:$0xf] %v429
                %v431 = vld [vmem:[%s151 + $0x82c] sm:$0xf]
                %432 = vst [vmem:[%s152 + $0x22c] sm:$0xf] %v431
                %v433 = vld [vmem:[%s151 + $0x830] sm:$0xf]
                %434 = vst [vmem:[%s152 + $0x230] sm:$0xf] %v433
                %v435 = vld [vmem:[%s151 + $0x834] sm:$0xf]
                %436 = vst [vmem:[%s152 + $0x234] sm:$0xf] %v435
                %v437 = vld [vmem:[%s151 + $0x838] sm:$0xf]
                %438 = vst [vmem:[%s152 + $0x238] sm:$0xf] %v437
                %v439 = vld [vmem:[%s151 + $0x83c] sm:$0xf]
                %440 = vst [vmem:[%s152 + $0x23c] sm:$0xf] %v439
              $region45: #{network_forward.3} parent=39 // loop_footer
                %s150 = sadd.s32 1, %s146
              $region46: #{network_forward.3} parent=39 // loop_footer_branch
                %145 = sbr.rel target = $region42
              $region47: #{network_forward.3} parent=39 // loop_exit
                _
            $region40: #{network_forward.3} parent=31 // pred_fallthru
              _
          $region32: #{network_forward.3} parent=27 // pred_fallthru
            _
          %748 = vnop
        $region28: #{network_forward.3} parent=23 // pred_fallthru
          _
      $region24: #{network_forward.3} parent=5 // pred_fallthru
        _
      %p749 = scmp.le.s32.totalorder 1, %s9
      %p750 = scmp.lt.s32.totalorder %s9, 5
      %p751 = pnand %p749, %p750
      %p752 = pneg %p751
      // Predicated region
      $region66: #{network_forward.3} parent=5 // pred_check
        _
      $region67: #{network_forward.3} parent=5 // pred_check_branch
        %754 = sbr.rel (%p751) target = $region69
      $region68: #{network_forward.3} parent=5 // pred_region
        %s755 = ssub.s32 %s9, 1
        %s756 = sand.u32 %s22, 1
        %s757 = sand.u32 %s22, 1
        %s758 = smul.addr %s757, 576
        %s759 = scalar_lea.vmem [#allocation2], %s758
        // Predicated region
        $region70: #{network_forward.3} parent=68 // pred_check
          %p760 = pneg %p35
        $region71: #{network_forward.3} parent=68 // pred_check_branch
          %762 = sbr.rel (%p760) target = $region73
        $region72: #{network_forward.3} parent=68 // pred_region
          _
        $region73: #{network_forward.3} parent=68 // pred_fallthru
          _
        %s763 = sand.u32 %s22, 1
        %s764 = sand.u32 %s22, 1
        %s765 = smul.addr %s764, 576
        %s766 = scalar_lea.vmem [#allocation2], %s765
        %p767 = pneg %p35
        %p768 = pneg %p32
        %p769 = pneg %p56
        %p770 = pneg %p53
        %p771 = pneg %p77
        %p772 = pneg %p74
        %p773 = pneg %p103
        %p774 = pneg %p100
        %s775 = smul.u32 16, %s14
        %p776 = scmp.lt.s32.totalorder %s775, 63
        %s777 = scalar_select %p776, %s775, 63
        %s778 = smul.addr %s777, 4
        %s779 = scalar_lea.vmem %s3, %s778
        %s780 = smul.u32 16, %s14
        %s781 = smul.u32 16, %s14
        %p782 = scmp.lt.s32.totalorder %s781, 63
        %s783 = scalar_select %p782, %s781, 63
        %s784 = smul.addr %s783, 4
        %s785 = scalar_lea.vmem %s3, %s784
        %s786 = smul.u32 16, %s14
        %v788 = vld [vmem:[%s1] sm:$0xf]
        %v789 = vld [vmem:[%s1 + $0x4] sm:$0xf]
        %v790 = vld [vmem:[%s1 + $0x8] sm:$0xf]
        %v791 = vld [vmem:[%s1 + $0xc] sm:$0xf]
        %v792 = vld [vmem:[%s1 + $0x10] sm:$0xf]
        %v793 = vld [vmem:[%s1 + $0x14] sm:$0xf]
        %v794 = vld [vmem:[%s1 + $0x18] sm:$0xf]
        %v795 = vld [vmem:[%s1 + $0x1c] sm:$0xf]
        %v796 = vld [vmem:[%s1 + $0x20] sm:$0xf]
        %v797 = vld [vmem:[%s1 + $0x24] sm:$0xf]
        %v798 = vld [vmem:[%s1 + $0x28] sm:$0xf]
        %v799 = vld [vmem:[%s1 + $0x2c] sm:$0xf]
        %v800 = vld [vmem:[%s1 + $0x30] sm:$0xf]
        %v801 = vld [vmem:[%s1 + $0x34] sm:$0xf]
        %v802 = vld [vmem:[%s1 + $0x38] sm:$0xf]
        %v803 = vld [vmem:[%s1 + $0x3c] sm:$0xf]
        %v804 = vld [vmem:[%s759] sm:$0xf]
        %v805 = vld [vmem:[%s759 + $0x4] sm:$0xf]
        %v806 = vld [vmem:[%s759 + $0x8] sm:$0xf]
        %v807 = vld [vmem:[%s759 + $0xc] sm:$0xf]
        %v808 = vld [vmem:[%s759 + $0x10] sm:$0xf]
        %v809 = vld [vmem:[%s759 + $0x14] sm:$0xf]
        %v810 = vld [vmem:[%s759 + $0x18] sm:$0xf]
        %v811 = vld [vmem:[%s759 + $0x1c] sm:$0xf]
        %v812 = vld [vmem:[%s759 + $0x20] sm:$0xf]
        %v813 = vld [vmem:[%s759 + $0x24] sm:$0xf]
        %v814 = vld [vmem:[%s759 + $0x28] sm:$0xf]
        %v815 = vld [vmem:[%s759 + $0x2c] sm:$0xf]
        %v816 = vld [vmem:[%s759 + $0x30] sm:$0xf]
        %v817 = vld [vmem:[%s759 + $0x34] sm:$0xf]
        %v818 = vld [vmem:[%s759 + $0x38] sm:$0xf]
        %v819 = vld [vmem:[%s759 + $0x3c] sm:$0xf]
        %v836 = vunpack.c.l.b16 %v804
        %v837 = vunpack.c.l.b16 %v805
        %v838 = vunpack.c.l.b16 %v806
        %v839 = vunpack.c.l.b16 %v807
        %v840 = vunpack.c.l.b16 %v808
        %v841 = vunpack.c.l.b16 %v809
        %v842 = vunpack.c.l.b16 %v810
        %v843 = vunpack.c.l.b16 %v811
        %v844 = vunpack.c.l.b16 %v812
        %v845 = vunpack.c.l.b16 %v813
        %v846 = vunpack.c.l.b16 %v814
        %v847 = vunpack.c.l.b16 %v815
        %v848 = vunpack.c.l.b16 %v816
        %v849 = vunpack.c.l.b16 %v817
        %v850 = vunpack.c.l.b16 %v818
        %v851 = vunpack.c.l.b16 %v819
        %v852 = vpack.c.b16 %v837, %v836
        %v853 = vpack.c.b16 %v839, %v838
        %v854 = vpack.c.b16 %v841, %v840
        %v855 = vpack.c.b16 %v843, %v842
        %v856 = vpack.c.b16 %v845, %v844
        %v857 = vpack.c.b16 %v847, %v846
        %v858 = vpack.c.b16 %v849, %v848
        %v859 = vpack.c.b16 %v851, %v850
        %v884 = vunpack.c.l.b16 %v788
        %v885 = vunpack.c.l.b16 %v789
        %v886 = vunpack.c.l.b16 %v790
        %v887 = vunpack.c.l.b16 %v791
        %v888 = vunpack.c.l.b16 %v792
        %v889 = vunpack.c.l.b16 %v793
        %v890 = vunpack.c.l.b16 %v794
        %v891 = vunpack.c.l.b16 %v795
        %v892 = vunpack.c.l.b16 %v796
        %v893 = vunpack.c.l.b16 %v797
        %v894 = vunpack.c.l.b16 %v798
        %v895 = vunpack.c.l.b16 %v799
        %v896 = vunpack.c.l.b16 %v800
        %v897 = vunpack.c.l.b16 %v801
        %v898 = vunpack.c.l.b16 %v802
        %v899 = vunpack.c.l.b16 %v803
        %v900 = vpack.c.b16 %v885, %v884
        %v901 = vpack.c.b16 %v887, %v886
        %v902 = vpack.c.b16 %v889, %v888
        %v903 = vpack.c.b16 %v891, %v890
        %v904 = vpack.c.b16 %v893, %v892
        %v905 = vpack.c.b16 %v895, %v894
        %v906 = vpack.c.b16 %v897, %v896
        %v907 = vpack.c.b16 %v899, %v898
        %916 = vmatprep.subr.bf16.mxu0 0
        %917 = vmatpush1.bf16.msra.mxu0 %v900
        %918 = vmatprep.subr.bf16.mxu0 0
        %919 = vmatpush1.bf16.msra.mxu0 %v901
        %920 = vmatprep.subr.bf16.mxu0 0
        %921 = vmatpush1.bf16.msra.mxu0 %v902
        %922 = vmatprep.subr.bf16.mxu0 0
        %923 = vmatpush1.bf16.msra.mxu0 %v903
        %924 = vmatprep.subr.bf16.mxu0 0
        %925 = vmatpush1.bf16.msra.mxu0 %v904
        %926 = vmatprep.subr.bf16.mxu0 0
        %927 = vmatpush1.bf16.msra.mxu0 %v905
        %928 = vmatprep.subr.bf16.mxu0 0
        %929 = vmatpush1.bf16.msra.mxu0 %v906
        %930 = vmatprep.subr.bf16.mxu0 0
        %931 = vmatpush1.bf16.msra.mxu0 %v907
        %932 = vmatprep.subr.bf16.mxu0 0
        %933 = vmatpush1.bf16.msra.mxu0 0
        %934 = vmatprep.subr.bf16.mxu0 0
        %935 = vmatpush1.bf16.msra.mxu0 0
        %936 = vmatprep.subr.bf16.mxu0 0
        %937 = vmatpush1.bf16.msra.mxu0 0
        %938 = vmatprep.subr.bf16.mxu0 0
        %939 = vmatpush1.bf16.msra.mxu0 0
        %940 = vmatprep.subr.bf16.mxu0 0
        %941 = vmatpush1.bf16.msra.mxu0 0
        %942 = vmatprep.subr.bf16.mxu0 0
        %943 = vmatpush1.bf16.msra.mxu0 0
        %944 = vmatprep.subr.bf16.mxu0 0
        %945 = vmatpush1.bf16.msra.mxu0 0
        %946 = vmatprep.subr.bf16.mxu0 0
        %947 = vmatpush1.bf16.msra.mxu0 0
        %948 = vmatprep.mubr.bf16.mxu0 0
        %949 = vmatmul.mubr.bf16.gmra.mrb[0].mxu0 %v852
        %v950 = vpop.f32.mrb[0].mxu0
        %v951 = vadd.f32 0.0, %v950
        %v952 = vpop.f32.mrb[0].mxu0
        %v953 = vpop.f32.mrb[0].mxu0
        %v954 = vadd.f32 0.0, %v953
        %v955 = vpop.f32.mrb[0].mxu0
        %956 = vmatprep.mubr.bf16.mxu0 0
        %957 = vmatmul.mubr.bf16.gmra.mrb[0].mxu0 %v853
        %v958 = vpop.f32.mrb[0].mxu0
        %v959 = vadd.f32 0.0, %v958
        %v960 = vpop.f32.mrb[0].mxu0
        %v961 = vpop.f32.mrb[0].mxu0
        %v962 = vadd.f32 0.0, %v961
        %v963 = vpop.f32.mrb[0].mxu0
        %964 = vmatprep.mubr.bf16.mxu0 0
        %965 = vmatmul.mubr.bf16.gmra.mrb[0].mxu0 %v854
        %v966 = vpop.f32.mrb[0].mxu0
        %v967 = vadd.f32 0.0, %v966
        %v968 = vpop.f32.mrb[0].mxu0
        %v969 = vpop.f32.mrb[0].mxu0
        %v970 = vadd.f32 0.0, %v969
        %v971 = vpop.f32.mrb[0].mxu0
        %972 = vmatprep.mubr.bf16.mxu0 0
        %973 = vmatmul.mubr.bf16.gmra.mrb[0].mxu0 %v855
        %v974 = vpop.f32.mrb[0].mxu0
        %v975 = vadd.f32 0.0, %v974
        %v976 = vpop.f32.mrb[0].mxu0
        %v977 = vpop.f32.mrb[0].mxu0
        %v978 = vadd.f32 0.0, %v977
        %v979 = vpop.f32.mrb[0].mxu0
        %980 = vmatprep.mubr.bf16.mxu0 0
        %981 = vmatmul.mubr.bf16.gmra.mrb[0].mxu0 %v856
        %v982 = vpop.f32.mrb[0].mxu0
        %v983 = vadd.f32 0.0, %v982
        %v984 = vpop.f32.mrb[0].mxu0
        %v985 = vpop.f32.mrb[0].mxu0
        %v986 = vadd.f32 0.0, %v985
        %v987 = vpop.f32.mrb[0].mxu0
        %988 = vmatprep.mubr.bf16.mxu0 0
        %989 = vmatmul.mubr.bf16.gmra.mrb[0].mxu0 %v857
        %v990 = vpop.f32.mrb[0].mxu0
        %v991 = vadd.f32 0.0, %v990
        %v992 = vpop.f32.mrb[0].mxu0
        %v993 = vpop.f32.mrb[0].mxu0
        %v994 = vadd.f32 0.0, %v993
        %v995 = vpop.f32.mrb[0].mxu0
        %996 = vmatprep.mubr.bf16.mxu0 0
        %997 = vmatmul.mubr.bf16.gmra.mrb[0].mxu0 %v858
        %v998 = vpop.f32.mrb[0].mxu0
        %v999 = vadd.f32 0.0, %v998
        %v1000 = vpop.f32.mrb[0].mxu0
        %v1001 = vpop.f32.mrb[0].mxu0
        %v1002 = vadd.f32 0.0, %v1001
        %v1003 = vpop.f32.mrb[0].mxu0
        %1004 = vmatprep.mubr.bf16.mxu0 0
        %1005 = vmatmul.mubr.bf16.gmra.mrb[0].mxu0 %v859
        %v1006 = vpop.f32.mrb[0].mxu0
        %v1007 = vadd.f32 0.0, %v1006
        %v1008 = vpop.f32.mrb[0].mxu0
        %v1009 = vpop.f32.mrb[0].mxu0
        %v1010 = vadd.f32 0.0, %v1009
        %v1011 = vpop.f32.mrb[0].mxu0
        %1012 = vdwg.mxu0
        %s1013 = scalar_lea.vmem %s759, 64 [#allocation2]
        %v1014 = vld [vmem:[%s1013] sm:$0xf]
        %v1015 = vld [vmem:[%s1013 + $0x4] sm:$0xf]
        %v1016 = vld [vmem:[%s1013 + $0x8] sm:$0xf]
        %v1017 = vld [vmem:[%s1013 + $0xc] sm:$0xf]
        %v1018 = vld [vmem:[%s1013 + $0x10] sm:$0xf]
        %v1019 = vld [vmem:[%s1013 + $0x14] sm:$0xf]
        %v1020 = vld [vmem:[%s1013 + $0x18] sm:$0xf]
        %v1021 = vld [vmem:[%s1013 + $0x1c] sm:$0xf]
        %v1022 = vld [vmem:[%s1013 + $0x20] sm:$0xf]
        %v1023 = vld [vmem:[%s1013 + $0x24] sm:$0xf]
        %v1024 = vld [vmem:[%s1013 + $0x28] sm:$0xf]
        %v1025 = vld [vmem:[%s1013 + $0x2c] sm:$0xf]
        %v1026 = vld [vmem:[%s1013 + $0x30] sm:$0xf]
        %v1027 = vld [vmem:[%s1013 + $0x34] sm:$0xf]
        %v1028 = vld [vmem:[%s1013 + $0x38] sm:$0xf]
        %v1029 = vld [vmem:[%s1013 + $0x3c] sm:$0xf]
        %v1046 = vunpack.c.l.b16 %v1014
        %v1047 = vunpack.c.l.b16 %v1015
        %v1048 = vunpack.c.l.b16 %v1016
        %v1049 = vunpack.c.l.b16 %v1017
        %v1050 = vunpack.c.l.b16 %v1018
        %v1051 = vunpack.c.l.b16 %v1019
        %v1052 = vunpack.c.l.b16 %v1020
        %v1053 = vunpack.c.l.b16 %v1021
        %v1054 = vunpack.c.l.b16 %v1022
        %v1055 = vunpack.c.l.b16 %v1023
        %v1056 = vunpack.c.l.b16 %v1024
        %v1057 = vunpack.c.l.b16 %v1025
        %v1058 = vunpack.c.l.b16 %v1026
        %v1059 = vunpack.c.l.b16 %v1027
        %v1060 = vunpack.c.l.b16 %v1028
        %v1061 = vunpack.c.l.b16 %v1029
        %v1062 = vpack.c.b16 %v1047, %v1046
        %v1063 = vpack.c.b16 %v1049, %v1048
        %v1064 = vpack.c.b16 %v1051, %v1050
        %v1065 = vpack.c.b16 %v1053, %v1052
        %v1066 = vpack.c.b16 %v1055, %v1054
        %v1067 = vpack.c.b16 %v1057, %v1056
        %v1068 = vpack.c.b16 %v1059, %v1058
        %v1069 = vpack.c.b16 %v1061, %v1060
        %1078 = vmatprep.subr.bf16.mxu0 0
        %1079 = vmatpush1.bf16.msra.mxu0 %v900
        %1080 = vmatprep.subr.bf16.mxu0 0
        %1081 = vmatpush1.bf16.msra.mxu0 %v901
        %1082 = vmatprep.subr.bf16.mxu0 0
        %1083 = vmatpush1.bf16.msra.mxu0 %v902
        %1084 = vmatprep.subr.bf16.mxu0 0
        %1085 = vmatpush1.bf16.msra.mxu0 %v903
        %1086 = vmatprep.subr.bf16.mxu0 0
        %1087 = vmatpush1.bf16.msra.mxu0 %v904
        %1088 = vmatprep.subr.bf16.mxu0 0
        %1089 = vmatpush1.bf16.msra.mxu0 %v905
        %1090 = vmatprep.subr.bf16.mxu0 0
        %1091 = vmatpush1.bf16.msra.mxu0 %v906
        %1092 = vmatprep.subr.bf16.mxu0 0
        %1093 = vmatpush1.bf16.msra.mxu0 %v907
        %1094 = vmatprep.subr.bf16.mxu0 0
        %1095 = vmatpush1.bf16.msra.mxu0 0
        %1096 = vmatprep.subr.bf16.mxu0 0
        %1097 = vmatpush1.bf16.msra.mxu0 0
        %1098 = vmatprep.subr.bf16.mxu0 0
        %1099 = vmatpush1.bf16.msra.mxu0 0
        %1100 = vmatprep.subr.bf16.mxu0 0
        %1101 = vmatpush1.bf16.msra.mxu0 0
        %1102 = vmatprep.subr.bf16.mxu0 0
        %1103 = vmatpush1.bf16.msra.mxu0 0
        %1104 = vmatprep.subr.bf16.mxu0 0
        %1105 = vmatpush1.bf16.msra.mxu0 0
        %1106 = vmatprep.subr.bf16.mxu0 0
        %1107 = vmatpush1.bf16.msra.mxu0 0
        %1108 = vmatprep.subr.bf16.mxu0 0
        %1109 = vmatpush1.bf16.msra.mxu0 0
        %1110 = vmatprep.mubr.bf16.mxu0 0
        %1111 = vmatmul.mubr.bf16.gmra.mrb[0].mxu0 %v1062
        %v1112 = vpop.f32.mrb[0].mxu0
        %v1113 = vadd.f32 0.0, %v1112
        %v1114 = vpop.f32.mrb[0].mxu0
        %v1115 = vpop.f32.mrb[0].mxu0
        %v1116 = vadd.f32 0.0, %v1115
        %v1117 = vpop.f32.mrb[0].mxu0
        %1118 = vmatprep.mubr.bf16.mxu0 0
        %1119 = vmatmul.mubr.bf16.gmra.mrb[0].mxu0 %v1063
        %v1120 = vpop.f32.mrb[0].mxu0
        %v1121 = vadd.f32 0.0, %v1120
        %v1122 = vpop.f32.mrb[0].mxu0
        %v1123 = vpop.f32.mrb[0].mxu0
        %v1124 = vadd.f32 0.0, %v1123
        %v1125 = vpop.f32.mrb[0].mxu0
        %1126 = vmatprep.mubr.bf16.mxu0 0
        %1127 = vmatmul.mubr.bf16.gmra.mrb[0].mxu0 %v1064
        %v1128 = vpop.f32.mrb[0].mxu0
        %v1129 = vadd.f32 0.0, %v1128
        %v1130 = vpop.f32.mrb[0].mxu0
        %v1131 = vpop.f32.mrb[0].mxu0
        %v1132 = vadd.f32 0.0, %v1131
        %v1133 = vpop.f32.mrb[0].mxu0
        %1134 = vmatprep.mubr.bf16.mxu0 0
        %1135 = vmatmul.mubr.bf16.gmra.mrb[0].mxu0 %v1065
        %v1136 = vpop.f32.mrb[0].mxu0
        %v1137 = vadd.f32 0.0, %v1136
        %v1138 = vpop.f32.mrb[0].mxu0
        %v1139 = vpop.f32.mrb[0].mxu0
        %v1140 = vadd.f32 0.0, %v1139
        %v1141 = vpop.f32.mrb[0].mxu0
        %1142 = vmatprep.mubr.bf16.mxu0 0
        %1143 = vmatmul.mubr.bf16.gmra.mrb[0].mxu0 %v1066
        %v1144 = vpop.f32.mrb[0].mxu0
        %v1145 = vadd.f32 0.0, %v1144
        %v1146 = vpop.f32.mrb[0].mxu0
        %v1147 = vpop.f32.mrb[0].mxu0
        %v1148 = vadd.f32 0.0, %v1147
        %v1149 = vpop.f32.mrb[0].mxu0
        %1150 = vmatprep.mubr.bf16.mxu0 0
        %1151 = vmatmul.mubr.bf16.gmra.mrb[0].mxu0 %v1067
        %v1152 = vpop.f32.mrb[0].mxu0
        %v1153 = vadd.f32 0.0, %v1152
        %v1154 = vpop.f32.mrb[0].mxu0
        %v1155 = vpop.f32.mrb[0].mxu0
        %v1156 = vadd.f32 0.0, %v1155
        %v1157 = vpop.f32.mrb[0].mxu0
        %1158 = vmatprep.mubr.bf16.mxu0 0
        %1159 = vmatmul.mubr.bf16.gmra.mrb[0].mxu0 %v1068
        %v1160 = vpop.f32.mrb[0].mxu0
        %v1161 = vadd.f32 0.0, %v1160
        %v1162 = vpop.f32.mrb[0].mxu0
        %v1163 = vpop.f32.mrb[0].mxu0
        %v1164 = vadd.f32 0.0, %v1163
        %v1165 = vpop.f32.mrb[0].mxu0
        %1166 = vmatprep.mubr.bf16.mxu0 0
        %1167 = vmatmul.mubr.bf16.gmra.mrb[0].mxu0 %v1069
        %v1168 = vpop.f32.mrb[0].mxu0
        %v1169 = vadd.f32 0.0, %v1168
        %v1170 = vpop.f32.mrb[0].mxu0
        %v1171 = vpop.f32.mrb[0].mxu0
        %v1172 = vadd.f32 0.0, %v1171
        %v1173 = vpop.f32.mrb[0].mxu0
        %1174 = vdwg.mxu0
        %s1175 = scalar_lea.vmem %s759, 128 [#allocation2]
        %v1176 = vld [vmem:[%s1175] sm:$0xf]
        %v1177 = vld [vmem:[%s1175 + $0x4] sm:$0xf]
        %v1178 = vld [vmem:[%s1175 + $0x8] sm:$0xf]
        %v1179 = vld [vmem:[%s1175 + $0xc] sm:$0xf]
        %v1180 = vld [vmem:[%s1175 + $0x10] sm:$0xf]
        %v1181 = vld [vmem:[%s1175 + $0x14] sm:$0xf]
        %v1182 = vld [vmem:[%s1175 + $0x18] sm:$0xf]
        %v1183 = vld [vmem:[%s1175 + $0x1c] sm:$0xf]
        %v1184 = vld [vmem:[%s1175 + $0x20] sm:$0xf]
        %v1185 = vld [vmem:[%s1175 + $0x24] sm:$0xf]
        %v1186 = vld [vmem:[%s1175 + $0x28] sm:$0xf]
        %v1187 = vld [vmem:[%s1175 + $0x2c] sm:$0xf]
        %v1188 = vld [vmem:[%s1175 + $0x30] sm:$0xf]
        %v1189 = vld [vmem:[%s1175 + $0x34] sm:$0xf]
        %v1190 = vld [vmem:[%s1175 + $0x38] sm:$0xf]
        %v1191 = vld [vmem:[%s1175 + $0x3c] sm:$0xf]
        %v1208 = vunpack.c.l.b16 %v1176
        %v1209 = vunpack.c.l.b16 %v1177
        %v1210 = vunpack.c.l.b16 %v1178
        %v1211 = vunpack.c.l.b16 %v1179
        %v1212 = vunpack.c.l.b16 %v1180
        %v1213 = vunpack.c.l.b16 %v1181
        %v1214 = vunpack.c.l.b16 %v1182
        %v1215 = vunpack.c.l.b16 %v1183
        %v1216 = vunpack.c.l.b16 %v1184
        %v1217 = vunpack.c.l.b16 %v1185
        %v1218 = vunpack.c.l.b16 %v1186
        %v1219 = vunpack.c.l.b16 %v1187
        %v1220 = vunpack.c.l.b16 %v1188
        %v1221 = vunpack.c.l.b16 %v1189
        %v1222 = vunpack.c.l.b16 %v1190
        %v1223 = vunpack.c.l.b16 %v1191
        %v1224 = vpack.c.b16 %v1209, %v1208
        %v1225 = vpack.c.b16 %v1211, %v1210
        %v1226 = vpack.c.b16 %v1213, %v1212
        %v1227 = vpack.c.b16 %v1215, %v1214
        %v1228 = vpack.c.b16 %v1217, %v1216
        %v1229 = vpack.c.b16 %v1219, %v1218
        %v1230 = vpack.c.b16 %v1221, %v1220
        %v1231 = vpack.c.b16 %v1223, %v1222
        %1240 = vmatprep.subr.bf16.mxu0 0
        %1241 = vmatpush1.bf16.msra.mxu0 %v900
        %1242 = vmatprep.subr.bf16.mxu0 0
        %1243 = vmatpush1.bf16.msra.mxu0 %v901
        %1244 = vmatprep.subr.bf16.mxu0 0
        %1245 = vmatpush1.bf16.msra.mxu0 %v902
        %1246 = vmatprep.subr.bf16.mxu0 0
        %1247 = vmatpush1.bf16.msra.mxu0 %v903
        %1248 = vmatprep.subr.bf16.mxu0 0
        %1249 = vmatpush1.bf16.msra.mxu0 %v904
        %1250 = vmatprep.subr.bf16.mxu0 0
        %1251 = vmatpush1.bf16.msra.mxu0 %v905
        %1252 = vmatprep.subr.bf16.mxu0 0
        %1253 = vmatpush1.bf16.msra.mxu0 %v906
        %1254 = vmatprep.subr.bf16.mxu0 0
        %1255 = vmatpush1.bf16.msra.mxu0 %v907
        %1256 = vmatprep.subr.bf16.mxu0 0
        %1257 = vmatpush1.bf16.msra.mxu0 0
        %1258 = vmatprep.subr.bf16.mxu0 0
        %1259 = vmatpush1.bf16.msra.mxu0 0
        %1260 = vmatprep.subr.bf16.mxu0 0
        %1261 = vmatpush1.bf16.msra.mxu0 0
        %1262 = vmatprep.subr.bf16.mxu0 0
        %1263 = vmatpush1.bf16.msra.mxu0 0
        %1264 = vmatprep.subr.bf16.mxu0 0
        %1265 = vmatpush1.bf16.msra.mxu0 0
        %1266 = vmatprep.subr.bf16.mxu0 0
        %1267 = vmatpush1.bf16.msra.mxu0 0
        %1268 = vmatprep.subr.bf16.mxu0 0
        %1269 = vmatpush1.bf16.msra.mxu0 0
        %1270 = vmatprep.subr.bf16.mxu0 0
        %1271 = vmatpush1.bf16.msra.mxu0 0
        %1272 = vmatprep.mubr.bf16.mxu0 0
        %1273 = vmatmul.mubr.bf16.gmra.mrb[0].mxu0 %v1224
        %v1274 = vpop.f32.mrb[0].mxu0
        %v1275 = vadd.f32 0.0, %v1274
        %v1276 = vpop.f32.mrb[0].mxu0
        %v1277 = vpop.f32.mrb[0].mxu0
        %v1278 = vadd.f32 0.0, %v1277
        %v1279 = vpop.f32.mrb[0].mxu0
        %1280 = vmatprep.mubr.bf16.mxu0 0
        %1281 = vmatmul.mubr.bf16.gmra.mrb[0].mxu0 %v1225
        %v1282 = vpop.f32.mrb[0].mxu0
        %v1283 = vadd.f32 0.0, %v1282
        %v1284 = vpop.f32.mrb[0].mxu0
        %v1285 = vpop.f32.mrb[0].mxu0
        %v1286 = vadd.f32 0.0, %v1285
        %v1287 = vpop.f32.mrb[0].mxu0
        %1288 = vmatprep.mubr.bf16.mxu0 0
        %1289 = vmatmul.mubr.bf16.gmra.mrb[0].mxu0 %v1226
        %v1290 = vpop.f32.mrb[0].mxu0
        %v1291 = vadd.f32 0.0, %v1290
        %v1292 = vpop.f32.mrb[0].mxu0
        %v1293 = vpop.f32.mrb[0].mxu0
        %v1294 = vadd.f32 0.0, %v1293
        %v1295 = vpop.f32.mrb[0].mxu0
        %1296 = vmatprep.mubr.bf16.mxu0 0
        %1297 = vmatmul.mubr.bf16.gmra.mrb[0].mxu0 %v1227
        %v1298 = vpop.f32.mrb[0].mxu0
        %v1299 = vadd.f32 0.0, %v1298
        %v1300 = vpop.f32.mrb[0].mxu0
        %v1301 = vpop.f32.mrb[0].mxu0
        %v1302 = vadd.f32 0.0, %v1301
        %v1303 = vpop.f32.mrb[0].mxu0
        %1304 = vmatprep.mubr.bf16.mxu0 0
        %1305 = vmatmul.mubr.bf16.gmra.mrb[0].mxu0 %v1228
        %v1306 = vpop.f32.mrb[0].mxu0
        %v1307 = vadd.f32 0.0, %v1306
        %v1308 = vpop.f32.mrb[0].mxu0
        %v1309 = vpop.f32.mrb[0].mxu0
        %v1310 = vadd.f32 0.0, %v1309
        %v1311 = vpop.f32.mrb[0].mxu0
        %1312 = vmatprep.mubr.bf16.mxu0 0
        %1313 = vmatmul.mubr.bf16.gmra.mrb[0].mxu0 %v1229
        %v1314 = vpop.f32.mrb[0].mxu0
        %v1315 = vadd.f32 0.0, %v1314
        %v1316 = vpop.f32.mrb[0].mxu0
        %v1317 = vpop.f32.mrb[0].mxu0
        %v1318 = vadd.f32 0.0, %v1317
        %v1319 = vpop.f32.mrb[0].mxu0
        %1320 = vmatprep.mubr.bf16.mxu0 0
        %1321 = vmatmul.mubr.bf16.gmra.mrb[0].mxu0 %v1230
        %v1322 = vpop.f32.mrb[0].mxu0
        %v1323 = vadd.f32 0.0, %v1322
        %v1324 = vpop.f32.mrb[0].mxu0
        %v1325 = vpop.f32.mrb[0].mxu0
        %v1326 = vadd.f32 0.0, %v1325
        %v1327 = vpop.f32.mrb[0].mxu0
        %1328 = vmatprep.mubr.bf16.mxu0 0
        %1329 = vmatmul.mubr.bf16.gmra.mrb[0].mxu0 %v1231
        %v1330 = vpop.f32.mrb[0].mxu0
        %v1331 = vadd.f32 0.0, %v1330
        %v1332 = vpop.f32.mrb[0].mxu0
        %v1333 = vpop.f32.mrb[0].mxu0
        %v1334 = vadd.f32 0.0, %v1333
        %v1335 = vpop.f32.mrb[0].mxu0
        %1336 = vdwg.mxu0
        %s1337 = scalar_lea.vmem %s759, 192 [#allocation2]
        %v1338 = vld [vmem:[%s1337] sm:$0xf]
        %v1339 = vld [vmem:[%s1337 + $0x4] sm:$0xf]
        %v1340 = vld [vmem:[%s1337 + $0x8] sm:$0xf]
        %v1341 = vld [vmem:[%s1337 + $0xc] sm:$0xf]
        %v1342 = vld [vmem:[%s1337 + $0x10] sm:$0xf]
        %v1343 = vld [vmem:[%s1337 + $0x14] sm:$0xf]
        %v1344 = vld [vmem:[%s1337 + $0x18] sm:$0xf]
        %v1345 = vld [vmem:[%s1337 + $0x1c] sm:$0xf]
        %v1346 = vld [vmem:[%s1337 + $0x20] sm:$0xf]
        %v1347 = vld [vmem:[%s1337 + $0x24] sm:$0xf]
        %v1348 = vld [vmem:[%s1337 + $0x28] sm:$0xf]
        %v1349 = vld [vmem:[%s1337 + $0x2c] sm:$0xf]
        %v1350 = vld [vmem:[%s1337 + $0x30] sm:$0xf]
        %v1351 = vld [vmem:[%s1337 + $0x34] sm:$0xf]
        %v1352 = vld [vmem:[%s1337 + $0x38] sm:$0xf]
        %v1353 = vld [vmem:[%s1337 + $0x3c] sm:$0xf]
        %v1370 = vunpack.c.l.b16 %v1338
        %v1371 = vunpack.c.l.b16 %v1339
        %v1372 = vunpack.c.l.b16 %v1340
        %v1373 = vunpack.c.l.b16 %v1341
        %v1374 = vunpack.c.l.b16 %v1342
        %v1375 = vunpack.c.l.b16 %v1343
        %v1376 = vunpack.c.l.b16 %v1344
        %v1377 = vunpack.c.l.b16 %v1345
        %v1378 = vunpack.c.l.b16 %v1346
        %v1379 = vunpack.c.l.b16 %v1347
        %v1380 = vunpack.c.l.b16 %v1348
        %v1381 = vunpack.c.l.b16 %v1349
        %v1382 = vunpack.c.l.b16 %v1350
        %v1383 = vunpack.c.l.b16 %v1351
        %v1384 = vunpack.c.l.b16 %v1352
        %v1385 = vunpack.c.l.b16 %v1353
        %v1386 = vpack.c.b16 %v1371, %v1370
        %v1387 = vpack.c.b16 %v1373, %v1372
        %v1388 = vpack.c.b16 %v1375, %v1374
        %v1389 = vpack.c.b16 %v1377, %v1376
        %v1390 = vpack.c.b16 %v1379, %v1378
        %v1391 = vpack.c.b16 %v1381, %v1380
        %v1392 = vpack.c.b16 %v1383, %v1382
        %v1393 = vpack.c.b16 %v1385, %v1384
        %1402 = vmatprep.subr.bf16.mxu0 0
        %1403 = vmatpush1.bf16.msra.mxu0 %v900
        %1404 = vmatprep.subr.bf16.mxu0 0
        %1405 = vmatpush1.bf16.msra.mxu0 %v901
        %1406 = vmatprep.subr.bf16.mxu0 0
        %1407 = vmatpush1.bf16.msra.mxu0 %v902
        %1408 = vmatprep.subr.bf16.mxu0 0
        %1409 = vmatpush1.bf16.msra.mxu0 %v903
        %1410 = vmatprep.subr.bf16.mxu0 0
        %1411 = vmatpush1.bf16.msra.mxu0 %v904
        %1412 = vmatprep.subr.bf16.mxu0 0
        %1413 = vmatpush1.bf16.msra.mxu0 %v905
        %1414 = vmatprep.subr.bf16.mxu0 0
        %1415 = vmatpush1.bf16.msra.mxu0 %v906
        %1416 = vmatprep.subr.bf16.mxu0 0
        %1417 = vmatpush1.bf16.msra.mxu0 %v907
        %1418 = vmatprep.subr.bf16.mxu0 0
        %1419 = vmatpush1.bf16.msra.mxu0 0
        %1420 = vmatprep.subr.bf16.mxu0 0
        %1421 = vmatpush1.bf16.msra.mxu0 0
        %1422 = vmatprep.subr.bf16.mxu0 0
        %1423 = vmatpush1.bf16.msra.mxu0 0
        %1424 = vmatprep.subr.bf16.mxu0 0
        %1425 = vmatpush1.bf16.msra.mxu0 0
        %1426 = vmatprep.subr.bf16.mxu0 0
        %1427 = vmatpush1.bf16.msra.mxu0 0
        %1428 = vmatprep.subr.bf16.mxu0 0
        %1429 = vmatpush1.bf16.msra.mxu0 0
        %1430 = vmatprep.subr.bf16.mxu0 0
        %1431 = vmatpush1.bf16.msra.mxu0 0
        %1432 = vmatprep.subr.bf16.mxu0 0
        %1433 = vmatpush1.bf16.msra.mxu0 0
        %1434 = vmatprep.mubr.bf16.mxu0 0
        %1435 = vmatmul.mubr.bf16.gmra.mrb[0].mxu0 %v1386
        %v1436 = vpop.f32.mrb[0].mxu0
        %v1437 = vadd.f32 0.0, %v1436
        %v1438 = vpop.f32.mrb[0].mxu0
        %v1439 = vpop.f32.mrb[0].mxu0
        %v1440 = vadd.f32 0.0, %v1439
        %v1441 = vpop.f32.mrb[0].mxu0
        %1442 = vmatprep.mubr.bf16.mxu0 0
        %1443 = vmatmul.mubr.bf16.gmra.mrb[0].mxu0 %v1387
        %v1444 = vpop.f32.mrb[0].mxu0
        %v1445 = vadd.f32 0.0, %v1444
        %v1446 = vpop.f32.mrb[0].mxu0
        %v1447 = vpop.f32.mrb[0].mxu0
        %v1448 = vadd.f32 0.0, %v1447
        %v1449 = vpop.f32.mrb[0].mxu0
        %1450 = vmatprep.mubr.bf16.mxu0 0
        %1451 = vmatmul.mubr.bf16.gmra.mrb[0].mxu0 %v1388
        %v1452 = vpop.f32.mrb[0].mxu0
        %v1453 = vadd.f32 0.0, %v1452
        %v1454 = vpop.f32.mrb[0].mxu0
        %v1455 = vpop.f32.mrb[0].mxu0
        %v1456 = vadd.f32 0.0, %v1455
        %v1457 = vpop.f32.mrb[0].mxu0
        %1458 = vmatprep.mubr.bf16.mxu0 0
        %1459 = vmatmul.mubr.bf16.gmra.mrb[0].mxu0 %v1389
        %v1460 = vpop.f32.mrb[0].mxu0
        %v1461 = vadd.f32 0.0, %v1460
        %v1462 = vpop.f32.mrb[0].mxu0
        %v1463 = vpop.f32.mrb[0].mxu0
        %v1464 = vadd.f32 0.0, %v1463
        %v1465 = vpop.f32.mrb[0].mxu0
        %1466 = vmatprep.mubr.bf16.mxu0 0
        %1467 = vmatmul.mubr.bf16.gmra.mrb[0].mxu0 %v1390
        %v1468 = vpop.f32.mrb[0].mxu0
        %v1469 = vadd.f32 0.0, %v1468
        %v1470 = vpop.f32.mrb[0].mxu0
        %v1471 = vpop.f32.mrb[0].mxu0
        %v1472 = vadd.f32 0.0, %v1471
        %v1473 = vpop.f32.mrb[0].mxu0
        %1474 = vmatprep.mubr.bf16.mxu0 0
        %1475 = vmatmul.mubr.bf16.gmra.mrb[0].mxu0 %v1391
        %v1476 = vpop.f32.mrb[0].mxu0
        %v1477 = vadd.f32 0.0, %v1476
        %v1478 = vpop.f32.mrb[0].mxu0
        %v1479 = vpop.f32.mrb[0].mxu0
        %v1480 = vadd.f32 0.0, %v1479
        %v1481 = vpop.f32.mrb[0].mxu0
        %1482 = vmatprep.mubr.bf16.mxu0 0
        %1483 = vmatmul.mubr.bf16.gmra.mrb[0].mxu0 %v1392
        %v1484 = vpop.f32.mrb[0].mxu0
        %v1485 = vadd.f32 0.0, %v1484
        %v1486 = vpop.f32.mrb[0].mxu0
        %v1487 = vpop.f32.mrb[0].mxu0
        %v1488 = vadd.f32 0.0, %v1487
        %v1489 = vpop.f32.mrb[0].mxu0
        %1490 = vmatprep.mubr.bf16.mxu0 0
        %1491 = vmatmul.mubr.bf16.gmra.mrb[0].mxu0 %v1393
        %v1492 = vpop.f32.mrb[0].mxu0
        %v1493 = vadd.f32 0.0, %v1492
        %v1494 = vpop.f32.mrb[0].mxu0
        %v1495 = vpop.f32.mrb[0].mxu0
        %v1496 = vadd.f32 0.0, %v1495
        %v1497 = vpop.f32.mrb[0].mxu0
        %1498 = vdwg.mxu0
        %s1499 = scalar_lea.vmem %s759, 256 [#allocation2]
        %v1500 = vld [vmem:[%s1499] sm:$0xf]
        %v1501 = vld [vmem:[%s1499 + $0x4] sm:$0xf]
        %v1502 = vld [vmem:[%s1499 + $0x8] sm:$0xf]
        %v1503 = vld [vmem:[%s1499 + $0xc] sm:$0xf]
        %v1504 = vld [vmem:[%s1499 + $0x10] sm:$0xf]
        %v1505 = vld [vmem:[%s1499 + $0x14] sm:$0xf]
        %v1506 = vld [vmem:[%s1499 + $0x18] sm:$0xf]
        %v1507 = vld [vmem:[%s1499 + $0x1c] sm:$0xf]
        %v1508 = vld [vmem:[%s1499 + $0x20] sm:$0xf]
        %v1509 = vld [vmem:[%s1499 + $0x24] sm:$0xf]
        %v1510 = vld [vmem:[%s1499 + $0x28] sm:$0xf]
        %v1511 = vld [vmem:[%s1499 + $0x2c] sm:$0xf]
        %v1512 = vld [vmem:[%s1499 + $0x30] sm:$0xf]
        %v1513 = vld [vmem:[%s1499 + $0x34] sm:$0xf]
        %v1514 = vld [vmem:[%s1499 + $0x38] sm:$0xf]
        %v1515 = vld [vmem:[%s1499 + $0x3c] sm:$0xf]
        %v1532 = vunpack.c.l.b16 %v1500
        %v1533 = vunpack.c.l.b16 %v1501
        %v1534 = vunpack.c.l.b16 %v1502
        %v1535 = vunpack.c.l.b16 %v1503
        %v1536 = vunpack.c.l.b16 %v1504
        %v1537 = vunpack.c.l.b16 %v1505
        %v1538 = vunpack.c.l.b16 %v1506
        %v1539 = vunpack.c.l.b16 %v1507
        %v1540 = vunpack.c.l.b16 %v1508
        %v1541 = vunpack.c.l.b16 %v1509
        %v1542 = vunpack.c.l.b16 %v1510
        %v1543 = vunpack.c.l.b16 %v1511
        %v1544 = vunpack.c.l.b16 %v1512
        %v1545 = vunpack.c.l.b16 %v1513
        %v1546 = vunpack.c.l.b16 %v1514
        %v1547 = vunpack.c.l.b16 %v1515
        %v1548 = vpack.c.b16 %v1533, %v1532
        %v1549 = vpack.c.b16 %v1535, %v1534
        %v1550 = vpack.c.b16 %v1537, %v1536
        %v1551 = vpack.c.b16 %v1539, %v1538
        %v1552 = vpack.c.b16 %v1541, %v1540
        %v1553 = vpack.c.b16 %v1543, %v1542
        %v1554 = vpack.c.b16 %v1545, %v1544
        %v1555 = vpack.c.b16 %v1547, %v1546
        %1564 = vmatprep.subr.bf16.mxu0 0
        %1565 = vmatpush1.bf16.msra.mxu0 %v900
        %1566 = vmatprep.subr.bf16.mxu0 0
        %1567 = vmatpush1.bf16.msra.mxu0 %v901
        %1568 = vmatprep.subr.bf16.mxu0 0
        %1569 = vmatpush1.bf16.msra.mxu0 %v902
        %1570 = vmatprep.subr.bf16.mxu0 0
        %1571 = vmatpush1.bf16.msra.mxu0 %v903
        %1572 = vmatprep.subr.bf16.mxu0 0
        %1573 = vmatpush1.bf16.msra.mxu0 %v904
        %1574 = vmatprep.subr.bf16.mxu0 0
        %1575 = vmatpush1.bf16.msra.mxu0 %v905
        %1576 = vmatprep.subr.bf16.mxu0 0
        %1577 = vmatpush1.bf16.msra.mxu0 %v906
        %1578 = vmatprep.subr.bf16.mxu0 0
        %1579 = vmatpush1.bf16.msra.mxu0 %v907
        %1580 = vmatprep.subr.bf16.mxu0 0
        %1581 = vmatpush1.bf16.msra.mxu0 0
        %1582 = vmatprep.subr.bf16.mxu0 0
        %1583 = vmatpush1.bf16.msra.mxu0 0
        %1584 = vmatprep.subr.bf16.mxu0 0
        %1585 = vmatpush1.bf16.msra.mxu0 0
        %1586 = vmatprep.subr.bf16.mxu0 0
        %1587 = vmatpush1.bf16.msra.mxu0 0
        %1588 = vmatprep.subr.bf16.mxu0 0
        %1589 = vmatpush1.bf16.msra.mxu0 0
        %1590 = vmatprep.subr.bf16.mxu0 0
        %1591 = vmatpush1.bf16.msra.mxu0 0
        %1592 = vmatprep.subr.bf16.mxu0 0
        %1593 = vmatpush1.bf16.msra.mxu0 0
        %1594 = vmatprep.subr.bf16.mxu0 0
        %1595 = vmatpush1.bf16.msra.mxu0 0
        %1596 = vmatprep.mubr.bf16.mxu0 0
        %1597 = vmatmul.mubr.bf16.gmra.mrb[0].mxu0 %v1548
        %v1598 = vpop.f32.mrb[0].mxu0
        %v1599 = vadd.f32 0.0, %v1598
        %v1600 = vpop.f32.mrb[0].mxu0
        %v1601 = vpop.f32.mrb[0].mxu0
        %v1602 = vadd.f32 0.0, %v1601
        %v1603 = vpop.f32.mrb[0].mxu0
        %1604 = vmatprep.mubr.bf16.mxu0 0
        %1605 = vmatmul.mubr.bf16.gmra.mrb[0].mxu0 %v1549
        %v1606 = vpop.f32.mrb[0].mxu0
        %v1607 = vadd.f32 0.0, %v1606
        %v1608 = vpop.f32.mrb[0].mxu0
        %v1609 = vpop.f32.mrb[0].mxu0
        %v1610 = vadd.f32 0.0, %v1609
        %v1611 = vpop.f32.mrb[0].mxu0
        %1612 = vmatprep.mubr.bf16.mxu0 0
        %1613 = vmatmul.mubr.bf16.gmra.mrb[0].mxu0 %v1550
        %v1614 = vpop.f32.mrb[0].mxu0
        %v1615 = vadd.f32 0.0, %v1614
        %v1616 = vpop.f32.mrb[0].mxu0
        %v1617 = vpop.f32.mrb[0].mxu0
        %v1618 = vadd.f32 0.0, %v1617
        %v1619 = vpop.f32.mrb[0].mxu0
        %1620 = vmatprep.mubr.bf16.mxu0 0
        %1621 = vmatmul.mubr.bf16.gmra.mrb[0].mxu0 %v1551
        %v1622 = vpop.f32.mrb[0].mxu0
        %v1623 = vadd.f32 0.0, %v1622
        %v1624 = vpop.f32.mrb[0].mxu0
        %v1625 = vpop.f32.mrb[0].mxu0
        %v1626 = vadd.f32 0.0, %v1625
        %v1627 = vpop.f32.mrb[0].mxu0
        %1628 = vmatprep.mubr.bf16.mxu0 0
        %1629 = vmatmul.mubr.bf16.gmra.mrb[0].mxu0 %v1552
        %v1630 = vpop.f32.mrb[0].mxu0
        %v1631 = vadd.f32 0.0, %v1630
        %v1632 = vpop.f32.mrb[0].mxu0
        %v1633 = vpop.f32.mrb[0].mxu0
        %v1634 = vadd.f32 0.0, %v1633
        %v1635 = vpop.f32.mrb[0].mxu0
        %1636 = vmatprep.mubr.bf16.mxu0 0
        %1637 = vmatmul.mubr.bf16.gmra.mrb[0].mxu0 %v1553
        %v1638 = vpop.f32.mrb[0].mxu0
        %v1639 = vadd.f32 0.0, %v1638
        %v1640 = vpop.f32.mrb[0].mxu0
        %v1641 = vpop.f32.mrb[0].mxu0
        %v1642 = vadd.f32 0.0, %v1641
        %v1643 = vpop.f32.mrb[0].mxu0
        %1644 = vmatprep.mubr.bf16.mxu0 0
        %1645 = vmatmul.mubr.bf16.gmra.mrb[0].mxu0 %v1554
        %v1646 = vpop.f32.mrb[0].mxu0
        %v1647 = vadd.f32 0.0, %v1646
        %v1648 = vpop.f32.mrb[0].mxu0
        %v1649 = vpop.f32.mrb[0].mxu0
        %v1650 = vadd.f32 0.0, %v1649
        %v1651 = vpop.f32.mrb[0].mxu0
        %1652 = vmatprep.mubr.bf16.mxu0 0
        %1653 = vmatmul.mubr.bf16.gmra.mrb[0].mxu0 %v1555
        %v1654 = vpop.f32.mrb[0].mxu0
        %v1655 = vadd.f32 0.0, %v1654
        %v1656 = vpop.f32.mrb[0].mxu0
        %v1657 = vpop.f32.mrb[0].mxu0
        %v1658 = vadd.f32 0.0, %v1657
        %v1659 = vpop.f32.mrb[0].mxu0
        %1660 = vdwg.mxu0
        %s1661 = scalar_lea.vmem %s759, 320 [#allocation2]
        %v1662 = vld [vmem:[%s1661] sm:$0xf]
        %v1663 = vld [vmem:[%s1661 + $0x4] sm:$0xf]
        %v1664 = vld [vmem:[%s1661 + $0x8] sm:$0xf]
        %v1665 = vld [vmem:[%s1661 + $0xc] sm:$0xf]
        %v1666 = vld [vmem:[%s1661 + $0x10] sm:$0xf]
        %v1667 = vld [vmem:[%s1661 + $0x14] sm:$0xf]
        %v1668 = vld [vmem:[%s1661 + $0x18] sm:$0xf]
        %v1669 = vld [vmem:[%s1661 + $0x1c] sm:$0xf]
        %v1670 = vld [vmem:[%s1661 + $0x20] sm:$0xf]
        %v1671 = vld [vmem:[%s1661 + $0x24] sm:$0xf]
        %v1672 = vld [vmem:[%s1661 + $0x28] sm:$0xf]
        %v1673 = vld [vmem:[%s1661 + $0x2c] sm:$0xf]
        %v1674 = vld [vmem:[%s1661 + $0x30] sm:$0xf]
        %v1675 = vld [vmem:[%s1661 + $0x34] sm:$0xf]
        %v1676 = vld [vmem:[%s1661 + $0x38] sm:$0xf]
        %v1677 = vld [vmem:[%s1661 + $0x3c] sm:$0xf]
        %v1694 = vunpack.c.l.b16 %v1662
        %v1695 = vunpack.c.l.b16 %v1663
        %v1696 = vunpack.c.l.b16 %v1664
        %v1697 = vunpack.c.l.b16 %v1665
        %v1698 = vunpack.c.l.b16 %v1666
        %v1699 = vunpack.c.l.b16 %v1667
        %v1700 = vunpack.c.l.b16 %v1668
        %v1701 = vunpack.c.l.b16 %v1669
        %v1702 = vunpack.c.l.b16 %v1670
        %v1703 = vunpack.c.l.b16 %v1671
        %v1704 = vunpack.c.l.b16 %v1672
        %v1705 = vunpack.c.l.b16 %v1673
        %v1706 = vunpack.c.l.b16 %v1674
        %v1707 = vunpack.c.l.b16 %v1675
        %v1708 = vunpack.c.l.b16 %v1676
        %v1709 = vunpack.c.l.b16 %v1677
        %v1710 = vpack.c.b16 %v1695, %v1694
        %v1711 = vpack.c.b16 %v1697, %v1696
        %v1712 = vpack.c.b16 %v1699, %v1698
        %v1713 = vpack.c.b16 %v1701, %v1700
        %v1714 = vpack.c.b16 %v1703, %v1702
        %v1715 = vpack.c.b16 %v1705, %v1704
        %v1716 = vpack.c.b16 %v1707, %v1706
        %v1717 = vpack.c.b16 %v1709, %v1708
        %1726 = vmatprep.subr.bf16.mxu0 0
        %1727 = vmatpush1.bf16.msra.mxu0 %v900
        %1728 = vmatprep.subr.bf16.mxu0 0
        %1729 = vmatpush1.bf16.msra.mxu0 %v901
        %1730 = vmatprep.subr.bf16.mxu0 0
        %1731 = vmatpush1.bf16.msra.mxu0 %v902
        %1732 = vmatprep.subr.bf16.mxu0 0
        %1733 = vmatpush1.bf16.msra.mxu0 %v903
        %1734 = vmatprep.subr.bf16.mxu0 0
        %1735 = vmatpush1.bf16.msra.mxu0 %v904
        %1736 = vmatprep.subr.bf16.mxu0 0
        %1737 = vmatpush1.bf16.msra.mxu0 %v905
        %1738 = vmatprep.subr.bf16.mxu0 0
        %1739 = vmatpush1.bf16.msra.mxu0 %v906
        %1740 = vmatprep.subr.bf16.mxu0 0
        %1741 = vmatpush1.bf16.msra.mxu0 %v907
        %1742 = vmatprep.subr.bf16.mxu0 0
        %1743 = vmatpush1.bf16.msra.mxu0 0
        %1744 = vmatprep.subr.bf16.mxu0 0
        %1745 = vmatpush1.bf16.msra.mxu0 0
        %1746 = vmatprep.subr.bf16.mxu0 0
        %1747 = vmatpush1.bf16.msra.mxu0 0
        %1748 = vmatprep.subr.bf16.mxu0 0
        %1749 = vmatpush1.bf16.msra.mxu0 0
        %1750 = vmatprep.subr.bf16.mxu0 0
        %1751 = vmatpush1.bf16.msra.mxu0 0
        %1752 = vmatprep.subr.bf16.mxu0 0
        %1753 = vmatpush1.bf16.msra.mxu0 0
        %1754 = vmatprep.subr.bf16.mxu0 0
        %1755 = vmatpush1.bf16.msra.mxu0 0
        %1756 = vmatprep.subr.bf16.mxu0 0
        %1757 = vmatpush1.bf16.msra.mxu0 0
        %1758 = vmatprep.mubr.bf16.mxu0 0
        %1759 = vmatmul.mubr.bf16.gmra.mrb[0].mxu0 %v1710
        %v1760 = vpop.f32.mrb[0].mxu0
        %v1761 = vadd.f32 0.0, %v1760
        %v1762 = vpop.f32.mrb[0].mxu0
        %v1763 = vpop.f32.mrb[0].mxu0
        %v1764 = vadd.f32 0.0, %v1763
        %v1765 = vpop.f32.mrb[0].mxu0
        %1766 = vmatprep.mubr.bf16.mxu0 0
        %1767 = vmatmul.mubr.bf16.gmra.mrb[0].mxu0 %v1711
        %v1768 = vpop.f32.mrb[0].mxu0
        %v1769 = vadd.f32 0.0, %v1768
        %v1770 = vpop.f32.mrb[0].mxu0
        %v1771 = vpop.f32.mrb[0].mxu0
        %v1772 = vadd.f32 0.0, %v1771
        %v1773 = vpop.f32.mrb[0].mxu0
        %1774 = vmatprep.mubr.bf16.mxu0 0
        %1775 = vmatmul.mubr.bf16.gmra.mrb[0].mxu0 %v1712
        %v1776 = vpop.f32.mrb[0].mxu0
        %v1777 = vadd.f32 0.0, %v1776
        %v1778 = vpop.f32.mrb[0].mxu0
        %v1779 = vpop.f32.mrb[0].mxu0
        %v1780 = vadd.f32 0.0, %v1779
        %v1781 = vpop.f32.mrb[0].mxu0
        %1782 = vmatprep.mubr.bf16.mxu0 0
        %1783 = vmatmul.mubr.bf16.gmra.mrb[0].mxu0 %v1713
        %v1784 = vpop.f32.mrb[0].mxu0
        %v1785 = vadd.f32 0.0, %v1784
        %v1786 = vpop.f32.mrb[0].mxu0
        %v1787 = vpop.f32.mrb[0].mxu0
        %v1788 = vadd.f32 0.0, %v1787
        %v1789 = vpop.f32.mrb[0].mxu0
        %1790 = vmatprep.mubr.bf16.mxu0 0
        %1791 = vmatmul.mubr.bf16.gmra.mrb[0].mxu0 %v1714
        %v1792 = vpop.f32.mrb[0].mxu0
        %v1793 = vadd.f32 0.0, %v1792
        %v1794 = vpop.f32.mrb[0].mxu0
        %v1795 = vpop.f32.mrb[0].mxu0
        %v1796 = vadd.f32 0.0, %v1795
        %v1797 = vpop.f32.mrb[0].mxu0
        %1798 = vmatprep.mubr.bf16.mxu0 0
        %1799 = vmatmul.mubr.bf16.gmra.mrb[0].mxu0 %v1715
        %v1800 = vpop.f32.mrb[0].mxu0
        %v1801 = vadd.f32 0.0, %v1800
        %v1802 = vpop.f32.mrb[0].mxu0
        %v1803 = vpop.f32.mrb[0].mxu0
        %v1804 = vadd.f32 0.0, %v1803
        %v1805 = vpop.f32.mrb[0].mxu0
        %1806 = vmatprep.mubr.bf16.mxu0 0
        %1807 = vmatmul.mubr.bf16.gmra.mrb[0].mxu0 %v1716
        %v1808 = vpop.f32.mrb[0].mxu0
        %v1809 = vadd.f32 0.0, %v1808
        %v1810 = vpop.f32.mrb[0].mxu0
        %v1811 = vpop.f32.mrb[0].mxu0
        %v1812 = vadd.f32 0.0, %v1811
        %v1813 = vpop.f32.mrb[0].mxu0
        %1814 = vmatprep.mubr.bf16.mxu0 0
        %1815 = vmatmul.mubr.bf16.gmra.mrb[0].mxu0 %v1717
        %v1816 = vpop.f32.mrb[0].mxu0
        %v1817 = vadd.f32 0.0, %v1816
        %v1818 = vpop.f32.mrb[0].mxu0
        %v1819 = vpop.f32.mrb[0].mxu0
        %v1820 = vadd.f32 0.0, %v1819
        %v1821 = vpop.f32.mrb[0].mxu0
        %1822 = vdwg.mxu0
        %s1823 = scalar_lea.vmem %s759, 384 [#allocation2]
        %v1824 = vld [vmem:[%s1823] sm:$0xf]
        %v1825 = vld [vmem:[%s1823 + $0x4] sm:$0xf]
        %v1826 = vld [vmem:[%s1823 + $0x8] sm:$0xf]
        %v1827 = vld [vmem:[%s1823 + $0xc] sm:$0xf]
        %v1828 = vld [vmem:[%s1823 + $0x10] sm:$0xf]
        %v1829 = vld [vmem:[%s1823 + $0x14] sm:$0xf]
        %v1830 = vld [vmem:[%s1823 + $0x18] sm:$0xf]
        %v1831 = vld [vmem:[%s1823 + $0x1c] sm:$0xf]
        %v1832 = vld [vmem:[%s1823 + $0x20] sm:$0xf]
        %v1833 = vld [vmem:[%s1823 + $0x24] sm:$0xf]
        %v1834 = vld [vmem:[%s1823 + $0x28] sm:$0xf]
        %v1835 = vld [vmem:[%s1823 + $0x2c] sm:$0xf]
        %v1836 = vld [vmem:[%s1823 + $0x30] sm:$0xf]
        %v1837 = vld [vmem:[%s1823 + $0x34] sm:$0xf]
        %v1838 = vld [vmem:[%s1823 + $0x38] sm:$0xf]
        %v1839 = vld [vmem:[%s1823 + $0x3c] sm:$0xf]
        %v1856 = vunpack.c.l.b16 %v1824
        %v1857 = vunpack.c.l.b16 %v1825
        %v1858 = vunpack.c.l.b16 %v1826
        %v1859 = vunpack.c.l.b16 %v1827
        %v1860 = vunpack.c.l.b16 %v1828
        %v1861 = vunpack.c.l.b16 %v1829
        %v1862 = vunpack.c.l.b16 %v1830
        %v1863 = vunpack.c.l.b16 %v1831
        %v1864 = vunpack.c.l.b16 %v1832
        %v1865 = vunpack.c.l.b16 %v1833
        %v1866 = vunpack.c.l.b16 %v1834
        %v1867 = vunpack.c.l.b16 %v1835
        %v1868 = vunpack.c.l.b16 %v1836
        %v1869 = vunpack.c.l.b16 %v1837
        %v1870 = vunpack.c.l.b16 %v1838
        %v1871 = vunpack.c.l.b16 %v1839
        %v1872 = vpack.c.b16 %v1857, %v1856
        %v1873 = vpack.c.b16 %v1859, %v1858
        %v1874 = vpack.c.b16 %v1861, %v1860
        %v1875 = vpack.c.b16 %v1863, %v1862
        %v1876 = vpack.c.b16 %v1865, %v1864
        %v1877 = vpack.c.b16 %v1867, %v1866
        %v1878 = vpack.c.b16 %v1869, %v1868
        %v1879 = vpack.c.b16 %v1871, %v1870
        %1888 = vmatprep.subr.bf16.mxu0 0
        %1889 = vmatpush1.bf16.msra.mxu0 %v900
        %1890 = vmatprep.subr.bf16.mxu0 0
        %1891 = vmatpush1.bf16.msra.mxu0 %v901
        %1892 = vmatprep.subr.bf16.mxu0 0
        %1893 = vmatpush1.bf16.msra.mxu0 %v902
        %1894 = vmatprep.subr.bf16.mxu0 0
        %1895 = vmatpush1.bf16.msra.mxu0 %v903
        %1896 = vmatprep.subr.bf16.mxu0 0
        %1897 = vmatpush1.bf16.msra.mxu0 %v904
        %1898 = vmatprep.subr.bf16.mxu0 0
        %1899 = vmatpush1.bf16.msra.mxu0 %v905
        %1900 = vmatprep.subr.bf16.mxu0 0
        %1901 = vmatpush1.bf16.msra.mxu0 %v906
        %1902 = vmatprep.subr.bf16.mxu0 0
        %1903 = vmatpush1.bf16.msra.mxu0 %v907
        %1904 = vmatprep.subr.bf16.mxu0 0
        %1905 = vmatpush1.bf16.msra.mxu0 0
        %1906 = vmatprep.subr.bf16.mxu0 0
        %1907 = vmatpush1.bf16.msra.mxu0 0
        %1908 = vmatprep.subr.bf16.mxu0 0
        %1909 = vmatpush1.bf16.msra.mxu0 0
        %1910 = vmatprep.subr.bf16.mxu0 0
        %1911 = vmatpush1.bf16.msra.mxu0 0
        %1912 = vmatprep.subr.bf16.mxu0 0
        %1913 = vmatpush1.bf16.msra.mxu0 0
        %1914 = vmatprep.subr.bf16.mxu0 0
        %1915 = vmatpush1.bf16.msra.mxu0 0
        %1916 = vmatprep.subr.bf16.mxu0 0
        %1917 = vmatpush1.bf16.msra.mxu0 0
        %1918 = vmatprep.subr.bf16.mxu0 0
        %1919 = vmatpush1.bf16.msra.mxu0 0
        %1920 = vmatprep.mubr.bf16.mxu0 0
        %1921 = vmatmul.mubr.bf16.gmra.mrb[0].mxu0 %v1872
        %v1922 = vpop.f32.mrb[0].mxu0
        %v1923 = vadd.f32 0.0, %v1922
        %v1924 = vpop.f32.mrb[0].mxu0
        %v1925 = vpop.f32.mrb[0].mxu0
        %v1926 = vadd.f32 0.0, %v1925
        %v1927 = vpop.f32.mrb[0].mxu0
        %1928 = vmatprep.mubr.bf16.mxu0 0
        %1929 = vmatmul.mubr.bf16.gmra.mrb[0].mxu0 %v1873
        %v1930 = vpop.f32.mrb[0].mxu0
        %v1931 = vadd.f32 0.0, %v1930
        %v1932 = vpop.f32.mrb[0].mxu0
        %v1933 = vpop.f32.mrb[0].mxu0
        %v1934 = vadd.f32 0.0, %v1933
        %v1935 = vpop.f32.mrb[0].mxu0
        %1936 = vmatprep.mubr.bf16.mxu0 0
        %1937 = vmatmul.mubr.bf16.gmra.mrb[0].mxu0 %v1874
        %v1938 = vpop.f32.mrb[0].mxu0
        %v1939 = vadd.f32 0.0, %v1938
        %v1940 = vpop.f32.mrb[0].mxu0
        %v1941 = vpop.f32.mrb[0].mxu0
        %v1942 = vadd.f32 0.0, %v1941
        %v1943 = vpop.f32.mrb[0].mxu0
        %1944 = vmatprep.mubr.bf16.mxu0 0
        %1945 = vmatmul.mubr.bf16.gmra.mrb[0].mxu0 %v1875
        %v1946 = vpop.f32.mrb[0].mxu0
        %v1947 = vadd.f32 0.0, %v1946
        %v1948 = vpop.f32.mrb[0].mxu0
        %v1949 = vpop.f32.mrb[0].mxu0
        %v1950 = vadd.f32 0.0, %v1949
        %v1951 = vpop.f32.mrb[0].mxu0
        %1952 = vmatprep.mubr.bf16.mxu0 0
        %1953 = vmatmul.mubr.bf16.gmra.mrb[0].mxu0 %v1876
        %v1954 = vpop.f32.mrb[0].mxu0
        %v1955 = vadd.f32 0.0, %v1954
        %v1956 = vpop.f32.mrb[0].mxu0
        %v1957 = vpop.f32.mrb[0].mxu0
        %v1958 = vadd.f32 0.0, %v1957
        %v1959 = vpop.f32.mrb[0].mxu0
        %1960 = vmatprep.mubr.bf16.mxu0 0
        %1961 = vmatmul.mubr.bf16.gmra.mrb[0].mxu0 %v1877
        %v1962 = vpop.f32.mrb[0].mxu0
        %v1963 = vadd.f32 0.0, %v1962
        %v1964 = vpop.f32.mrb[0].mxu0
        %v1965 = vpop.f32.mrb[0].mxu0
        %v1966 = vadd.f32 0.0, %v1965
        %v1967 = vpop.f32.mrb[0].mxu0
        %1968 = vmatprep.mubr.bf16.mxu0 0
        %1969 = vmatmul.mubr.bf16.gmra.mrb[0].mxu0 %v1878
        %v1970 = vpop.f32.mrb[0].mxu0
        %v1971 = vadd.f32 0.0, %v1970
        %v1972 = vpop.f32.mrb[0].mxu0
        %v1973 = vpop.f32.mrb[0].mxu0
        %v1974 = vadd.f32 0.0, %v1973
        %v1975 = vpop.f32.mrb[0].mxu0
        %1976 = vmatprep.mubr.bf16.mxu0 0
        %1977 = vmatmul.mubr.bf16.gmra.mrb[0].mxu0 %v1879
        %v1978 = vpop.f32.mrb[0].mxu0
        %v1979 = vadd.f32 0.0, %v1978
        %v1980 = vpop.f32.mrb[0].mxu0
        %v1981 = vpop.f32.mrb[0].mxu0
        %v1982 = vadd.f32 0.0, %v1981
        %v1983 = vpop.f32.mrb[0].mxu0
        %1984 = vdwg.mxu0
        %s1985 = scalar_lea.vmem %s759, 448 [#allocation2]
        %v1986 = vld [vmem:[%s1985] sm:$0xf]
        %v1987 = vld [vmem:[%s1985 + $0x4] sm:$0xf]
        %v1988 = vld [vmem:[%s1985 + $0x8] sm:$0xf]
        %v1989 = vld [vmem:[%s1985 + $0xc] sm:$0xf]
        %v1990 = vld [vmem:[%s1985 + $0x10] sm:$0xf]
        %v1991 = vld [vmem:[%s1985 + $0x14] sm:$0xf]
        %v1992 = vld [vmem:[%s1985 + $0x18] sm:$0xf]
        %v1993 = vld [vmem:[%s1985 + $0x1c] sm:$0xf]
        %v1994 = vld [vmem:[%s1985 + $0x20] sm:$0xf]
        %v1995 = vld [vmem:[%s1985 + $0x24] sm:$0xf]
        %v1996 = vld [vmem:[%s1985 + $0x28] sm:$0xf]
        %v1997 = vld [vmem:[%s1985 + $0x2c] sm:$0xf]
        %v1998 = vld [vmem:[%s1985 + $0x30] sm:$0xf]
        %v1999 = vld [vmem:[%s1985 + $0x34] sm:$0xf]
        %v2000 = vld [vmem:[%s1985 + $0x38] sm:$0xf]
        %v2001 = vld [vmem:[%s1985 + $0x3c] sm:$0xf]
        %v2018 = vunpack.c.l.b16 %v1986
        %v2019 = vunpack.c.l.b16 %v1987
        %v2020 = vunpack.c.l.b16 %v1988
        %v2021 = vunpack.c.l.b16 %v1989
        %v2022 = vunpack.c.l.b16 %v1990
        %v2023 = vunpack.c.l.b16 %v1991
        %v2024 = vunpack.c.l.b16 %v1992
        %v2025 = vunpack.c.l.b16 %v1993
        %v2026 = vunpack.c.l.b16 %v1994
        %v2027 = vunpack.c.l.b16 %v1995
        %v2028 = vunpack.c.l.b16 %v1996
        %v2029 = vunpack.c.l.b16 %v1997
        %v2030 = vunpack.c.l.b16 %v1998
        %v2031 = vunpack.c.l.b16 %v1999
        %v2032 = vunpack.c.l.b16 %v2000
        %v2033 = vunpack.c.l.b16 %v2001
        %v2034 = vpack.c.b16 %v2019, %v2018
        %v2035 = vpack.c.b16 %v2021, %v2020
        %v2036 = vpack.c.b16 %v2023, %v2022
        %v2037 = vpack.c.b16 %v2025, %v2024
        %v2038 = vpack.c.b16 %v2027, %v2026
        %v2039 = vpack.c.b16 %v2029, %v2028
        %v2040 = vpack.c.b16 %v2031, %v2030
        %v2041 = vpack.c.b16 %v2033, %v2032
        %2050 = vmatprep.subr.bf16.mxu0 0
        %2051 = vmatpush1.bf16.msra.mxu0 %v900
        %2052 = vmatprep.subr.bf16.mxu0 0
        %2053 = vmatpush1.bf16.msra.mxu0 %v901
        %2054 = vmatprep.subr.bf16.mxu0 0
        %2055 = vmatpush1.bf16.msra.mxu0 %v902
        %2056 = vmatprep.subr.bf16.mxu0 0
        %2057 = vmatpush1.bf16.msra.mxu0 %v903
        %2058 = vmatprep.subr.bf16.mxu0 0
        %2059 = vmatpush1.bf16.msra.mxu0 %v904
        %2060 = vmatprep.subr.bf16.mxu0 0
        %2061 = vmatpush1.bf16.msra.mxu0 %v905
        %2062 = vmatprep.subr.bf16.mxu0 0
        %2063 = vmatpush1.bf16.msra.mxu0 %v906
        %2064 = vmatprep.subr.bf16.mxu0 0
        %2065 = vmatpush1.bf16.msra.mxu0 %v907
        %2066 = vmatprep.subr.bf16.mxu0 0
        %2067 = vmatpush1.bf16.msra.mxu0 0
        %2068 = vmatprep.subr.bf16.mxu0 0
        %2069 = vmatpush1.bf16.msra.mxu0 0
        %2070 = vmatprep.subr.bf16.mxu0 0
        %2071 = vmatpush1.bf16.msra.mxu0 0
        %2072 = vmatprep.subr.bf16.mxu0 0
        %2073 = vmatpush1.bf16.msra.mxu0 0
        %2074 = vmatprep.subr.bf16.mxu0 0
        %2075 = vmatpush1.bf16.msra.mxu0 0
        %2076 = vmatprep.subr.bf16.mxu0 0
        %2077 = vmatpush1.bf16.msra.mxu0 0
        %2078 = vmatprep.subr.bf16.mxu0 0
        %2079 = vmatpush1.bf16.msra.mxu0 0
        %2080 = vmatprep.subr.bf16.mxu0 0
        %2081 = vmatpush1.bf16.msra.mxu0 0
        %2082 = vmatprep.mubr.bf16.mxu0 0
        %2083 = vmatmul.mubr.bf16.gmra.mrb[0].mxu0 %v2034
        %v2084 = vpop.f32.mrb[0].mxu0
        %v2085 = vadd.f32 0.0, %v2084
        %v2086 = vpop.f32.mrb[0].mxu0
        %v2087 = vpop.f32.mrb[0].mxu0
        %v2088 = vadd.f32 0.0, %v2087
        %v2089 = vpop.f32.mrb[0].mxu0
        %2090 = vmatprep.mubr.bf16.mxu0 0
        %2091 = vmatmul.mubr.bf16.gmra.mrb[0].mxu0 %v2035
        %v2092 = vpop.f32.mrb[0].mxu0
        %v2093 = vadd.f32 0.0, %v2092
        %v2094 = vpop.f32.mrb[0].mxu0
        %v2095 = vpop.f32.mrb[0].mxu0
        %v2096 = vadd.f32 0.0, %v2095
        %v2097 = vpop.f32.mrb[0].mxu0
        %2098 = vmatprep.mubr.bf16.mxu0 0
        %2099 = vmatmul.mubr.bf16.gmra.mrb[0].mxu0 %v2036
        %v2100 = vpop.f32.mrb[0].mxu0
        %v2101 = vadd.f32 0.0, %v2100
        %v2102 = vpop.f32.mrb[0].mxu0
        %v2103 = vpop.f32.mrb[0].mxu0
        %v2104 = vadd.f32 0.0, %v2103
        %v2105 = vpop.f32.mrb[0].mxu0
        %2106 = vmatprep.mubr.bf16.mxu0 0
        %2107 = vmatmul.mubr.bf16.gmra.mrb[0].mxu0 %v2037
        %v2108 = vpop.f32.mrb[0].mxu0
        %v2109 = vadd.f32 0.0, %v2108
        %v2110 = vpop.f32.mrb[0].mxu0
        %v2111 = vpop.f32.mrb[0].mxu0
        %v2112 = vadd.f32 0.0, %v2111
        %v2113 = vpop.f32.mrb[0].mxu0
        %2114 = vmatprep.mubr.bf16.mxu0 0
        %2115 = vmatmul.mubr.bf16.gmra.mrb[0].mxu0 %v2038
        %v2116 = vpop.f32.mrb[0].mxu0
        %v2117 = vadd.f32 0.0, %v2116
        %v2118 = vpop.f32.mrb[0].mxu0
        %v2119 = vpop.f32.mrb[0].mxu0
        %v2120 = vadd.f32 0.0, %v2119
        %v2121 = vpop.f32.mrb[0].mxu0
        %2122 = vmatprep.mubr.bf16.mxu0 0
        %2123 = vmatmul.mubr.bf16.gmra.mrb[0].mxu0 %v2039
        %v2124 = vpop.f32.mrb[0].mxu0
        %v2125 = vadd.f32 0.0, %v2124
        %v2126 = vpop.f32.mrb[0].mxu0
        %v2127 = vpop.f32.mrb[0].mxu0
        %v2128 = vadd.f32 0.0, %v2127
        %v2129 = vpop.f32.mrb[0].mxu0
        %2130 = vmatprep.mubr.bf16.mxu0 0
        %2131 = vmatmul.mubr.bf16.gmra.mrb[0].mxu0 %v2040
        %v2132 = vpop.f32.mrb[0].mxu0
        %v2133 = vadd.f32 0.0, %v2132
        %v2134 = vpop.f32.mrb[0].mxu0
        %v2135 = vpop.f32.mrb[0].mxu0
        %v2136 = vadd.f32 0.0, %v2135
        %v2137 = vpop.f32.mrb[0].mxu0
        %2138 = vmatprep.mubr.bf16.mxu0 0
        %2139 = vmatmul.mubr.bf16.gmra.mrb[0].mxu0 %v2041
        %v2140 = vpop.f32.mrb[0].mxu0
        %v2141 = vadd.f32 0.0, %v2140
        %v2142 = vpop.f32.mrb[0].mxu0
        %v2143 = vpop.f32.mrb[0].mxu0
        %v2144 = vadd.f32 0.0, %v2143
        %v2145 = vpop.f32.mrb[0].mxu0
        %2146 = vdwg.mxu0
        %s2147 = scalar_lea.vmem %s759, 512 [#allocation2]
        %v2148 = vld [vmem:[%s2147] sm:$0xf]
        %v2149 = vld [vmem:[%s2147 + $0x4] sm:$0xf]
        %v2150 = vld [vmem:[%s2147 + $0x8] sm:$0xf]
        %v2151 = vld [vmem:[%s2147 + $0xc] sm:$0xf]
        %v2152 = vld [vmem:[%s2147 + $0x10] sm:$0xf]
        %v2153 = vld [vmem:[%s2147 + $0x14] sm:$0xf]
        %v2154 = vld [vmem:[%s2147 + $0x18] sm:$0xf]
        %v2155 = vld [vmem:[%s2147 + $0x1c] sm:$0xf]
        %v2156 = vld [vmem:[%s2147 + $0x20] sm:$0xf]
        %v2157 = vld [vmem:[%s2147 + $0x24] sm:$0xf]
        %v2158 = vld [vmem:[%s2147 + $0x28] sm:$0xf]
        %v2159 = vld [vmem:[%s2147 + $0x2c] sm:$0xf]
        %v2160 = vld [vmem:[%s2147 + $0x30] sm:$0xf]
        %v2161 = vld [vmem:[%s2147 + $0x34] sm:$0xf]
        %v2162 = vld [vmem:[%s2147 + $0x38] sm:$0xf]
        %v2163 = vld [vmem:[%s2147 + $0x3c] sm:$0xf]
        %v2180 = vunpack.c.l.b16 %v2148
        %v2181 = vunpack.c.l.b16 %v2149
        %v2182 = vunpack.c.l.b16 %v2150
        %v2183 = vunpack.c.l.b16 %v2151
        %v2184 = vunpack.c.l.b16 %v2152
        %v2185 = vunpack.c.l.b16 %v2153
        %v2186 = vunpack.c.l.b16 %v2154
        %v2187 = vunpack.c.l.b16 %v2155
        %v2188 = vunpack.c.l.b16 %v2156
        %v2189 = vunpack.c.l.b16 %v2157
        %v2190 = vunpack.c.l.b16 %v2158
        %v2191 = vunpack.c.l.b16 %v2159
        %v2192 = vunpack.c.l.b16 %v2160
        %v2193 = vunpack.c.l.b16 %v2161
        %v2194 = vunpack.c.l.b16 %v2162
        %v2195 = vunpack.c.l.b16 %v2163
        %v2196 = vpack.c.b16 %v2181, %v2180
        %v2197 = vpack.c.b16 %v2183, %v2182
        %v2198 = vpack.c.b16 %v2185, %v2184
        %v2199 = vpack.c.b16 %v2187, %v2186
        %v2200 = vpack.c.b16 %v2189, %v2188
        %v2201 = vpack.c.b16 %v2191, %v2190
        %v2202 = vpack.c.b16 %v2193, %v2192
        %v2203 = vpack.c.b16 %v2195, %v2194
        %2212 = vmatprep.subr.bf16.mxu0 0
        %2213 = vmatpush1.bf16.msra.mxu0 %v900
        %2214 = vmatprep.subr.bf16.mxu0 0
        %2215 = vmatpush1.bf16.msra.mxu0 %v901
        %2216 = vmatprep.subr.bf16.mxu0 0
        %2217 = vmatpush1.bf16.msra.mxu0 %v902
        %2218 = vmatprep.subr.bf16.mxu0 0
        %2219 = vmatpush1.bf16.msra.mxu0 %v903
        %2220 = vmatprep.subr.bf16.mxu0 0
        %2221 = vmatpush1.bf16.msra.mxu0 %v904
        %2222 = vmatprep.subr.bf16.mxu0 0
        %2223 = vmatpush1.bf16.msra.mxu0 %v905
        %2224 = vmatprep.subr.bf16.mxu0 0
        %2225 = vmatpush1.bf16.msra.mxu0 %v906
        %2226 = vmatprep.subr.bf16.mxu0 0
        %2227 = vmatpush1.bf16.msra.mxu0 %v907
        %2228 = vmatprep.subr.bf16.mxu0 0
        %2229 = vmatpush1.bf16.msra.mxu0 0
        %2230 = vmatprep.subr.bf16.mxu0 0
        %2231 = vmatpush1.bf16.msra.mxu0 0
        %2232 = vmatprep.subr.bf16.mxu0 0
        %2233 = vmatpush1.bf16.msra.mxu0 0
        %2234 = vmatprep.subr.bf16.mxu0 0
        %2235 = vmatpush1.bf16.msra.mxu0 0
        %2236 = vmatprep.subr.bf16.mxu0 0
        %2237 = vmatpush1.bf16.msra.mxu0 0
        %2238 = vmatprep.subr.bf16.mxu0 0
        %2239 = vmatpush1.bf16.msra.mxu0 0
        %2240 = vmatprep.subr.bf16.mxu0 0
        %2241 = vmatpush1.bf16.msra.mxu0 0
        %2242 = vmatprep.subr.bf16.mxu0 0
        %2243 = vmatpush1.bf16.msra.mxu0 0
        %2244 = vmatprep.mubr.bf16.mxu0 0
        %2245 = vmatmul.mubr.bf16.gmra.mrb[0].mxu0 %v2196
        %v2246 = vpop.f32.mrb[0].mxu0
        %v2247 = vadd.f32 0.0, %v2246
        %v2248 = vpop.f32.mrb[0].mxu0
        %v2249 = vpop.f32.mrb[0].mxu0
        %v2250 = vadd.f32 0.0, %v2249
        %v2251 = vpop.f32.mrb[0].mxu0
        %2252 = vmatprep.mubr.bf16.mxu0 0
        %2253 = vmatmul.mubr.bf16.gmra.mrb[0].mxu0 %v2197
        %v2254 = vpop.f32.mrb[0].mxu0
        %v2255 = vadd.f32 0.0, %v2254
        %v2256 = vpop.f32.mrb[0].mxu0
        %v2257 = vpop.f32.mrb[0].mxu0
        %v2258 = vadd.f32 0.0, %v2257
        %v2259 = vpop.f32.mrb[0].mxu0
        %2260 = vmatprep.mubr.bf16.mxu0 0
        %2261 = vmatmul.mubr.bf16.gmra.mrb[0].mxu0 %v2198
        %v2262 = vpop.f32.mrb[0].mxu0
        %v2263 = vadd.f32 0.0, %v2262
        %v2264 = vpop.f32.mrb[0].mxu0
        %v2265 = vpop.f32.mrb[0].mxu0
        %v2266 = vadd.f32 0.0, %v2265
        %v2267 = vpop.f32.mrb[0].mxu0
        %2268 = vmatprep.mubr.bf16.mxu0 0
        %2269 = vmatmul.mubr.bf16.gmra.mrb[0].mxu0 %v2199
        %v2270 = vpop.f32.mrb[0].mxu0
        %v2271 = vadd.f32 0.0, %v2270
        %v2272 = vpop.f32.mrb[0].mxu0
        %v2273 = vpop.f32.mrb[0].mxu0
        %v2274 = vadd.f32 0.0, %v2273
        %v2275 = vpop.f32.mrb[0].mxu0
        %2276 = vmatprep.mubr.bf16.mxu0 0
        %2277 = vmatmul.mubr.bf16.gmra.mrb[0].mxu0 %v2200
        %v2278 = vpop.f32.mrb[0].mxu0
        %v2279 = vadd.f32 0.0, %v2278
        %v2280 = vpop.f32.mrb[0].mxu0
        %v2281 = vpop.f32.mrb[0].mxu0
        %v2282 = vadd.f32 0.0, %v2281
        %v2283 = vpop.f32.mrb[0].mxu0
        %2284 = vmatprep.mubr.bf16.mxu0 0
        %2285 = vmatmul.mubr.bf16.gmra.mrb[0].mxu0 %v2201
        %v2286 = vpop.f32.mrb[0].mxu0
        %v2287 = vadd.f32 0.0, %v2286
        %v2288 = vpop.f32.mrb[0].mxu0
        %v2289 = vpop.f32.mrb[0].mxu0
        %v2290 = vadd.f32 0.0, %v2289
        %v2291 = vpop.f32.mrb[0].mxu0
        %2292 = vmatprep.mubr.bf16.mxu0 0
        %2293 = vmatmul.mubr.bf16.gmra.mrb[0].mxu0 %v2202
        %v2294 = vpop.f32.mrb[0].mxu0
        %v2295 = vadd.f32 0.0, %v2294
        %v2296 = vpop.f32.mrb[0].mxu0
        %v2297 = vpop.f32.mrb[0].mxu0
        %v2298 = vadd.f32 0.0, %v2297
        %v2299 = vpop.f32.mrb[0].mxu0
        %2300 = vmatprep.mubr.bf16.mxu0 0
        %2301 = vmatmul.mubr.bf16.gmra.mrb[0].mxu0 %v2203
        %v2302 = vpop.f32.mrb[0].mxu0
        %v2303 = vadd.f32 0.0, %v2302
        %v2304 = vpop.f32.mrb[0].mxu0
        %v2305 = vpop.f32.mrb[0].mxu0
        %v2306 = vadd.f32 0.0, %v2305
        %v2307 = vpop.f32.mrb[0].mxu0
        %2308 = vdwg.mxu0
        %v2309 = vmax.f32 %v951, %v1113
        %v2310 = vmax.f32 %v954, %v1116
        %v2311 = vmax.f32 %v959, %v1121
        %v2312 = vmax.f32 %v962, %v1124
        %v2313 = vmax.f32 %v967, %v1129
        %v2314 = vmax.f32 %v970, %v1132
        %v2315 = vmax.f32 %v975, %v1137
        %v2316 = vmax.f32 %v978, %v1140
        %v2317 = vmax.f32 %v983, %v1145
        %v2318 = vmax.f32 %v986, %v1148
        %v2319 = vmax.f32 %v991, %v1153
        %v2320 = vmax.f32 %v994, %v1156
        %v2321 = vmax.f32 %v999, %v1161
        %v2322 = vmax.f32 %v1002, %v1164
        %v2323 = vmax.f32 %v1007, %v1169
        %v2324 = vmax.f32 %v1010, %v1172
        %v2325 = vmax.f32 %v1275, %v1437
        %v2326 = vmax.f32 %v1278, %v1440
        %v2327 = vmax.f32 %v1283, %v1445
        %v2328 = vmax.f32 %v1286, %v1448
        %v2329 = vmax.f32 %v1291, %v1453
        %v2330 = vmax.f32 %v1294, %v1456
        %v2331 = vmax.f32 %v1299, %v1461
        %v2332 = vmax.f32 %v1302, %v1464
        %v2333 = vmax.f32 %v1307, %v1469
        %v2334 = vmax.f32 %v1310, %v1472
        %v2335 = vmax.f32 %v1315, %v1477
        %v2336 = vmax.f32 %v1318, %v1480
        %v2337 = vmax.f32 %v1323, %v1485
        %v2338 = vmax.f32 %v1326, %v1488
        %v2339 = vmax.f32 %v1331, %v1493
        %v2340 = vmax.f32 %v1334, %v1496
        %v2341 = vmax.f32 %v1599, %v1761
        %v2342 = vmax.f32 %v1602, %v1764
        %v2343 = vmax.f32 %v1607, %v1769
        %v2344 = vmax.f32 %v1610, %v1772
        %v2345 = vmax.f32 %v1615, %v1777
        %v2346 = vmax.f32 %v1618, %v1780
        %v2347 = vmax.f32 %v1623, %v1785
        %v2348 = vmax.f32 %v1626, %v1788
        %v2349 = vmax.f32 %v1631, %v1793
        %v2350 = vmax.f32 %v1634, %v1796
        %v2351 = vmax.f32 %v1639, %v1801
        %v2352 = vmax.f32 %v1642, %v1804
        %v2353 = vmax.f32 %v1647, %v1809
        %v2354 = vmax.f32 %v1650, %v1812
        %v2355 = vmax.f32 %v1655, %v1817
        %v2356 = vmax.f32 %v1658, %v1820
        %v2357 = vmax.f32 %v1923, %v2085
        %v2358 = vmax.f32 %v1926, %v2088
        %v2359 = vmax.f32 %v1931, %v2093
        %v2360 = vmax.f32 %v1934, %v2096
        %v2361 = vmax.f32 %v1939, %v2101
        %v2362 = vmax.f32 %v1942, %v2104
        %v2363 = vmax.f32 %v1947, %v2109
        %v2364 = vmax.f32 %v1950, %v2112
        %v2365 = vmax.f32 %v1955, %v2117
        %v2366 = vmax.f32 %v1958, %v2120
        %v2367 = vmax.f32 %v1963, %v2125
        %v2368 = vmax.f32 %v1966, %v2128
        %v2369 = vmax.f32 %v1971, %v2133
        %v2370 = vmax.f32 %v1974, %v2136
        %v2371 = vmax.f32 %v1979, %v2141
        %v2372 = vmax.f32 %v1982, %v2144
        %v2373 = vmax.f32 %v2309, %v2325
        %v2374 = vmax.f32 %v2310, %v2326
        %v2375 = vmax.f32 %v2311, %v2327
        %v2376 = vmax.f32 %v2312, %v2328
        %v2377 = vmax.f32 %v2313, %v2329
        %v2378 = vmax.f32 %v2314, %v2330
        %v2379 = vmax.f32 %v2315, %v2331
        %v2380 = vmax.f32 %v2316, %v2332
        %v2381 = vmax.f32 %v2317, %v2333
        %v2382 = vmax.f32 %v2318, %v2334
        %v2383 = vmax.f32 %v2319, %v2335
        %v2384 = vmax.f32 %v2320, %v2336
        %v2385 = vmax.f32 %v2321, %v2337
        %v2386 = vmax.f32 %v2322, %v2338
        %v2387 = vmax.f32 %v2323, %v2339
        %v2388 = vmax.f32 %v2324, %v2340
        %v2389 = vmax.f32 %v2341, %v2357
        %v2390 = vmax.f32 %v2342, %v2358
        %v2391 = vmax.f32 %v2343, %v2359
        %v2392 = vmax.f32 %v2344, %v2360
        %v2393 = vmax.f32 %v2345, %v2361
        %v2394 = vmax.f32 %v2346, %v2362
        %v2395 = vmax.f32 %v2347, %v2363
        %v2396 = vmax.f32 %v2348, %v2364
        %v2397 = vmax.f32 %v2349, %v2365
        %v2398 = vmax.f32 %v2350, %v2366
        %v2399 = vmax.f32 %v2351, %v2367
        %v2400 = vmax.f32 %v2352, %v2368
        %v2401 = vmax.f32 %v2353, %v2369
        %v2402 = vmax.f32 %v2354, %v2370
        %v2403 = vmax.f32 %v2355, %v2371
        %v2404 = vmax.f32 %v2356, %v2372
        %v2405 = vmax.f32 %v2373, %v2389
        %v2406 = vmax.f32 %v2374, %v2390
        %v2407 = vmax.f32 %v2375, %v2391
        %v2408 = vmax.f32 %v2376, %v2392
        %v2409 = vmax.f32 %v2377, %v2393
        %v2410 = vmax.f32 %v2378, %v2394
        %v2411 = vmax.f32 %v2379, %v2395
        %v2412 = vmax.f32 %v2380, %v2396
        %v2413 = vmax.f32 %v2381, %v2397
        %v2414 = vmax.f32 %v2382, %v2398
        %v2415 = vmax.f32 %v2383, %v2399
        %v2416 = vmax.f32 %v2384, %v2400
        %v2417 = vmax.f32 %v2385, %v2401
        %v2418 = vmax.f32 %v2386, %v2402
        %v2419 = vmax.f32 %v2387, %v2403
        %v2420 = vmax.f32 %v2388, %v2404
        %v2421 = vmax.f32 %v2405, %v2247
        %v2422 = vmax.f32 %v2406, %v2250
        %v2423 = vmax.f32 %v2407, %v2255
        %v2424 = vmax.f32 %v2408, %v2258
        %v2425 = vmax.f32 %v2409, %v2263
        %v2426 = vmax.f32 %v2410, %v2266
        %v2427 = vmax.f32 %v2411, %v2271
        %v2428 = vmax.f32 %v2412, %v2274
        %v2429 = vmax.f32 %v2413, %v2279
        %v2430 = vmax.f32 %v2414, %v2282
        %v2431 = vmax.f32 %v2415, %v2287
        %v2432 = vmax.f32 %v2416, %v2290
        %v2433 = vmax.f32 %v2417, %v2295
        %v2434 = vmax.f32 %v2418, %v2298
        %v2435 = vmax.f32 %v2419, %v2303
        %v2436 = vmax.f32 %v2420, %v2306
        %v2437 = vld [vmem:[%s2] sm:$0x1]
        %v2439 = vlaneseq
        %v2440 = vshrl.u32 %v2439, 7
        %v2441 = vsub.s32 0, %v2440
        %v2442 = vrot.slane %v2437, %v2441
        %v2444 = vadd.f32 %v2421, %v2442
        %v2445 = vadd.f32 %v2422, %v2442
        %v2446 = vadd.f32 %v2423, %v2442
        %v2447 = vadd.f32 %v2424, %v2442
        %v2448 = vadd.f32 %v2425, %v2442
        %v2449 = vadd.f32 %v2426, %v2442
        %v2450 = vadd.f32 %v2427, %v2442
        %v2451 = vadd.f32 %v2428, %v2442
        %v2452 = vadd.f32 %v2429, %v2442
        %v2453 = vadd.f32 %v2430, %v2442
        %v2454 = vadd.f32 %v2431, %v2442
        %v2455 = vadd.f32 %v2432, %v2442
        %v2456 = vadd.f32 %v2433, %v2442
        %v2457 = vadd.f32 %v2434, %v2442
        %v2458 = vadd.f32 %v2435, %v2442
        %v2459 = vadd.f32 %v2436, %v2442
        %v2460 = vmax.f32 %v2444, 0.0
        %v2461 = vmax.f32 %v2445, 0.0
        %v2462 = vmax.f32 %v2446, 0.0
        %v2463 = vmax.f32 %v2447, 0.0
        %v2464 = vmax.f32 %v2448, 0.0
        %v2465 = vmax.f32 %v2449, 0.0
        %v2466 = vmax.f32 %v2450, 0.0
        %v2467 = vmax.f32 %v2451, 0.0
        %v2468 = vmax.f32 %v2452, 0.0
        %v2469 = vmax.f32 %v2453, 0.0
        %v2470 = vmax.f32 %v2454, 0.0
        %v2471 = vmax.f32 %v2455, 0.0
        %v2472 = vmax.f32 %v2456, 0.0
        %v2473 = vmax.f32 %v2457, 0.0
        %v2474 = vmax.f32 %v2458, 0.0
        %v2475 = vmax.f32 %v2459, 0.0
        %v2476 = vpack.c.bf16 %v2461, %v2460
        %v2477 = vpack.c.bf16 %v2463, %v2462
        %v2478 = vpack.c.bf16 %v2465, %v2464
        %v2479 = vpack.c.bf16 %v2467, %v2466
        %v2480 = vpack.c.bf16 %v2469, %v2468
        %v2481 = vpack.c.bf16 %v2471, %v2470
        %v2482 = vpack.c.bf16 %v2473, %v2472
        %v2483 = vpack.c.bf16 %v2475, %v2474
        %v2492 = vunpack.c.l.b16 %v2476
        %v2493 = vunpack.c.h.b16 %v2476
        %v2494 = vunpack.c.l.b16 %v2477
        %v2495 = vunpack.c.h.b16 %v2477
        %v2496 = vunpack.c.l.b16 %v2478
        %v2497 = vunpack.c.h.b16 %v2478
        %v2498 = vunpack.c.l.b16 %v2479
        %v2499 = vunpack.c.h.b16 %v2479
        %v2500 = vunpack.c.l.b16 %v2480
        %v2501 = vunpack.c.h.b16 %v2480
        %v2502 = vunpack.c.l.b16 %v2481
        %v2503 = vunpack.c.h.b16 %v2481
        %v2504 = vunpack.c.l.b16 %v2482
        %v2505 = vunpack.c.h.b16 %v2482
        %v2506 = vunpack.c.l.b16 %v2483
        %v2507 = vunpack.c.h.b16 %v2483
        %v2508 = vpack.c.b16 %v2492, %v2492
        %v2509 = vpack.c.b16 %v2493, %v2493
        %v2510 = vpack.c.b16 %v2494, %v2494
        %v2511 = vpack.c.b16 %v2495, %v2495
        %v2512 = vpack.c.b16 %v2496, %v2496
        %v2513 = vpack.c.b16 %v2497, %v2497
        %v2514 = vpack.c.b16 %v2498, %v2498
        %v2515 = vpack.c.b16 %v2499, %v2499
        %v2516 = vpack.c.b16 %v2500, %v2500
        %v2517 = vpack.c.b16 %v2501, %v2501
        %v2518 = vpack.c.b16 %v2502, %v2502
        %v2519 = vpack.c.b16 %v2503, %v2503
        %v2520 = vpack.c.b16 %v2504, %v2504
        %v2521 = vpack.c.b16 %v2505, %v2505
        %v2522 = vpack.c.b16 %v2506, %v2506
        %v2523 = vpack.c.b16 %v2507, %v2507
        %2540 = vst [vmem:[%s785] sm:$0xf] %v2508
        %2541 = vst [vmem:[%s785 + $0x4] sm:$0xf] %v2509
        %2542 = vst [vmem:[%s785 + $0x8] sm:$0xf] %v2510
        %2543 = vst [vmem:[%s785 + $0xc] sm:$0xf] %v2511
        %2544 = vst [vmem:[%s785 + $0x10] sm:$0xf] %v2512
        %2545 = vst [vmem:[%s785 + $0x14] sm:$0xf] %v2513
        %2546 = vst [vmem:[%s785 + $0x18] sm:$0xf] %v2514
        %2547 = vst [vmem:[%s785 + $0x1c] sm:$0xf] %v2515
        %2548 = vst [vmem:[%s785 + $0x20] sm:$0xf] %v2516
        %2549 = vst [vmem:[%s785 + $0x24] sm:$0xf] %v2517
        %2550 = vst [vmem:[%s785 + $0x28] sm:$0xf] %v2518
        %2551 = vst [vmem:[%s785 + $0x2c] sm:$0xf] %v2519
        %2552 = vst [vmem:[%s785 + $0x30] sm:$0xf] %v2520
        %2553 = vst [vmem:[%s785 + $0x34] sm:$0xf] %v2521
        %2554 = vst [vmem:[%s785 + $0x38] sm:$0xf] %v2522
        %2555 = vst [vmem:[%s785 + $0x3c] sm:$0xf] %v2523
        %s2556 = smul.u32 16, %s14
        %p2557 = scmp.lt.s32.totalorder %s2556, 63
        %s2558 = scalar_select %p2557, %s2556, 63
        %s2559 = smul.addr %s2558, 4
        %s2560 = scalar_lea.vmem %s3, %s2559
        // Predicated region
        $region74: #{network_forward.3} parent=68 // pred_check
          %p2561 = pneg %p100
        $region75: #{network_forward.3} parent=68 // pred_check_branch
          %2563 = sbr.rel (%p2561) target = $region77
        $region76: #{network_forward.3} parent=68 // pred_region
          %s2564 = smul.u32 16, %s14
        $region77: #{network_forward.3} parent=68 // pred_fallthru
          _
      $region69: #{network_forward.3} parent=5 // pred_fallthru
        _
      %p2565 = scmp.le.s32.totalorder 2, %s9
      // Predicated region
      $region78: #{network_forward.3} parent=5 // pred_check
        %p2566 = pneg %p2565
      $region79: #{network_forward.3} parent=5 // pred_check_branch
        %2568 = sbr.rel (%p2566) target = $region81
      $region80: #{network_forward.3} parent=5 // pred_region
        %s2569 = ssub.s32 %s9, 2
        // Predicated region
        $region82: #{network_forward.3} parent=80 // pred_check
          %p2570 = pneg %p106
        $region83: #{network_forward.3} parent=80 // pred_check_branch
          %2572 = sbr.rel (%p2570) target = $region85
        $region84: #{network_forward.3} parent=80 // pred_region
          %s2573 = smul.u32 16, %s15
          %p2574 = scmp.lt.s32.totalorder %s2573, 63
          %s2575 = scalar_select %p2574, %s2573, 63
          %s2576 = smul.addr %s2575, 4
          %s2577 = scalar_lea.vmem %s3, %s2576
        $region85: #{network_forward.3} parent=80 // pred_fallthru
          _
      $region81: #{network_forward.3} parent=5 // pred_fallthru
        _
    $region6: #{network_forward.3} parent=1 // loop_footer
      %s13 = sadd.s32 1, %s9
    $region7: #{network_forward.3} parent=1 // loop_footer_branch
      %8 = sbr.rel target = $region3
    $region8: #{network_forward.3} parent=1 // loop_exit
      _

// kernel: network_forward.4
$region0: #{network_forward.4}
  #allocation0 [shape = 'u32[]', space=smem, size = 0x4, offset = 0x4, fixed_abs, tag = 'smem constant byte address 0x4 - core index']
  #allocation1 [shape = 'u32[144,128]{1,0:T(1,128)}', space=vmem, size = 0x12000, scoped, tag = 'internal scratch']
  %s0 = inlined_call_operand.vmem [shape: bf16[736,128], index: 0, kind: input, shape index: {}]
  %s1 = inlined_call_operand.vmem [shape: bf16[128,128], index: 1, kind: input, shape index: {}]
  %s2 = inlined_call_operand.vmem [shape: f32[1,128], index: 2, kind: input, shape index: {}]
  %s3 = inlined_call_operand.vmem [shape: f32[1,128], index: 3, kind: input, shape index: {}]
  %s4 = inlined_call_operand.vmem [shape: f32[1,128], index: 4, kind: input, shape index: {}]
  %s5 = inlined_call_operand.vmem [shape: bf16[736,128], index: 5, kind: output, shape index: {}]
  %s6 = sld [smem:[#allocation0]]
  $region30: #{network_forward.4} parent=0
    _
  %s8 = ssub.s32 1, %s6
  %s9 = scalar_select 0, %s8, %s6
  // Predicated region
  $region2: #{network_forward.4} parent=0 // pred_check
    _
  $region3: #{network_forward.4} parent=0 // pred_check_branch
    %11 = sbr.rel (0) target = $region5
  $region4: #{network_forward.4} parent=0 // pred_region
    _
  $region5: #{network_forward.4} parent=0 // pred_fallthru
    _
  // Predicated region
  $region6: #{network_forward.4} parent=0 // pred_check
    _
  $region7: #{network_forward.4} parent=0 // pred_check_branch
    %13 = sbr.rel (0) target = $region9
  $region8: #{network_forward.4} parent=0 // pred_region
    _
  $region9: #{network_forward.4} parent=0 // pred_fallthru
    _
  // Predicated region
  $region10: #{network_forward.4} parent=0 // pred_check
    _
  $region11: #{network_forward.4} parent=0 // pred_check_branch
    %15 = sbr.rel (0) target = $region13
  $region12: #{network_forward.4} parent=0 // pred_region
    _
  $region13: #{network_forward.4} parent=0 // pred_fallthru
    _
  // Predicated region
  $region14: #{network_forward.4} parent=0 // pred_check
    _
  $region15: #{network_forward.4} parent=0 // pred_check_branch
    %17 = sbr.rel (0) target = $region17
  $region16: #{network_forward.4} parent=0 // pred_region
    _
  $region17: #{network_forward.4} parent=0 // pred_fallthru
    _
  // Predicated region
  $region18: #{network_forward.4} parent=0 // pred_check
    _
  $region19: #{network_forward.4} parent=0 // pred_check_branch
    %19 = sbr.rel (0) target = $region21
  $region20: #{network_forward.4} parent=0 // pred_region
    _
  $region21: #{network_forward.4} parent=0 // pred_fallthru
    _
  %v21 = vld [vmem:[%s0] sm:$0xf]
  %v22 = vld [vmem:[%s0 + $0x4] sm:$0xf]
  %v23 = vld [vmem:[%s0 + $0x8] sm:$0xf]
  %v24 = vld [vmem:[%s0 + $0xc] sm:$0xf]
  %v25 = vld [vmem:[%s0 + $0x10] sm:$0xf]
  %v26 = vld [vmem:[%s0 + $0x14] sm:$0xf]
  %v27 = vld [vmem:[%s0 + $0x18] sm:$0xf]
  %v28 = vld [vmem:[%s0 + $0x1c] sm:$0xf]
  %v29 = vld [vmem:[%s0 + $0x20] sm:$0xf]
  %v30 = vld [vmem:[%s0 + $0x24] sm:$0xf]
  %v31 = vld [vmem:[%s0 + $0x28] sm:$0xf]
  %v32 = vld [vmem:[%s0 + $0x2c] sm:$0xf]
  %v33 = vld [vmem:[%s0 + $0x30] sm:$0xf]
  %v34 = vld [vmem:[%s0 + $0x34] sm:$0xf]
  %v35 = vld [vmem:[%s0 + $0x38] sm:$0xf]
  %v36 = vld [vmem:[%s0 + $0x3c] sm:$0xf]
  %v37 = vld [vmem:[%s0 + $0x40] sm:$0xf]
  %v38 = vld [vmem:[%s0 + $0x44] sm:$0xf]
  %v39 = vld [vmem:[%s0 + $0x48] sm:$0xf]
  %v40 = vld [vmem:[%s0 + $0x4c] sm:$0xf]
  %v41 = vld [vmem:[%s0 + $0x50] sm:$0xf]
  %v42 = vld [vmem:[%s0 + $0x54] sm:$0xf]
  %v43 = vld [vmem:[%s0 + $0x58] sm:$0xf]
  %v44 = vld [vmem:[%s0 + $0x5c] sm:$0xf]
  %v45 = vld [vmem:[%s0 + $0x60] sm:$0xf]
  %v46 = vld [vmem:[%s0 + $0x64] sm:$0xf]
  %v47 = vld [vmem:[%s0 + $0x68] sm:$0xf]
  %v48 = vld [vmem:[%s0 + $0x6c] sm:$0xf]
  %v49 = vld [vmem:[%s0 + $0x70] sm:$0xf]
  %v50 = vld [vmem:[%s0 + $0x74] sm:$0xf]
  %v51 = vld [vmem:[%s0 + $0x78] sm:$0xf]
  %v52 = vld [vmem:[%s0 + $0x7c] sm:$0xf]
  %v53 = vld [vmem:[%s0 + $0x80] sm:$0xf]
  %v54 = vld [vmem:[%s0 + $0x84] sm:$0xf]
  %v55 = vld [vmem:[%s0 + $0x88] sm:$0xf]
  %v56 = vld [vmem:[%s0 + $0x8c] sm:$0xf]
  %v57 = vld [vmem:[%s0 + $0x90] sm:$0xf]
  %v58 = vld [vmem:[%s0 + $0x94] sm:$0xf]
  %v59 = vld [vmem:[%s0 + $0x98] sm:$0xf]
  %v60 = vld [vmem:[%s0 + $0x9c] sm:$0xf]
  %v61 = vld [vmem:[%s0 + $0xa0] sm:$0xf]
  %v62 = vld [vmem:[%s0 + $0xa4] sm:$0xf]
  %v63 = vld [vmem:[%s0 + $0xa8] sm:$0xf]
  %v64 = vld [vmem:[%s0 + $0xac] sm:$0xf]
  %v65 = vld [vmem:[%s0 + $0xb0] sm:$0xf]
  %v66 = vld [vmem:[%s0 + $0xb4] sm:$0xf]
  %v67 = vld [vmem:[%s0 + $0xb8] sm:$0xf]
  %v68 = vld [vmem:[%s0 + $0xbc] sm:$0xf]
  %v69 = vld [vmem:[%s0 + $0xc0] sm:$0xf]
  %v70 = vld [vmem:[%s0 + $0xc4] sm:$0xf]
  %v71 = vld [vmem:[%s0 + $0xc8] sm:$0xf]
  %v72 = vld [vmem:[%s0 + $0xcc] sm:$0xf]
  %v73 = vld [vmem:[%s0 + $0xd0] sm:$0xf]
  %v74 = vld [vmem:[%s0 + $0xd4] sm:$0xf]
  %v75 = vld [vmem:[%s0 + $0xd8] sm:$0xf]
  %v76 = vld [vmem:[%s0 + $0xdc] sm:$0xf]
  %v77 = vld [vmem:[%s0 + $0xe0] sm:$0xf]
  %v78 = vld [vmem:[%s0 + $0xe4] sm:$0xf]
  %v79 = vld [vmem:[%s0 + $0xe8] sm:$0xf]
  %v80 = vld [vmem:[%s0 + $0xec] sm:$0xf]
  %v81 = vld [vmem:[%s0 + $0xf0] sm:$0xf]
  %v82 = vld [vmem:[%s0 + $0xf4] sm:$0xf]
  %v83 = vld [vmem:[%s0 + $0xf8] sm:$0xf]
  %v84 = vld [vmem:[%s0 + $0xfc] sm:$0xf]
  %v85 = vld [vmem:[%s0 + $0x100] sm:$0xf]
  %v86 = vld [vmem:[%s0 + $0x104] sm:$0xf]
  %v87 = vld [vmem:[%s0 + $0x108] sm:$0xf]
  %v88 = vld [vmem:[%s0 + $0x10c] sm:$0xf]
  %v89 = vld [vmem:[%s0 + $0x110] sm:$0xf]
  %v90 = vld [vmem:[%s0 + $0x114] sm:$0xf]
  %v91 = vld [vmem:[%s0 + $0x118] sm:$0xf]
  %v92 = vld [vmem:[%s0 + $0x11c] sm:$0xf]
  %v93 = vld [vmem:[%s0 + $0x120] sm:$0xf]
  %v94 = vld [vmem:[%s0 + $0x124] sm:$0xf]
  %v95 = vld [vmem:[%s0 + $0x128] sm:$0xf]
  %v96 = vld [vmem:[%s0 + $0x12c] sm:$0xf]
  %v97 = vld [vmem:[%s0 + $0x130] sm:$0xf]
  %v98 = vld [vmem:[%s0 + $0x134] sm:$0xf]
  %v99 = vld [vmem:[%s0 + $0x138] sm:$0xf]
  %v100 = vld [vmem:[%s0 + $0x13c] sm:$0xf]
  %v101 = vld [vmem:[%s0 + $0x140] sm:$0xf]
  %v102 = vld [vmem:[%s0 + $0x144] sm:$0xf]
  %v103 = vld [vmem:[%s0 + $0x148] sm:$0xf]
  %v104 = vld [vmem:[%s0 + $0x14c] sm:$0xf]
  %v105 = vld [vmem:[%s0 + $0x150] sm:$0xf]
  %v106 = vld [vmem:[%s0 + $0x154] sm:$0xf]
  %v107 = vld [vmem:[%s0 + $0x158] sm:$0xf]
  %v108 = vld [vmem:[%s0 + $0x15c] sm:$0xf]
  %v109 = vld [vmem:[%s0 + $0x160] sm:$0xf]
  %v110 = vld [vmem:[%s0 + $0x164] sm:$0xf]
  %v111 = vld [vmem:[%s0 + $0x168] sm:$0xf]
  %v112 = vld [vmem:[%s0 + $0x16c] sm:$0xf]
  %v113 = vld [vmem:[%s1] sm:$0xf]
  %v114 = vld [vmem:[%s1 + $0x4] sm:$0xf]
  %v115 = vld [vmem:[%s1 + $0x8] sm:$0xf]
  %v116 = vld [vmem:[%s1 + $0xc] sm:$0xf]
  %v117 = vld [vmem:[%s1 + $0x10] sm:$0xf]
  %v118 = vld [vmem:[%s1 + $0x14] sm:$0xf]
  %v119 = vld [vmem:[%s1 + $0x18] sm:$0xf]
  %v120 = vld [vmem:[%s1 + $0x1c] sm:$0xf]
  %v121 = vld [vmem:[%s1 + $0x20] sm:$0xf]
  %v122 = vld [vmem:[%s1 + $0x24] sm:$0xf]
  %v123 = vld [vmem:[%s1 + $0x28] sm:$0xf]
  %v124 = vld [vmem:[%s1 + $0x2c] sm:$0xf]
  %v125 = vld [vmem:[%s1 + $0x30] sm:$0xf]
  %v126 = vld [vmem:[%s1 + $0x34] sm:$0xf]
  %v127 = vld [vmem:[%s1 + $0x38] sm:$0xf]
  %v128 = vld [vmem:[%s1 + $0x3c] sm:$0xf]
  %v129 = vld [vmem:[%s2] sm:$0x1]
  %v131 = vlaneseq
  %v132 = vshrl.u32 %v131, 7
  %v133 = vsub.s32 0, %v132
  %v134 = vrot.slane %v129, %v133
  %v228 = vunpack.c.l.b16 %v21
  %v229 = vunpack.c.l.b16 %v22
  %v230 = vunpack.c.l.b16 %v23
  %v231 = vunpack.c.l.b16 %v24
  %v232 = vunpack.c.l.b16 %v25
  %v233 = vunpack.c.l.b16 %v26
  %v234 = vunpack.c.l.b16 %v27
  %v235 = vunpack.c.l.b16 %v28
  %v236 = vunpack.c.l.b16 %v29
  %v237 = vunpack.c.l.b16 %v30
  %v238 = vunpack.c.l.b16 %v31
  %v239 = vunpack.c.l.b16 %v32
  %v240 = vunpack.c.l.b16 %v33
  %v241 = vunpack.c.l.b16 %v34
  %v242 = vunpack.c.l.b16 %v35
  %v243 = vunpack.c.l.b16 %v36
  %v244 = vunpack.c.l.b16 %v37
  %v245 = vunpack.c.l.b16 %v38
  %v246 = vunpack.c.l.b16 %v39
  %v247 = vunpack.c.l.b16 %v40
  %v248 = vunpack.c.l.b16 %v41
  %v249 = vunpack.c.l.b16 %v42
  %v250 = vunpack.c.l.b16 %v43
  %v251 = vunpack.c.l.b16 %v44
  %v252 = vunpack.c.l.b16 %v45
  %v253 = vunpack.c.l.b16 %v46
  %v254 = vunpack.c.l.b16 %v47
  %v255 = vunpack.c.l.b16 %v48
  %v256 = vunpack.c.l.b16 %v49
  %v257 = vunpack.c.l.b16 %v50
  %v258 = vunpack.c.l.b16 %v51
  %v259 = vunpack.c.l.b16 %v52
  %v260 = vunpack.c.l.b16 %v53
  %v261 = vunpack.c.l.b16 %v54
  %v262 = vunpack.c.l.b16 %v55
  %v263 = vunpack.c.l.b16 %v56
  %v264 = vunpack.c.l.b16 %v57
  %v265 = vunpack.c.l.b16 %v58
  %v266 = vunpack.c.l.b16 %v59
  %v267 = vunpack.c.l.b16 %v60
  %v268 = vunpack.c.l.b16 %v61
  %v269 = vunpack.c.l.b16 %v62
  %v270 = vunpack.c.l.b16 %v63
  %v271 = vunpack.c.l.b16 %v64
  %v272 = vunpack.c.l.b16 %v65
  %v273 = vunpack.c.l.b16 %v66
  %v274 = vunpack.c.l.b16 %v67
  %v275 = vunpack.c.l.b16 %v68
  %v276 = vunpack.c.l.b16 %v69
  %v277 = vunpack.c.l.b16 %v70
  %v278 = vunpack.c.l.b16 %v71
  %v279 = vunpack.c.l.b16 %v72
  %v280 = vunpack.c.l.b16 %v73
  %v281 = vunpack.c.l.b16 %v74
  %v282 = vunpack.c.l.b16 %v75
  %v283 = vunpack.c.l.b16 %v76
  %v284 = vunpack.c.l.b16 %v77
  %v285 = vunpack.c.l.b16 %v78
  %v286 = vunpack.c.l.b16 %v79
  %v287 = vunpack.c.l.b16 %v80
  %v288 = vunpack.c.l.b16 %v81
  %v289 = vunpack.c.l.b16 %v82
  %v290 = vunpack.c.l.b16 %v83
  %v291 = vunpack.c.l.b16 %v84
  %v292 = vunpack.c.l.b16 %v85
  %v293 = vunpack.c.l.b16 %v86
  %v294 = vunpack.c.l.b16 %v87
  %v295 = vunpack.c.l.b16 %v88
  %v296 = vunpack.c.l.b16 %v89
  %v297 = vunpack.c.l.b16 %v90
  %v298 = vunpack.c.l.b16 %v91
  %v299 = vunpack.c.l.b16 %v92
  %v300 = vunpack.c.l.b16 %v93
  %v301 = vunpack.c.l.b16 %v94
  %v302 = vunpack.c.l.b16 %v95
  %v303 = vunpack.c.l.b16 %v96
  %v304 = vunpack.c.l.b16 %v97
  %v305 = vunpack.c.l.b16 %v98
  %v306 = vunpack.c.l.b16 %v99
  %v307 = vunpack.c.l.b16 %v100
  %v308 = vunpack.c.l.b16 %v101
  %v309 = vunpack.c.l.b16 %v102
  %v310 = vunpack.c.l.b16 %v103
  %v311 = vunpack.c.l.b16 %v104
  %v312 = vunpack.c.l.b16 %v105
  %v313 = vunpack.c.l.b16 %v106
  %v314 = vunpack.c.l.b16 %v107
  %v315 = vunpack.c.l.b16 %v108
  %v316 = vunpack.c.l.b16 %v109
  %v317 = vunpack.c.l.b16 %v110
  %v318 = vunpack.c.l.b16 %v111
  %v319 = vunpack.c.l.b16 %v112
  %v320 = vpack.c.b16 %v229, %v228
  %v321 = vpack.c.b16 %v231, %v230
  %v322 = vpack.c.b16 %v233, %v232
  %v323 = vpack.c.b16 %v235, %v234
  %v324 = vpack.c.b16 %v237, %v236
  %v325 = vpack.c.b16 %v239, %v238
  %v326 = vpack.c.b16 %v241, %v240
  %v327 = vpack.c.b16 %v243, %v242
  %v328 = vpack.c.b16 %v245, %v244
  %v329 = vpack.c.b16 %v247, %v246
  %v330 = vpack.c.b16 %v249, %v248
  %v331 = vpack.c.b16 %v251, %v250
  %v332 = vpack.c.b16 %v253, %v252
  %v333 = vpack.c.b16 %v255, %v254
  %v334 = vpack.c.b16 %v257, %v256
  %v335 = vpack.c.b16 %v259, %v258
  %v336 = vpack.c.b16 %v261, %v260
  %v337 = vpack.c.b16 %v263, %v262
  %v338 = vpack.c.b16 %v265, %v264
  %v339 = vpack.c.b16 %v267, %v266
  %v340 = vpack.c.b16 %v269, %v268
  %v341 = vpack.c.b16 %v271, %v270
  %v342 = vpack.c.b16 %v273, %v272
  %v343 = vpack.c.b16 %v275, %v274
  %v344 = vpack.c.b16 %v277, %v276
  %v345 = vpack.c.b16 %v279, %v278
  %v346 = vpack.c.b16 %v281, %v280
  %v347 = vpack.c.b16 %v283, %v282
  %v348 = vpack.c.b16 %v285, %v284
  %v349 = vpack.c.b16 %v287, %v286
  %v350 = vpack.c.b16 %v289, %v288
  %v351 = vpack.c.b16 %v291, %v290
  %v352 = vpack.c.b16 %v293, %v292
  %v353 = vpack.c.b16 %v295, %v294
  %v354 = vpack.c.b16 %v297, %v296
  %v355 = vpack.c.b16 %v299, %v298
  %v356 = vpack.c.b16 %v301, %v300
  %v357 = vpack.c.b16 %v303, %v302
  %v358 = vpack.c.b16 %v305, %v304
  %v359 = vpack.c.b16 %v307, %v306
  %v360 = vpack.c.b16 %v309, %v308
  %v361 = vpack.c.b16 %v311, %v310
  %v362 = vpack.c.b16 %v313, %v312
  %v363 = vpack.c.b16 %v315, %v314
  %v364 = vpack.c.b16 %v317, %v316
  %v365 = vpack.c.b16 %v319, %v318
  %v428 = vunpack.c.l.b16 %v113
  %v429 = vunpack.c.l.b16 %v114
  %v430 = vunpack.c.l.b16 %v115
  %v431 = vunpack.c.l.b16 %v116
  %v432 = vunpack.c.l.b16 %v117
  %v433 = vunpack.c.l.b16 %v118
  %v434 = vunpack.c.l.b16 %v119
  %v435 = vunpack.c.l.b16 %v120
  %v436 = vunpack.c.l.b16 %v121
  %v437 = vunpack.c.l.b16 %v122
  %v438 = vunpack.c.l.b16 %v123
  %v439 = vunpack.c.l.b16 %v124
  %v440 = vunpack.c.l.b16 %v125
  %v441 = vunpack.c.l.b16 %v126
  %v442 = vunpack.c.l.b16 %v127
  %v443 = vunpack.c.l.b16 %v128
  %v444 = vpack.c.b16 %v429, %v428
  %v445 = vpack.c.b16 %v431, %v430
  %v446 = vpack.c.b16 %v433, %v432
  %v447 = vpack.c.b16 %v435, %v434
  %v448 = vpack.c.b16 %v437, %v436
  %v449 = vpack.c.b16 %v439, %v438
  %v450 = vpack.c.b16 %v441, %v440
  %v451 = vpack.c.b16 %v443, %v442
  %460 = vmatprep.subr.bf16.mxu0 0
  %461 = vmatpush1.bf16.msra.mxu0 %v444
  %462 = vmatprep.subr.bf16.mxu0 0
  %463 = vmatpush1.bf16.msra.mxu0 %v445
  %464 = vmatprep.subr.bf16.mxu0 0
  %465 = vmatpush1.bf16.msra.mxu0 %v446
  %466 = vmatprep.subr.bf16.mxu0 0
  %467 = vmatpush1.bf16.msra.mxu0 %v447
  %468 = vmatprep.subr.bf16.mxu0 0
  %469 = vmatpush1.bf16.msra.mxu0 %v448
  %470 = vmatprep.subr.bf16.mxu0 0
  %471 = vmatpush1.bf16.msra.mxu0 %v449
  %472 = vmatprep.subr.bf16.mxu0 0
  %473 = vmatpush1.bf16.msra.mxu0 %v450
  %474 = vmatprep.subr.bf16.mxu0 0
  %475 = vmatpush1.bf16.msra.mxu0 %v451
  %476 = vmatprep.subr.bf16.mxu0 0
  %477 = vmatpush1.bf16.msra.mxu0 0
  %478 = vmatprep.subr.bf16.mxu0 0
  %479 = vmatpush1.bf16.msra.mxu0 0
  %480 = vmatprep.subr.bf16.mxu0 0
  %481 = vmatpush1.bf16.msra.mxu0 0
  %482 = vmatprep.subr.bf16.mxu0 0
  %483 = vmatpush1.bf16.msra.mxu0 0
  %484 = vmatprep.subr.bf16.mxu0 0
  %485 = vmatpush1.bf16.msra.mxu0 0
  %486 = vmatprep.subr.bf16.mxu0 0
  %487 = vmatpush1.bf16.msra.mxu0 0
  %488 = vmatprep.subr.bf16.mxu0 0
  %489 = vmatpush1.bf16.msra.mxu0 0
  %490 = vmatprep.subr.bf16.mxu0 0
  %491 = vmatpush1.bf16.msra.mxu0 0
  %492 = vmatprep.mubr.bf16.mxu0 0
  %493 = vmatmul.mubr.bf16.gmra.mrb[0].mxu0 %v320
  %v494 = vpop.f32.mrb[0].mxu0
  %v495 = vadd.f32 %v134, %v494
  %v496 = vpop.f32.mrb[0].mxu0
  %v497 = vpop.f32.mrb[0].mxu0
  %v498 = vadd.f32 %v134, %v497
  %v499 = vpop.f32.mrb[0].mxu0
  %500 = vmatprep.mubr.bf16.mxu0 0
  %501 = vmatmul.mubr.bf16.gmra.mrb[0].mxu0 %v321
  %v502 = vpop.f32.mrb[0].mxu0
  %v503 = vadd.f32 %v134, %v502
  %v504 = vpop.f32.mrb[0].mxu0
  %v505 = vpop.f32.mrb[0].mxu0
  %v506 = vadd.f32 %v134, %v505
  %v507 = vpop.f32.mrb[0].mxu0
  %508 = vmatprep.mubr.bf16.mxu0 0
  %509 = vmatmul.mubr.bf16.gmra.mrb[0].mxu0 %v322
  %v510 = vpop.f32.mrb[0].mxu0
  %v511 = vadd.f32 %v134, %v510
  %v512 = vpop.f32.mrb[0].mxu0
  %v513 = vpop.f32.mrb[0].mxu0
  %v514 = vadd.f32 %v134, %v513
  %v515 = vpop.f32.mrb[0].mxu0
  %516 = vmatprep.mubr.bf16.mxu0 0
  %517 = vmatmul.mubr.bf16.gmra.mrb[0].mxu0 %v323
  %v518 = vpop.f32.mrb[0].mxu0
  %v519 = vadd.f32 %v134, %v518
  %v520 = vpop.f32.mrb[0].mxu0
  %v521 = vpop.f32.mrb[0].mxu0
  %v522 = vadd.f32 %v134, %v521
  %v523 = vpop.f32.mrb[0].mxu0
  %524 = vmatprep.mubr.bf16.mxu0 0
  %525 = vmatmul.mubr.bf16.gmra.mrb[0].mxu0 %v324
  %v526 = vpop.f32.mrb[0].mxu0
  %v527 = vadd.f32 %v134, %v526
  %v528 = vpop.f32.mrb[0].mxu0
  %v529 = vpop.f32.mrb[0].mxu0
  %v530 = vadd.f32 %v134, %v529
  %v531 = vpop.f32.mrb[0].mxu0
  %532 = vmatprep.mubr.bf16.mxu0 0
  %533 = vmatmul.mubr.bf16.gmra.mrb[0].mxu0 %v325
  %v534 = vpop.f32.mrb[0].mxu0
  %v535 = vadd.f32 %v134, %v534
  %v536 = vpop.f32.mrb[0].mxu0
  %v537 = vpop.f32.mrb[0].mxu0
  %v538 = vadd.f32 %v134, %v537
  %v539 = vpop.f32.mrb[0].mxu0
  %540 = vmatprep.mubr.bf16.mxu0 0
  %541 = vmatmul.mubr.bf16.gmra.mrb[0].mxu0 %v326
  %v542 = vpop.f32.mrb[0].mxu0
  %v543 = vadd.f32 %v134, %v542
  %v544 = vpop.f32.mrb[0].mxu0
  %v545 = vpop.f32.mrb[0].mxu0
  %v546 = vadd.f32 %v134, %v545
  %v547 = vpop.f32.mrb[0].mxu0
  %548 = vmatprep.mubr.bf16.mxu0 0
  %549 = vmatmul.mubr.bf16.gmra.mrb[0].mxu0 %v327
  %v550 = vpop.f32.mrb[0].mxu0
  %v551 = vadd.f32 %v134, %v550
  %v552 = vpop.f32.mrb[0].mxu0
  %v553 = vpop.f32.mrb[0].mxu0
  %v554 = vadd.f32 %v134, %v553
  %v555 = vpop.f32.mrb[0].mxu0
  %556 = vmatprep.mubr.bf16.mxu0 0
  %557 = vmatmul.mubr.bf16.gmra.mrb[0].mxu0 %v328
  %v558 = vpop.f32.mrb[0].mxu0
  %v559 = vadd.f32 %v134, %v558
  %v560 = vpop.f32.mrb[0].mxu0
  %v561 = vpop.f32.mrb[0].mxu0
  %v562 = vadd.f32 %v134, %v561
  %v563 = vpop.f32.mrb[0].mxu0
  %564 = vmatprep.mubr.bf16.mxu0 0
  %565 = vmatmul.mubr.bf16.gmra.mrb[0].mxu0 %v329
  %v566 = vpop.f32.mrb[0].mxu0
  %v567 = vadd.f32 %v134, %v566
  %v568 = vpop.f32.mrb[0].mxu0
  %v569 = vpop.f32.mrb[0].mxu0
  %v570 = vadd.f32 %v134, %v569
  %v571 = vpop.f32.mrb[0].mxu0
  %572 = vmatprep.mubr.bf16.mxu0 0
  %573 = vmatmul.mubr.bf16.gmra.mrb[0].mxu0 %v330
  %v574 = vpop.f32.mrb[0].mxu0
  %v575 = vadd.f32 %v134, %v574
  %v576 = vpop.f32.mrb[0].mxu0
  %v577 = vpop.f32.mrb[0].mxu0
  %v578 = vadd.f32 %v134, %v577
  %v579 = vpop.f32.mrb[0].mxu0
  %580 = vmatprep.mubr.bf16.mxu0 0
  %581 = vmatmul.mubr.bf16.gmra.mrb[0].mxu0 %v331
  %v582 = vpop.f32.mrb[0].mxu0
  %v583 = vadd.f32 %v134, %v582
  %v584 = vpop.f32.mrb[0].mxu0
  %v585 = vpop.f32.mrb[0].mxu0
  %v586 = vadd.f32 %v134, %v585
  %v587 = vpop.f32.mrb[0].mxu0
  %588 = vmatprep.mubr.bf16.mxu0 0
  %589 = vmatmul.mubr.bf16.gmra.mrb[0].mxu0 %v332
  %v590 = vpop.f32.mrb[0].mxu0
  %v591 = vadd.f32 %v134, %v590
  %v592 = vpop.f32.mrb[0].mxu0
  %v593 = vpop.f32.mrb[0].mxu0
  %v594 = vadd.f32 %v134, %v593
  %v595 = vpop.f32.mrb[0].mxu0
  %596 = vmatprep.mubr.bf16.mxu0 0
  %597 = vmatmul.mubr.bf16.gmra.mrb[0].mxu0 %v333
  %v598 = vpop.f32.mrb[0].mxu0
  %v599 = vadd.f32 %v134, %v598
  %v600 = vpop.f32.mrb[0].mxu0
  %v601 = vpop.f32.mrb[0].mxu0
  %v602 = vadd.f32 %v134, %v601
  %v603 = vpop.f32.mrb[0].mxu0
  %604 = vmatprep.mubr.bf16.mxu0 0
  %605 = vmatmul.mubr.bf16.gmra.mrb[0].mxu0 %v334
  %v606 = vpop.f32.mrb[0].mxu0
  %v607 = vadd.f32 %v134, %v606
  %v608 = vpop.f32.mrb[0].mxu0
  %v609 = vpop.f32.mrb[0].mxu0
  %v610 = vadd.f32 %v134, %v609
  %v611 = vpop.f32.mrb[0].mxu0
  %612 = vmatprep.mubr.bf16.mxu0 0
  %613 = vmatmul.mubr.bf16.gmra.mrb[0].mxu0 %v335
  %v614 = vpop.f32.mrb[0].mxu0
  %v615 = vadd.f32 %v134, %v614
  %v616 = vpop.f32.mrb[0].mxu0
  %v617 = vpop.f32.mrb[0].mxu0
  %v618 = vadd.f32 %v134, %v617
  %v619 = vpop.f32.mrb[0].mxu0
  %620 = vmatprep.mubr.bf16.mxu0 0
  %621 = vmatmul.mubr.bf16.gmra.mrb[0].mxu0 %v336
  %v622 = vpop.f32.mrb[0].mxu0
  %v623 = vadd.f32 %v134, %v622
  %v624 = vpop.f32.mrb[0].mxu0
  %v625 = vpop.f32.mrb[0].mxu0
  %v626 = vadd.f32 %v134, %v625
  %v627 = vpop.f32.mrb[0].mxu0
  %628 = vmatprep.mubr.bf16.mxu0 0
  %629 = vmatmul.mubr.bf16.gmra.mrb[0].mxu0 %v337
  %v630 = vpop.f32.mrb[0].mxu0
  %v631 = vadd.f32 %v134, %v630
  %v632 = vpop.f32.mrb[0].mxu0
  %v633 = vpop.f32.mrb[0].mxu0
  %v634 = vadd.f32 %v134, %v633
  %v635 = vpop.f32.mrb[0].mxu0
  %636 = vmatprep.mubr.bf16.mxu0 0
  %637 = vmatmul.mubr.bf16.gmra.mrb[0].mxu0 %v338
  %v638 = vpop.f32.mrb[0].mxu0
  %v639 = vadd.f32 %v134, %v638
  %v640 = vpop.f32.mrb[0].mxu0
  %v641 = vpop.f32.mrb[0].mxu0
  %v642 = vadd.f32 %v134, %v641
  %v643 = vpop.f32.mrb[0].mxu0
  %644 = vmatprep.mubr.bf16.mxu0 0
  %645 = vmatmul.mubr.bf16.gmra.mrb[0].mxu0 %v339
  %v646 = vpop.f32.mrb[0].mxu0
  %v647 = vadd.f32 %v134, %v646
  %v648 = vpop.f32.mrb[0].mxu0
  %v649 = vpop.f32.mrb[0].mxu0
  %v650 = vadd.f32 %v134, %v649
  %v651 = vpop.f32.mrb[0].mxu0
  %652 = vmatprep.mubr.bf16.mxu0 0
  %653 = vmatmul.mubr.bf16.gmra.mrb[0].mxu0 %v340
  %v654 = vpop.f32.mrb[0].mxu0
  %v655 = vadd.f32 %v134, %v654
  %v656 = vpop.f32.mrb[0].mxu0
  %v657 = vpop.f32.mrb[0].mxu0
  %v658 = vadd.f32 %v134, %v657
  %v659 = vpop.f32.mrb[0].mxu0
  %660 = vmatprep.mubr.bf16.mxu0 0
  %661 = vmatmul.mubr.bf16.gmra.mrb[0].mxu0 %v341
  %v662 = vpop.f32.mrb[0].mxu0
  %v663 = vadd.f32 %v134, %v662
  %v664 = vpop.f32.mrb[0].mxu0
  %v665 = vpop.f32.mrb[0].mxu0
  %v666 = vadd.f32 %v134, %v665
  %v667 = vpop.f32.mrb[0].mxu0
  %668 = vmatprep.mubr.bf16.mxu0 0
  %669 = vmatmul.mubr.bf16.gmra.mrb[0].mxu0 %v342
  %v670 = vpop.f32.mrb[0].mxu0
  %v671 = vadd.f32 %v134, %v670
  %v672 = vpop.f32.mrb[0].mxu0
  %v673 = vpop.f32.mrb[0].mxu0
  %v674 = vadd.f32 %v134, %v673
  %v675 = vpop.f32.mrb[0].mxu0
  %676 = vmatprep.mubr.bf16.mxu0 0
  %677 = vmatmul.mubr.bf16.gmra.mrb[0].mxu0 %v343
  %v678 = vpop.f32.mrb[0].mxu0
  %v679 = vadd.f32 %v134, %v678
  %v680 = vpop.f32.mrb[0].mxu0
  %v681 = vpop.f32.mrb[0].mxu0
  %v682 = vadd.f32 %v134, %v681
  %v683 = vpop.f32.mrb[0].mxu0
  %684 = vmatprep.mubr.bf16.mxu0 0
  %685 = vmatmul.mubr.bf16.gmra.mrb[0].mxu0 %v344
  %v686 = vpop.f32.mrb[0].mxu0
  %v687 = vadd.f32 %v134, %v686
  %v688 = vpop.f32.mrb[0].mxu0
  %v689 = vpop.f32.mrb[0].mxu0
  %v690 = vadd.f32 %v134, %v689
  %v691 = vpop.f32.mrb[0].mxu0
  %692 = vmatprep.mubr.bf16.mxu0 0
  %693 = vmatmul.mubr.bf16.gmra.mrb[0].mxu0 %v345
  %v694 = vpop.f32.mrb[0].mxu0
  %v695 = vadd.f32 %v134, %v694
  %v696 = vpop.f32.mrb[0].mxu0
  %v697 = vpop.f32.mrb[0].mxu0
  %v698 = vadd.f32 %v134, %v697
  %v699 = vpop.f32.mrb[0].mxu0
  %700 = vmatprep.mubr.bf16.mxu0 0
  %701 = vmatmul.mubr.bf16.gmra.mrb[0].mxu0 %v346
  %v702 = vpop.f32.mrb[0].mxu0
  %v703 = vadd.f32 %v134, %v702
  %v704 = vpop.f32.mrb[0].mxu0
  %v705 = vpop.f32.mrb[0].mxu0
  %v706 = vadd.f32 %v134, %v705
  %v707 = vpop.f32.mrb[0].mxu0
  %708 = vmatprep.mubr.bf16.mxu0 0
  %709 = vmatmul.mubr.bf16.gmra.mrb[0].mxu0 %v347
  %v710 = vpop.f32.mrb[0].mxu0
  %v711 = vadd.f32 %v134, %v710
  %v712 = vpop.f32.mrb[0].mxu0
  %v713 = vpop.f32.mrb[0].mxu0
  %v714 = vadd.f32 %v134, %v713
  %v715 = vpop.f32.mrb[0].mxu0
  %716 = vmatprep.mubr.bf16.mxu0 0
  %717 = vmatmul.mubr.bf16.gmra.mrb[0].mxu0 %v348
  %v718 = vpop.f32.mrb[0].mxu0
  %v719 = vadd.f32 %v134, %v718
  %v720 = vpop.f32.mrb[0].mxu0
  %v721 = vpop.f32.mrb[0].mxu0
  %v722 = vadd.f32 %v134, %v721
  %v723 = vpop.f32.mrb[0].mxu0
  %724 = vmatprep.mubr.bf16.mxu0 0
  %725 = vmatmul.mubr.bf16.gmra.mrb[0].mxu0 %v349
  %v726 = vpop.f32.mrb[0].mxu0
  %v727 = vadd.f32 %v134, %v726
  %v728 = vpop.f32.mrb[0].mxu0
  %v729 = vpop.f32.mrb[0].mxu0
  %v730 = vadd.f32 %v134, %v729
  %v731 = vpop.f32.mrb[0].mxu0
  %732 = vmatprep.mubr.bf16.mxu0 0
  %733 = vmatmul.mubr.bf16.gmra.mrb[0].mxu0 %v350
  %v734 = vpop.f32.mrb[0].mxu0
  %v735 = vadd.f32 %v134, %v734
  %v736 = vpop.f32.mrb[0].mxu0
  %v737 = vpop.f32.mrb[0].mxu0
  %v738 = vadd.f32 %v134, %v737
  %v739 = vpop.f32.mrb[0].mxu0
  %740 = vmatprep.mubr.bf16.mxu0 0
  %741 = vmatmul.mubr.bf16.gmra.mrb[0].mxu0 %v351
  %v742 = vpop.f32.mrb[0].mxu0
  %v743 = vadd.f32 %v134, %v742
  %v744 = vpop.f32.mrb[0].mxu0
  %v745 = vpop.f32.mrb[0].mxu0
  %v746 = vadd.f32 %v134, %v745
  %v747 = vpop.f32.mrb[0].mxu0
  %748 = vmatprep.mubr.bf16.mxu0 0
  %749 = vmatmul.mubr.bf16.gmra.mrb[0].mxu0 %v352
  %v750 = vpop.f32.mrb[0].mxu0
  %v751 = vadd.f32 %v134, %v750
  %v752 = vpop.f32.mrb[0].mxu0
  %v753 = vpop.f32.mrb[0].mxu0
  %v754 = vadd.f32 %v134, %v753
  %v755 = vpop.f32.mrb[0].mxu0
  %756 = vmatprep.mubr.bf16.mxu0 0
  %757 = vmatmul.mubr.bf16.gmra.mrb[0].mxu0 %v353
  %v758 = vpop.f32.mrb[0].mxu0
  %v759 = vadd.f32 %v134, %v758
  %v760 = vpop.f32.mrb[0].mxu0
  %v761 = vpop.f32.mrb[0].mxu0
  %v762 = vadd.f32 %v134, %v761
  %v763 = vpop.f32.mrb[0].mxu0
  %764 = vmatprep.mubr.bf16.mxu0 0
  %765 = vmatmul.mubr.bf16.gmra.mrb[0].mxu0 %v354
  %v766 = vpop.f32.mrb[0].mxu0
  %v767 = vadd.f32 %v134, %v766
  %v768 = vpop.f32.mrb[0].mxu0
  %v769 = vpop.f32.mrb[0].mxu0
  %v770 = vadd.f32 %v134, %v769
  %v771 = vpop.f32.mrb[0].mxu0
  %772 = vmatprep.mubr.bf16.mxu0 0
  %773 = vmatmul.mubr.bf16.gmra.mrb[0].mxu0 %v355
  %v774 = vpop.f32.mrb[0].mxu0
  %v775 = vadd.f32 %v134, %v774
  %v776 = vpop.f32.mrb[0].mxu0
  %v777 = vpop.f32.mrb[0].mxu0
  %v778 = vadd.f32 %v134, %v777
  %v779 = vpop.f32.mrb[0].mxu0
  %780 = vmatprep.mubr.bf16.mxu0 0
  %781 = vmatmul.mubr.bf16.gmra.mrb[0].mxu0 %v356
  %v782 = vpop.f32.mrb[0].mxu0
  %v783 = vadd.f32 %v134, %v782
  %v784 = vpop.f32.mrb[0].mxu0
  %v785 = vpop.f32.mrb[0].mxu0
  %v786 = vadd.f32 %v134, %v785
  %v787 = vpop.f32.mrb[0].mxu0
  %788 = vmatprep.mubr.bf16.mxu0 0
  %789 = vmatmul.mubr.bf16.gmra.mrb[0].mxu0 %v357
  %v790 = vpop.f32.mrb[0].mxu0
  %v791 = vadd.f32 %v134, %v790
  %v792 = vpop.f32.mrb[0].mxu0
  %v793 = vpop.f32.mrb[0].mxu0
  %v794 = vadd.f32 %v134, %v793
  %v795 = vpop.f32.mrb[0].mxu0
  %796 = vmatprep.mubr.bf16.mxu0 0
  %797 = vmatmul.mubr.bf16.gmra.mrb[0].mxu0 %v358
  %v798 = vpop.f32.mrb[0].mxu0
  %v799 = vadd.f32 %v134, %v798
  %v800 = vpop.f32.mrb[0].mxu0
  %v801 = vpop.f32.mrb[0].mxu0
  %v802 = vadd.f32 %v134, %v801
  %v803 = vpop.f32.mrb[0].mxu0
  %804 = vmatprep.mubr.bf16.mxu0 0
  %805 = vmatmul.mubr.bf16.gmra.mrb[0].mxu0 %v359
  %v806 = vpop.f32.mrb[0].mxu0
  %v807 = vadd.f32 %v134, %v806
  %v808 = vpop.f32.mrb[0].mxu0
  %v809 = vpop.f32.mrb[0].mxu0
  %v810 = vadd.f32 %v134, %v809
  %v811 = vpop.f32.mrb[0].mxu0
  %812 = vmatprep.mubr.bf16.mxu0 0
  %813 = vmatmul.mubr.bf16.gmra.mrb[0].mxu0 %v360
  %v814 = vpop.f32.mrb[0].mxu0
  %v815 = vadd.f32 %v134, %v814
  %v816 = vpop.f32.mrb[0].mxu0
  %v817 = vpop.f32.mrb[0].mxu0
  %v818 = vadd.f32 %v134, %v817
  %v819 = vpop.f32.mrb[0].mxu0
  %820 = vmatprep.mubr.bf16.mxu0 0
  %821 = vmatmul.mubr.bf16.gmra.mrb[0].mxu0 %v361
  %v822 = vpop.f32.mrb[0].mxu0
  %v823 = vadd.f32 %v134, %v822
  %v824 = vpop.f32.mrb[0].mxu0
  %v825 = vpop.f32.mrb[0].mxu0
  %v826 = vadd.f32 %v134, %v825
  %v827 = vpop.f32.mrb[0].mxu0
  %828 = vmatprep.mubr.bf16.mxu0 0
  %829 = vmatmul.mubr.bf16.gmra.mrb[0].mxu0 %v362
  %v830 = vpop.f32.mrb[0].mxu0
  %v831 = vadd.f32 %v134, %v830
  %v832 = vpop.f32.mrb[0].mxu0
  %v833 = vpop.f32.mrb[0].mxu0
  %v834 = vadd.f32 %v134, %v833
  %v835 = vpop.f32.mrb[0].mxu0
  %836 = vmatprep.mubr.bf16.mxu0 0
  %837 = vmatmul.mubr.bf16.gmra.mrb[0].mxu0 %v363
  %v838 = vpop.f32.mrb[0].mxu0
  %v839 = vadd.f32 %v134, %v838
  %v840 = vpop.f32.mrb[0].mxu0
  %v841 = vpop.f32.mrb[0].mxu0
  %v842 = vadd.f32 %v134, %v841
  %v843 = vpop.f32.mrb[0].mxu0
  %844 = vmatprep.mubr.bf16.mxu0 0
  %845 = vmatmul.mubr.bf16.gmra.mrb[0].mxu0 %v364
  %v846 = vpop.f32.mrb[0].mxu0
  %v847 = vadd.f32 %v134, %v846
  %v848 = vpop.f32.mrb[0].mxu0
  %v849 = vpop.f32.mrb[0].mxu0
  %v850 = vadd.f32 %v134, %v849
  %v851 = vpop.f32.mrb[0].mxu0
  %852 = vmatprep.mubr.bf16.mxu0 0
  %853 = vmatmul.mubr.bf16.gmra.mrb[0].mxu0 %v365
  %v854 = vpop.f32.mrb[0].mxu0
  %v855 = vadd.f32 %v134, %v854
  %v856 = vpop.f32.mrb[0].mxu0
  %v857 = vpop.f32.mrb[0].mxu0
  %v858 = vadd.f32 %v134, %v857
  %v859 = vpop.f32.mrb[0].mxu0
  %860 = vdwg.mxu0
  %v861 = vlaneseq
  %v862 = vshrl.u32 %v861, 7
  %v863 = vadd.s32 %v862, 8
  %v864 = vadd.s32 %v862, 16
  %v865 = vadd.s32 %v862, 24
  %v866 = vadd.s32 %v862, 32
  %v867 = vadd.s32 %v862, 40
  %v868 = vadd.s32 %v862, 48
  %v869 = vadd.s32 %v862, 56
  %v870 = vadd.s32 %v862, 64
  %v871 = vadd.s32 %v862, 72
  %v872 = vadd.s32 %v862, 80
  %v873 = vadd.s32 %v862, 88
  %v874 = vadd.s32 %v862, 96
  %v875 = vadd.s32 %v862, 104
  %v876 = vadd.s32 %v862, 112
  %v877 = vadd.s32 %v862, 120
  %v878 = vadd.s32 %v862, 128
  %v879 = vadd.s32 %v862, 136
  %v880 = vadd.s32 %v862, 144
  %v881 = vadd.s32 %v862, 152
  %v882 = vadd.s32 %v862, 160
  %v883 = vadd.s32 %v862, 168
  %v884 = vadd.s32 %v862, 176
  %v885 = vadd.s32 %v862, 184
  %v886 = vadd.s32 %v862, 192
  %v887 = vadd.s32 %v862, 200
  %v888 = vadd.s32 %v862, 208
  %v889 = vadd.s32 %v862, 216
  %v890 = vadd.s32 %v862, 224
  %v891 = vadd.s32 %v862, 232
  %v892 = vadd.s32 %v862, 240
  %v893 = vadd.s32 %v862, 248
  %v894 = vadd.s32 %v862, 256
  %v895 = vadd.s32 %v862, 264
  %v896 = vadd.s32 %v862, 272
  %v897 = vadd.s32 %v862, 280
  %v898 = vadd.s32 %v862, 288
  %v899 = vadd.s32 %v862, 296
  %v900 = vadd.s32 %v862, 304
  %v901 = vadd.s32 %v862, 312
  %v902 = vadd.s32 %v862, 320
  %v903 = vadd.s32 %v862, 328
  %v904 = vadd.s32 %v862, 336
  %v905 = vadd.s32 %v862, 344
  %v906 = vadd.s32 %v862, 352
  %v907 = vadd.s32 %v862, 360
  %v908 = vadd.s32 %v862, 368
  %v909 = vadd.s32 %v862, 376
  %v910 = vadd.s32 %v862, 384
  %v911 = vadd.s32 %v862, 392
  %v912 = vadd.s32 %v862, 400
  %v913 = vadd.s32 %v862, 408
  %v914 = vadd.s32 %v862, 416
  %v915 = vadd.s32 %v862, 424
  %v916 = vadd.s32 %v862, 432
  %v917 = vadd.s32 %v862, 440
  %v918 = vadd.s32 %v862, 448
  %v919 = vadd.s32 %v862, 456
  %v920 = vadd.s32 %v862, 464
  %v921 = vadd.s32 %v862, 472
  %v922 = vadd.s32 %v862, 480
  %v923 = vadd.s32 %v862, 488
  %v924 = vadd.s32 %v862, 496
  %v925 = vadd.s32 %v862, 504
  %v926 = vadd.s32 %v862, 512
  %v927 = vadd.s32 %v862, 520
  %v928 = vadd.s32 %v862, 528
  %v929 = vadd.s32 %v862, 536
  %v930 = vadd.s32 %v862, 544
  %v931 = vadd.s32 %v862, 552
  %v932 = vadd.s32 %v862, 560
  %v933 = vadd.s32 %v862, 568
  %v934 = vadd.s32 %v862, 576
  %v935 = vadd.s32 %v862, 584
  %v936 = vadd.s32 %v862, 592
  %v937 = vadd.s32 %v862, 600
  %v938 = vadd.s32 %v862, 608
  %v939 = vadd.s32 %v862, 616
  %v940 = vadd.s32 %v862, 624
  %v941 = vadd.s32 %v862, 632
  %v942 = vadd.s32 %v862, 640
  %v943 = vadd.s32 %v862, 648
  %v944 = vadd.s32 %v862, 656
  %v945 = vadd.s32 %v862, 664
  %v946 = vadd.s32 %v862, 672
  %v947 = vadd.s32 %v862, 680
  %v948 = vadd.s32 %v862, 688
  %v949 = vadd.s32 %v862, 696
  %v950 = vadd.s32 %v862, 704
  %v951 = vadd.s32 %v862, 712
  %v952 = vadd.s32 %v862, 720
  %v953 = vadd.s32 %v862, 728
  %vm954 = vcmp.lt.s32.totalorder %v862, 722
  %vm955 = vcmp.lt.s32.totalorder %v863, 722
  %vm956 = vcmp.lt.s32.totalorder %v864, 722
  %vm957 = vcmp.lt.s32.totalorder %v865, 722
  %vm958 = vcmp.lt.s32.totalorder %v866, 722
  %vm959 = vcmp.lt.s32.totalorder %v867, 722
  %vm960 = vcmp.lt.s32.totalorder %v868, 722
  %vm961 = vcmp.lt.s32.totalorder %v869, 722
  %vm962 = vcmp.lt.s32.totalorder %v870, 722
  %vm963 = vcmp.lt.s32.totalorder %v871, 722
  %vm964 = vcmp.lt.s32.totalorder %v872, 722
  %vm965 = vcmp.lt.s32.totalorder %v873, 722
  %vm966 = vcmp.lt.s32.totalorder %v874, 722
  %vm967 = vcmp.lt.s32.totalorder %v875, 722
  %vm968 = vcmp.lt.s32.totalorder %v876, 722
  %vm969 = vcmp.lt.s32.totalorder %v877, 722
  %vm970 = vcmp.lt.s32.totalorder %v878, 722
  %vm971 = vcmp.lt.s32.totalorder %v879, 722
  %vm972 = vcmp.lt.s32.totalorder %v880, 722
  %vm973 = vcmp.lt.s32.totalorder %v881, 722
  %vm974 = vcmp.lt.s32.totalorder %v882, 722
  %vm975 = vcmp.lt.s32.totalorder %v883, 722
  %vm976 = vcmp.lt.s32.totalorder %v884, 722
  %vm977 = vcmp.lt.s32.totalorder %v885, 722
  %vm978 = vcmp.lt.s32.totalorder %v886, 722
  %vm979 = vcmp.lt.s32.totalorder %v887, 722
  %vm980 = vcmp.lt.s32.totalorder %v888, 722
  %vm981 = vcmp.lt.s32.totalorder %v889, 722
  %vm982 = vcmp.lt.s32.totalorder %v890, 722
  %vm983 = vcmp.lt.s32.totalorder %v891, 722
  %vm984 = vcmp.lt.s32.totalorder %v892, 722
  %vm985 = vcmp.lt.s32.totalorder %v893, 722
  %vm986 = vcmp.lt.s32.totalorder %v894, 722
  %vm987 = vcmp.lt.s32.totalorder %v895, 722
  %vm988 = vcmp.lt.s32.totalorder %v896, 722
  %vm989 = vcmp.lt.s32.totalorder %v897, 722
  %vm990 = vcmp.lt.s32.totalorder %v898, 722
  %vm991 = vcmp.lt.s32.totalorder %v899, 722
  %vm992 = vcmp.lt.s32.totalorder %v900, 722
  %vm993 = vcmp.lt.s32.totalorder %v901, 722
  %vm994 = vcmp.lt.s32.totalorder %v902, 722
  %vm995 = vcmp.lt.s32.totalorder %v903, 722
  %vm996 = vcmp.lt.s32.totalorder %v904, 722
  %vm997 = vcmp.lt.s32.totalorder %v905, 722
  %vm998 = vcmp.lt.s32.totalorder %v906, 722
  %vm999 = vcmp.lt.s32.totalorder %v907, 722
  %vm1000 = vcmp.lt.s32.totalorder %v908, 722
  %vm1001 = vcmp.lt.s32.totalorder %v909, 722
  %vm1002 = vcmp.lt.s32.totalorder %v910, 722
  %vm1003 = vcmp.lt.s32.totalorder %v911, 722
  %vm1004 = vcmp.lt.s32.totalorder %v912, 722
  %vm1005 = vcmp.lt.s32.totalorder %v913, 722
  %vm1006 = vcmp.lt.s32.totalorder %v914, 722
  %vm1007 = vcmp.lt.s32.totalorder %v915, 722
  %vm1008 = vcmp.lt.s32.totalorder %v916, 722
  %vm1009 = vcmp.lt.s32.totalorder %v917, 722
  %vm1010 = vcmp.lt.s32.totalorder %v918, 722
  %vm1011 = vcmp.lt.s32.totalorder %v919, 722
  %vm1012 = vcmp.lt.s32.totalorder %v920, 722
  %vm1013 = vcmp.lt.s32.totalorder %v921, 722
  %vm1014 = vcmp.lt.s32.totalorder %v922, 722
  %vm1015 = vcmp.lt.s32.totalorder %v923, 722
  %vm1016 = vcmp.lt.s32.totalorder %v924, 722
  %vm1017 = vcmp.lt.s32.totalorder %v925, 722
  %vm1018 = vcmp.lt.s32.totalorder %v926, 722
  %vm1019 = vcmp.lt.s32.totalorder %v927, 722
  %vm1020 = vcmp.lt.s32.totalorder %v928, 722
  %vm1021 = vcmp.lt.s32.totalorder %v929, 722
  %vm1022 = vcmp.lt.s32.totalorder %v930, 722
  %vm1023 = vcmp.lt.s32.totalorder %v931, 722
  %vm1024 = vcmp.lt.s32.totalorder %v932, 722
  %vm1025 = vcmp.lt.s32.totalorder %v933, 722
  %vm1026 = vcmp.lt.s32.totalorder %v934, 722
  %vm1027 = vcmp.lt.s32.totalorder %v935, 722
  %vm1028 = vcmp.lt.s32.totalorder %v936, 722
  %vm1029 = vcmp.lt.s32.totalorder %v937, 722
  %vm1030 = vcmp.lt.s32.totalorder %v938, 722
  %vm1031 = vcmp.lt.s32.totalorder %v939, 722
  %vm1032 = vcmp.lt.s32.totalorder %v940, 722
  %vm1033 = vcmp.lt.s32.totalorder %v941, 722
  %vm1034 = vcmp.lt.s32.totalorder %v942, 722
  %vm1035 = vcmp.lt.s32.totalorder %v943, 722
  %vm1036 = vcmp.lt.s32.totalorder %v944, 722
  %vm1037 = vcmp.lt.s32.totalorder %v945, 722
  %vm1038 = vcmp.lt.s32.totalorder %v946, 722
  %vm1039 = vcmp.lt.s32.totalorder %v947, 722
  %vm1040 = vcmp.lt.s32.totalorder %v948, 722
  %vm1041 = vcmp.lt.s32.totalorder %v949, 722
  %vm1042 = vcmp.lt.s32.totalorder %v950, 722
  %vm1043 = vcmp.lt.s32.totalorder %v951, 722
  %vm1044 = vcmp.lt.s32.totalorder %v952, 722
  %vm1045 = vcmp.lt.s32.totalorder %v953, 722
  %v1046 = vsel %vm954, %v495, 0.0
  %v1047 = vsel %vm955, %v498, 0.0
  %v1048 = vsel %vm956, %v503, 0.0
  %v1049 = vsel %vm957, %v506, 0.0
  %v1050 = vsel %vm958, %v511, 0.0
  %v1051 = vsel %vm959, %v514, 0.0
  %v1052 = vsel %vm960, %v519, 0.0
  %v1053 = vsel %vm961, %v522, 0.0
  %v1054 = vsel %vm962, %v527, 0.0
  %v1055 = vsel %vm963, %v530, 0.0
  %v1056 = vsel %vm964, %v535, 0.0
  %v1057 = vsel %vm965, %v538, 0.0
  %v1058 = vsel %vm966, %v543, 0.0
  %v1059 = vsel %vm967, %v546, 0.0
  %v1060 = vsel %vm968, %v551, 0.0
  %v1061 = vsel %vm969, %v554, 0.0
  %v1062 = vsel %vm970, %v559, 0.0
  %v1063 = vsel %vm971, %v562, 0.0
  %v1064 = vsel %vm972, %v567, 0.0
  %v1065 = vsel %vm973, %v570, 0.0
  %v1066 = vsel %vm974, %v575, 0.0
  %v1067 = vsel %vm975, %v578, 0.0
  %v1068 = vsel %vm976, %v583, 0.0
  %v1069 = vsel %vm977, %v586, 0.0
  %v1070 = vsel %vm978, %v591, 0.0
  %v1071 = vsel %vm979, %v594, 0.0
  %v1072 = vsel %vm980, %v599, 0.0
  %v1073 = vsel %vm981, %v602, 0.0
  %v1074 = vsel %vm982, %v607, 0.0
  %v1075 = vsel %vm983, %v610, 0.0
  %v1076 = vsel %vm984, %v615, 0.0
  %v1077 = vsel %vm985, %v618, 0.0
  %v1078 = vsel %vm986, %v623, 0.0
  %v1079 = vsel %vm987, %v626, 0.0
  %v1080 = vsel %vm988, %v631, 0.0
  %v1081 = vsel %vm989, %v634, 0.0
  %v1082 = vsel %vm990, %v639, 0.0
  %v1083 = vsel %vm991, %v642, 0.0
  %v1084 = vsel %vm992, %v647, 0.0
  %v1085 = vsel %vm993, %v650, 0.0
  %v1086 = vsel %vm994, %v655, 0.0
  %v1087 = vsel %vm995, %v658, 0.0
  %v1088 = vsel %vm996, %v663, 0.0
  %v1089 = vsel %vm997, %v666, 0.0
  %v1090 = vsel %vm998, %v671, 0.0
  %v1091 = vsel %vm999, %v674, 0.0
  %v1092 = vsel %vm1000, %v679, 0.0
  %v1093 = vsel %vm1001, %v682, 0.0
  %v1094 = vsel %vm1002, %v687, 0.0
  %v1095 = vsel %vm1003, %v690, 0.0
  %v1096 = vsel %vm1004, %v695, 0.0
  %v1097 = vsel %vm1005, %v698, 0.0
  %v1098 = vsel %vm1006, %v703, 0.0
  %v1099 = vsel %vm1007, %v706, 0.0
  %v1100 = vsel %vm1008, %v711, 0.0
  %v1101 = vsel %vm1009, %v714, 0.0
  %v1102 = vsel %vm1010, %v719, 0.0
  %v1103 = vsel %vm1011, %v722, 0.0
  %v1104 = vsel %vm1012, %v727, 0.0
  %v1105 = vsel %vm1013, %v730, 0.0
  %v1106 = vsel %vm1014, %v735, 0.0
  %v1107 = vsel %vm1015, %v738, 0.0
  %v1108 = vsel %vm1016, %v743, 0.0
  %v1109 = vsel %vm1017, %v746, 0.0
  %v1110 = vsel %vm1018, %v751, 0.0
  %v1111 = vsel %vm1019, %v754, 0.0
  %v1112 = vsel %vm1020, %v759, 0.0
  %v1113 = vsel %vm1021, %v762, 0.0
  %v1114 = vsel %vm1022, %v767, 0.0
  %v1115 = vsel %vm1023, %v770, 0.0
  %v1116 = vsel %vm1024, %v775, 0.0
  %v1117 = vsel %vm1025, %v778, 0.0
  %v1118 = vsel %vm1026, %v783, 0.0
  %v1119 = vsel %vm1027, %v786, 0.0
  %v1120 = vsel %vm1028, %v791, 0.0
  %v1121 = vsel %vm1029, %v794, 0.0
  %v1122 = vsel %vm1030, %v799, 0.0
  %v1123 = vsel %vm1031, %v802, 0.0
  %v1124 = vsel %vm1032, %v807, 0.0
  %v1125 = vsel %vm1033, %v810, 0.0
  %v1126 = vsel %vm1034, %v815, 0.0
  %v1127 = vsel %vm1035, %v818, 0.0
  %v1128 = vsel %vm1036, %v823, 0.0
  %v1129 = vsel %vm1037, %v826, 0.0
  %v1130 = vsel %vm1038, %v831, 0.0
  %v1131 = vsel %vm1039, %v834, 0.0
  %v1132 = vsel %vm1040, %v839, 0.0
  %v1133 = vsel %vm1041, %v842, 0.0
  %v1134 = vsel %vm1042, %v847, 0.0
  %v1135 = vsel %vm1043, %v850, 0.0
  %v1136 = vsel %vm1044, %v855, 0.0
  %v1137 = vsel %vm1045, %v858, 0.0
  %v1138 = vadd.f32 %v1046, %v1047
  %v1139 = vadd.f32 %v1138, %v1048
  %v1140 = vadd.f32 %v1139, %v1049
  %v1141 = vadd.f32 %v1140, %v1050
  %v1142 = vadd.f32 %v1141, %v1051
  %v1143 = vadd.f32 %v1142, %v1052
  %v1144 = vadd.f32 %v1143, %v1053
  %v1145 = vadd.f32 %v1144, %v1054
  %v1146 = vadd.f32 %v1145, %v1055
  %v1147 = vadd.f32 %v1146, %v1056
  %v1148 = vadd.f32 %v1147, %v1057
  %v1149 = vadd.f32 %v1148, %v1058
  %v1150 = vadd.f32 %v1149, %v1059
  %v1151 = vadd.f32 %v1150, %v1060
  %v1152 = vadd.f32 %v1151, %v1061
  %v1153 = vadd.f32 %v1152, %v1062
  %v1154 = vadd.f32 %v1153, %v1063
  %v1155 = vadd.f32 %v1154, %v1064
  %v1156 = vadd.f32 %v1155, %v1065
  %v1157 = vadd.f32 %v1156, %v1066
  %v1158 = vadd.f32 %v1157, %v1067
  %v1159 = vadd.f32 %v1158, %v1068
  %v1160 = vadd.f32 %v1159, %v1069
  %v1161 = vadd.f32 %v1160, %v1070
  %v1162 = vadd.f32 %v1161, %v1071
  %v1163 = vadd.f32 %v1162, %v1072
  %v1164 = vadd.f32 %v1163, %v1073
  %v1165 = vadd.f32 %v1164, %v1074
  %v1166 = vadd.f32 %v1165, %v1075
  %v1167 = vadd.f32 %v1166, %v1076
  %v1168 = vadd.f32 %v1167, %v1077
  %v1169 = vadd.f32 %v1168, %v1078
  %v1170 = vadd.f32 %v1169, %v1079
  %v1171 = vadd.f32 %v1170, %v1080
  %v1172 = vadd.f32 %v1171, %v1081
  %v1173 = vadd.f32 %v1172, %v1082
  %v1174 = vadd.f32 %v1173, %v1083
  %v1175 = vadd.f32 %v1174, %v1084
  %v1176 = vadd.f32 %v1175, %v1085
  %v1177 = vadd.f32 %v1176, %v1086
  %v1178 = vadd.f32 %v1177, %v1087
  %v1179 = vadd.f32 %v1178, %v1088
  %v1180 = vadd.f32 %v1179, %v1089
  %v1181 = vadd.f32 %v1180, %v1090
  %v1182 = vadd.f32 %v1181, %v1091
  %v1183 = vadd.f32 %v1182, %v1092
  %v1184 = vadd.f32 %v1183, %v1093
  %v1185 = vadd.f32 %v1184, %v1094
  %v1186 = vadd.f32 %v1185, %v1095
  %v1187 = vadd.f32 %v1186, %v1096
  %v1188 = vadd.f32 %v1187, %v1097
  %v1189 = vadd.f32 %v1188, %v1098
  %v1190 = vadd.f32 %v1189, %v1099
  %v1191 = vadd.f32 %v1190, %v1100
  %v1192 = vadd.f32 %v1191, %v1101
  %v1193 = vadd.f32 %v1192, %v1102
  %v1194 = vadd.f32 %v1193, %v1103
  %v1195 = vadd.f32 %v1194, %v1104
  %v1196 = vadd.f32 %v1195, %v1105
  %v1197 = vadd.f32 %v1196, %v1106
  %v1198 = vadd.f32 %v1197, %v1107
  %v1199 = vadd.f32 %v1198, %v1108
  %v1200 = vadd.f32 %v1199, %v1109
  %v1201 = vadd.f32 %v1200, %v1110
  %v1202 = vadd.f32 %v1201, %v1111
  %v1203 = vadd.f32 %v1202, %v1112
  %v1204 = vadd.f32 %v1203, %v1113
  %v1205 = vadd.f32 %v1204, %v1114
  %v1206 = vadd.f32 %v1205, %v1115
  %v1207 = vadd.f32 %v1206, %v1116
  %v1208 = vadd.f32 %v1207, %v1117
  %v1209 = vadd.f32 %v1208, %v1118
  %v1210 = vadd.f32 %v1209, %v1119
  %v1211 = vadd.f32 %v1210, %v1120
  %v1212 = vadd.f32 %v1211, %v1121
  %v1213 = vadd.f32 %v1212, %v1122
  %v1214 = vadd.f32 %v1213, %v1123
  %v1215 = vadd.f32 %v1214, %v1124
  %v1216 = vadd.f32 %v1215, %v1125
  %v1217 = vadd.f32 %v1216, %v1126
  %v1218 = vadd.f32 %v1217, %v1127
  %v1219 = vadd.f32 %v1218, %v1128
  %v1220 = vadd.f32 %v1219, %v1129
  %v1221 = vadd.f32 %v1220, %v1130
  %v1222 = vadd.f32 %v1221, %v1131
  %v1223 = vadd.f32 %v1222, %v1132
  %v1224 = vadd.f32 %v1223, %v1133
  %v1225 = vadd.f32 %v1224, %v1134
  %v1226 = vadd.f32 %v1225, %v1135
  %v1227 = vadd.f32 %v1226, %v1136
  %v1228 = vadd.f32 %v1227, %v1137
  %v1229 = vrot.slane %v1228, 4
  %v1230 = vadd.f32 %v1228, %v1229
  %v1231 = vrot.slane %v1230, 2
  %v1232 = vadd.f32 %v1230, %v1231
  %v1233 = vrot.slane %v1232, 1
  %v1234 = vadd.f32 %v1232, %v1233
  %v1235 = vmul.f32 %v1046, %v1046
  %v1236 = vmul.f32 %v1047, %v1047
  %v1237 = vmul.f32 %v1048, %v1048
  %v1238 = vmul.f32 %v1049, %v1049
  %v1239 = vmul.f32 %v1050, %v1050
  %v1240 = vmul.f32 %v1051, %v1051
  %v1241 = vmul.f32 %v1052, %v1052
  %v1242 = vmul.f32 %v1053, %v1053
  %v1243 = vmul.f32 %v1054, %v1054
  %v1244 = vmul.f32 %v1055, %v1055
  %v1245 = vmul.f32 %v1056, %v1056
  %v1246 = vmul.f32 %v1057, %v1057
  %v1247 = vmul.f32 %v1058, %v1058
  %v1248 = vmul.f32 %v1059, %v1059
  %v1249 = vmul.f32 %v1060, %v1060
  %v1250 = vmul.f32 %v1061, %v1061
  %v1251 = vmul.f32 %v1062, %v1062
  %v1252 = vmul.f32 %v1063, %v1063
  %v1253 = vmul.f32 %v1064, %v1064
  %v1254 = vmul.f32 %v1065, %v1065
  %v1255 = vmul.f32 %v1066, %v1066
  %v1256 = vmul.f32 %v1067, %v1067
  %v1257 = vmul.f32 %v1068, %v1068
  %v1258 = vmul.f32 %v1069, %v1069
  %v1259 = vmul.f32 %v1070, %v1070
  %v1260 = vmul.f32 %v1071, %v1071
  %v1261 = vmul.f32 %v1072, %v1072
  %v1262 = vmul.f32 %v1073, %v1073
  %v1263 = vmul.f32 %v1074, %v1074
  %v1264 = vmul.f32 %v1075, %v1075
  %v1265 = vmul.f32 %v1076, %v1076
  %v1266 = vmul.f32 %v1077, %v1077
  %v1267 = vmul.f32 %v1078, %v1078
  %v1268 = vmul.f32 %v1079, %v1079
  %v1269 = vmul.f32 %v1080, %v1080
  %v1270 = vmul.f32 %v1081, %v1081
  %v1271 = vmul.f32 %v1082, %v1082
  %v1272 = vmul.f32 %v1083, %v1083
  %v1273 = vmul.f32 %v1084, %v1084
  %v1274 = vmul.f32 %v1085, %v1085
  %v1275 = vmul.f32 %v1086, %v1086
  %v1276 = vmul.f32 %v1087, %v1087
  %v1277 = vmul.f32 %v1088, %v1088
  %v1278 = vmul.f32 %v1089, %v1089
  %v1279 = vmul.f32 %v1090, %v1090
  %v1280 = vmul.f32 %v1091, %v1091
  %v1281 = vmul.f32 %v1092, %v1092
  %v1282 = vmul.f32 %v1093, %v1093
  %v1283 = vmul.f32 %v1094, %v1094
  %v1284 = vmul.f32 %v1095, %v1095
  %v1285 = vmul.f32 %v1096, %v1096
  %v1286 = vmul.f32 %v1097, %v1097
  %v1287 = vmul.f32 %v1098, %v1098
  %v1288 = vmul.f32 %v1099, %v1099
  %v1289 = vmul.f32 %v1100, %v1100
  %v1290 = vmul.f32 %v1101, %v1101
  %v1291 = vmul.f32 %v1102, %v1102
  %v1292 = vmul.f32 %v1103, %v1103
  %v1293 = vmul.f32 %v1104, %v1104
  %v1294 = vmul.f32 %v1105, %v1105
  %v1295 = vmul.f32 %v1106, %v1106
  %v1296 = vmul.f32 %v1107, %v1107
  %v1297 = vmul.f32 %v1108, %v1108
  %v1298 = vmul.f32 %v1109, %v1109
  %v1299 = vmul.f32 %v1110, %v1110
  %v1300 = vmul.f32 %v1111, %v1111
  %v1301 = vmul.f32 %v1112, %v1112
  %v1302 = vmul.f32 %v1113, %v1113
  %v1303 = vmul.f32 %v1114, %v1114
  %v1304 = vmul.f32 %v1115, %v1115
  %v1305 = vmul.f32 %v1116, %v1116
  %v1306 = vmul.f32 %v1117, %v1117
  %v1307 = vmul.f32 %v1118, %v1118
  %v1308 = vmul.f32 %v1119, %v1119
  %v1309 = vmul.f32 %v1120, %v1120
  %v1310 = vmul.f32 %v1121, %v1121
  %v1311 = vmul.f32 %v1122, %v1122
  %v1312 = vmul.f32 %v1123, %v1123
  %v1313 = vmul.f32 %v1124, %v1124
  %v1314 = vmul.f32 %v1125, %v1125
  %v1315 = vmul.f32 %v1126, %v1126
  %v1316 = vmul.f32 %v1127, %v1127
  %v1317 = vmul.f32 %v1128, %v1128
  %v1318 = vmul.f32 %v1129, %v1129
  %v1319 = vmul.f32 %v1130, %v1130
  %v1320 = vmul.f32 %v1131, %v1131
  %v1321 = vmul.f32 %v1132, %v1132
  %v1322 = vmul.f32 %v1133, %v1133
  %v1323 = vmul.f32 %v1134, %v1134
  %v1324 = vmul.f32 %v1135, %v1135
  %v1325 = vmul.f32 %v1136, %v1136
  %v1326 = vmul.f32 %v1137, %v1137
  %v1327 = vadd.f32 %v1235, %v1236
  %v1328 = vadd.f32 %v1327, %v1237
  %v1329 = vadd.f32 %v1328, %v1238
  %v1330 = vadd.f32 %v1329, %v1239
  %v1331 = vadd.f32 %v1330, %v1240
  %v1332 = vadd.f32 %v1331, %v1241
  %v1333 = vadd.f32 %v1332, %v1242
  %v1334 = vadd.f32 %v1333, %v1243
  %v1335 = vadd.f32 %v1334, %v1244
  %v1336 = vadd.f32 %v1335, %v1245
  %v1337 = vadd.f32 %v1336, %v1246
  %v1338 = vadd.f32 %v1337, %v1247
  %v1339 = vadd.f32 %v1338, %v1248
  %v1340 = vadd.f32 %v1339, %v1249
  %v1341 = vadd.f32 %v1340, %v1250
  %v1342 = vadd.f32 %v1341, %v1251
  %v1343 = vadd.f32 %v1342, %v1252
  %v1344 = vadd.f32 %v1343, %v1253
  %v1345 = vadd.f32 %v1344, %v1254
  %v1346 = vadd.f32 %v1345, %v1255
  %v1347 = vadd.f32 %v1346, %v1256
  %v1348 = vadd.f32 %v1347, %v1257
  %v1349 = vadd.f32 %v1348, %v1258
  %v1350 = vadd.f32 %v1349, %v1259
  %v1351 = vadd.f32 %v1350, %v1260
  %v1352 = vadd.f32 %v1351, %v1261
  %v1353 = vadd.f32 %v1352, %v1262
  %v1354 = vadd.f32 %v1353, %v1263
  %v1355 = vadd.f32 %v1354, %v1264
  %v1356 = vadd.f32 %v1355, %v1265
  %v1357 = vadd.f32 %v1356, %v1266
  %v1358 = vadd.f32 %v1357, %v1267
  %v1359 = vadd.f32 %v1358, %v1268
  %v1360 = vadd.f32 %v1359, %v1269
  %v1361 = vadd.f32 %v1360, %v1270
  %v1362 = vadd.f32 %v1361, %v1271
  %v1363 = vadd.f32 %v1362, %v1272
  %v1364 = vadd.f32 %v1363, %v1273
  %v1365 = vadd.f32 %v1364, %v1274
  %v1366 = vadd.f32 %v1365, %v1275
  %v1367 = vadd.f32 %v1366, %v1276
  %v1368 = vadd.f32 %v1367, %v1277
  %v1369 = vadd.f32 %v1368, %v1278
  %v1370 = vadd.f32 %v1369, %v1279
  %v1371 = vadd.f32 %v1370, %v1280
  %v1372 = vadd.f32 %v1371, %v1281
  %v1373 = vadd.f32 %v1372, %v1282
  %v1374 = vadd.f32 %v1373, %v1283
  %v1375 = vadd.f32 %v1374, %v1284
  %v1376 = vadd.f32 %v1375, %v1285
  %v1377 = vadd.f32 %v1376, %v1286
  %v1378 = vadd.f32 %v1377, %v1287
  %v1379 = vadd.f32 %v1378, %v1288
  %v1380 = vadd.f32 %v1379, %v1289
  %v1381 = vadd.f32 %v1380, %v1290
  %v1382 = vadd.f32 %v1381, %v1291
  %v1383 = vadd.f32 %v1382, %v1292
  %v1384 = vadd.f32 %v1383, %v1293
  %v1385 = vadd.f32 %v1384, %v1294
  %v1386 = vadd.f32 %v1385, %v1295
  %v1387 = vadd.f32 %v1386, %v1296
  %v1388 = vadd.f32 %v1387, %v1297
  %v1389 = vadd.f32 %v1388, %v1298
  %v1390 = vadd.f32 %v1389, %v1299
  %v1391 = vadd.f32 %v1390, %v1300
  %v1392 = vadd.f32 %v1391, %v1301
  %v1393 = vadd.f32 %v1392, %v1302
  %v1394 = vadd.f32 %v1393, %v1303
  %v1395 = vadd.f32 %v1394, %v1304
  %v1396 = vadd.f32 %v1395, %v1305
  %v1397 = vadd.f32 %v1396, %v1306
  %v1398 = vadd.f32 %v1397, %v1307
  %v1399 = vadd.f32 %v1398, %v1308
  %v1400 = vadd.f32 %v1399, %v1309
  %v1401 = vadd.f32 %v1400, %v1310
  %v1402 = vadd.f32 %v1401, %v1311
  %v1403 = vadd.f32 %v1402, %v1312
  %v1404 = vadd.f32 %v1403, %v1313
  %v1405 = vadd.f32 %v1404, %v1314
  %v1406 = vadd.f32 %v1405, %v1315
  %v1407 = vadd.f32 %v1406, %v1316
  %v1408 = vadd.f32 %v1407, %v1317
  %v1409 = vadd.f32 %v1408, %v1318
  %v1410 = vadd.f32 %v1409, %v1319
  %v1411 = vadd.f32 %v1410, %v1320
  %v1412 = vadd.f32 %v1411, %v1321
  %v1413 = vadd.f32 %v1412, %v1322
  %v1414 = vadd.f32 %v1413, %v1323
  %v1415 = vadd.f32 %v1414, %v1324
  %v1416 = vadd.f32 %v1415, %v1325
  %v1417 = vadd.f32 %v1416, %v1326
  %v1418 = vrot.slane %v1417, 4
  %v1419 = vadd.f32 %v1417, %v1418
  %v1420 = vrot.slane %v1419, 2
  %v1421 = vadd.f32 %v1419, %v1420
  %v1422 = vrot.slane %v1421, 1
  %v1423 = vadd.f32 %v1421, %v1422
  %v1424 = vmul.f32 %v1234, 0.0013850415
  %v1425 = vmul.f32 %v1423, 0.0013850415
  %v1426 = vmul.f32 %v1424, %v1424
  %v1427 = vsub.f32 %v1425, %v1426
  %v1428 = vmax.f32 %v1427, 0.0
  %v1429 = vadd.f32 %v1428, 1e-05
  %v1430 = vrsqrt.pop %v1429
  %v1431 = vld [vmem:[%s3] sm:$0x1]
  %v1432 = vmul.f32 %v1430, %v1431
  %v1433 = vld [vmem:[%s4] sm:$0x1]
  %v1434 = vmul.f32 %v1424, %v1432
  %v1435 = vsub.f32 %v1433, %v1434
  %v1436 = vlaneseq
  %v1437 = vshrl.u32 %v1436, 7
  %v1438 = vsub.s32 0, %v1437
  %v1439 = vrot.slane %v1432, %v1438
  %v1440 = vmul.f32 %v495, %v1439
  %v1441 = vmul.f32 %v498, %v1439
  %v1442 = vmul.f32 %v503, %v1439
  %v1443 = vmul.f32 %v506, %v1439
  %v1444 = vmul.f32 %v511, %v1439
  %v1445 = vmul.f32 %v514, %v1439
  %v1446 = vmul.f32 %v519, %v1439
  %v1447 = vmul.f32 %v522, %v1439
  %v1448 = vmul.f32 %v527, %v1439
  %v1449 = vmul.f32 %v530, %v1439
  %v1450 = vmul.f32 %v535, %v1439
  %v1451 = vmul.f32 %v538, %v1439
  %v1452 = vmul.f32 %v543, %v1439
  %v1453 = vmul.f32 %v546, %v1439
  %v1454 = vmul.f32 %v551, %v1439
  %v1455 = vmul.f32 %v554, %v1439
  %v1456 = vmul.f32 %v559, %v1439
  %v1457 = vmul.f32 %v562, %v1439
  %v1458 = vmul.f32 %v567, %v1439
  %v1459 = vmul.f32 %v570, %v1439
  %v1460 = vmul.f32 %v575, %v1439
  %v1461 = vmul.f32 %v578, %v1439
  %v1462 = vmul.f32 %v583, %v1439
  %v1463 = vmul.f32 %v586, %v1439
  %v1464 = vmul.f32 %v591, %v1439
  %v1465 = vmul.f32 %v594, %v1439
  %v1466 = vmul.f32 %v599, %v1439
  %v1467 = vmul.f32 %v602, %v1439
  %v1468 = vmul.f32 %v607, %v1439
  %v1469 = vmul.f32 %v610, %v1439
  %v1470 = vmul.f32 %v615, %v1439
  %v1471 = vmul.f32 %v618, %v1439
  %v1472 = vmul.f32 %v623, %v1439
  %v1473 = vmul.f32 %v626, %v1439
  %v1474 = vmul.f32 %v631, %v1439
  %v1475 = vmul.f32 %v634, %v1439
  %v1476 = vmul.f32 %v639, %v1439
  %v1477 = vmul.f32 %v642, %v1439
  %v1478 = vmul.f32 %v647, %v1439
  %v1479 = vmul.f32 %v650, %v1439
  %v1480 = vmul.f32 %v655, %v1439
  %v1481 = vmul.f32 %v658, %v1439
  %v1482 = vmul.f32 %v663, %v1439
  %v1483 = vmul.f32 %v666, %v1439
  %v1484 = vmul.f32 %v671, %v1439
  %v1485 = vmul.f32 %v674, %v1439
  %v1486 = vmul.f32 %v679, %v1439
  %v1487 = vmul.f32 %v682, %v1439
  %v1488 = vmul.f32 %v687, %v1439
  %v1489 = vmul.f32 %v690, %v1439
  %v1490 = vmul.f32 %v695, %v1439
  %v1491 = vmul.f32 %v698, %v1439
  %v1492 = vmul.f32 %v703, %v1439
  %v1493 = vmul.f32 %v706, %v1439
  %v1494 = vmul.f32 %v711, %v1439
  %v1495 = vmul.f32 %v714, %v1439
  %v1496 = vmul.f32 %v719, %v1439
  %v1497 = vmul.f32 %v722, %v1439
  %v1498 = vmul.f32 %v727, %v1439
  %v1499 = vmul.f32 %v730, %v1439
  %v1500 = vmul.f32 %v735, %v1439
  %v1501 = vmul.f32 %v738, %v1439
  %v1502 = vmul.f32 %v743, %v1439
  %v1503 = vmul.f32 %v746, %v1439
  %v1504 = vmul.f32 %v751, %v1439
  %v1505 = vmul.f32 %v754, %v1439
  %v1506 = vmul.f32 %v759, %v1439
  %v1507 = vmul.f32 %v762, %v1439
  %v1508 = vmul.f32 %v767, %v1439
  %v1509 = vmul.f32 %v770, %v1439
  %v1510 = vmul.f32 %v775, %v1439
  %v1511 = vmul.f32 %v778, %v1439
  %v1512 = vmul.f32 %v783, %v1439
  %v1513 = vmul.f32 %v786, %v1439
  %v1514 = vmul.f32 %v791, %v1439
  %v1515 = vmul.f32 %v794, %v1439
  %v1516 = vmul.f32 %v799, %v1439
  %v1517 = vmul.f32 %v802, %v1439
  %v1518 = vmul.f32 %v807, %v1439
  %v1519 = vmul.f32 %v810, %v1439
  %v1520 = vmul.f32 %v815, %v1439
  %v1521 = vmul.f32 %v818, %v1439
  %v1522 = vmul.f32 %v823, %v1439
  %v1523 = vmul.f32 %v826, %v1439
  %v1524 = vmul.f32 %v831, %v1439
  %v1525 = vmul.f32 %v834, %v1439
  %v1526 = vmul.f32 %v839, %v1439
  %v1527 = vmul.f32 %v842, %v1439
  %v1528 = vmul.f32 %v847, %v1439
  %v1529 = vmul.f32 %v850, %v1439
  %v1530 = vmul.f32 %v855, %v1439
  %v1531 = vmul.f32 %v858, %v1439
  %v1533 = vlaneseq
  %v1534 = vshrl.u32 %v1533, 7
  %v1535 = vsub.s32 0, %v1534
  %v1536 = vrot.slane %v1435, %v1535
  %v1538 = vadd.f32 %v1440, %v1536
  %v1539 = vadd.f32 %v1441, %v1536
  %v1540 = vadd.f32 %v1442, %v1536
  %v1541 = vadd.f32 %v1443, %v1536
  %v1542 = vadd.f32 %v1444, %v1536
  %v1543 = vadd.f32 %v1445, %v1536
  %v1544 = vadd.f32 %v1446, %v1536
  %v1545 = vadd.f32 %v1447, %v1536
  %v1546 = vadd.f32 %v1448, %v1536
  %v1547 = vadd.f32 %v1449, %v1536
  %v1548 = vadd.f32 %v1450, %v1536
  %v1549 = vadd.f32 %v1451, %v1536
  %v1550 = vadd.f32 %v1452, %v1536
  %v1551 = vadd.f32 %v1453, %v1536
  %v1552 = vadd.f32 %v1454, %v1536
  %v1553 = vadd.f32 %v1455, %v1536
  %v1554 = vadd.f32 %v1456, %v1536
  %v1555 = vadd.f32 %v1457, %v1536
  %v1556 = vadd.f32 %v1458, %v1536
  %v1557 = vadd.f32 %v1459, %v1536
  %v1558 = vadd.f32 %v1460, %v1536
  %v1559 = vadd.f32 %v1461, %v1536
  %v1560 = vadd.f32 %v1462, %v1536
  %v1561 = vadd.f32 %v1463, %v1536
  %v1562 = vadd.f32 %v1464, %v1536
  %v1563 = vadd.f32 %v1465, %v1536
  %v1564 = vadd.f32 %v1466, %v1536
  %v1565 = vadd.f32 %v1467, %v1536
  %v1566 = vadd.f32 %v1468, %v1536
  %v1567 = vadd.f32 %v1469, %v1536
  %v1568 = vadd.f32 %v1470, %v1536
  %v1569 = vadd.f32 %v1471, %v1536
  %v1570 = vadd.f32 %v1472, %v1536
  %v1571 = vadd.f32 %v1473, %v1536
  %v1572 = vadd.f32 %v1474, %v1536
  %v1573 = vadd.f32 %v1475, %v1536
  %v1574 = vadd.f32 %v1476, %v1536
  %v1575 = vadd.f32 %v1477, %v1536
  %v1576 = vadd.f32 %v1478, %v1536
  %v1577 = vadd.f32 %v1479, %v1536
  %v1578 = vadd.f32 %v1480, %v1536
  %v1579 = vadd.f32 %v1481, %v1536
  %v1580 = vadd.f32 %v1482, %v1536
  %v1581 = vadd.f32 %v1483, %v1536
  %v1582 = vadd.f32 %v1484, %v1536
  %v1583 = vadd.f32 %v1485, %v1536
  %v1584 = vadd.f32 %v1486, %v1536
  %v1585 = vadd.f32 %v1487, %v1536
  %v1586 = vadd.f32 %v1488, %v1536
  %v1587 = vadd.f32 %v1489, %v1536
  %v1588 = vadd.f32 %v1490, %v1536
  %v1589 = vadd.f32 %v1491, %v1536
  %v1590 = vadd.f32 %v1492, %v1536
  %v1591 = vadd.f32 %v1493, %v1536
  %v1592 = vadd.f32 %v1494, %v1536
  %v1593 = vadd.f32 %v1495, %v1536
  %v1594 = vadd.f32 %v1496, %v1536
  %v1595 = vadd.f32 %v1497, %v1536
  %v1596 = vadd.f32 %v1498, %v1536
  %v1597 = vadd.f32 %v1499, %v1536
  %v1598 = vadd.f32 %v1500, %v1536
  %v1599 = vadd.f32 %v1501, %v1536
  %v1600 = vadd.f32 %v1502, %v1536
  %v1601 = vadd.f32 %v1503, %v1536
  %v1602 = vadd.f32 %v1504, %v1536
  %v1603 = vadd.f32 %v1505, %v1536
  %v1604 = vadd.f32 %v1506, %v1536
  %v1605 = vadd.f32 %v1507, %v1536
  %v1606 = vadd.f32 %v1508, %v1536
  %v1607 = vadd.f32 %v1509, %v1536
  %v1608 = vadd.f32 %v1510, %v1536
  %v1609 = vadd.f32 %v1511, %v1536
  %v1610 = vadd.f32 %v1512, %v1536
  %v1611 = vadd.f32 %v1513, %v1536
  %v1612 = vadd.f32 %v1514, %v1536
  %v1613 = vadd.f32 %v1515, %v1536
  %v1614 = vadd.f32 %v1516, %v1536
  %v1615 = vadd.f32 %v1517, %v1536
  %v1616 = vadd.f32 %v1518, %v1536
  %v1617 = vadd.f32 %v1519, %v1536
  %v1618 = vadd.f32 %v1520, %v1536
  %v1619 = vadd.f32 %v1521, %v1536
  %v1620 = vadd.f32 %v1522, %v1536
  %v1621 = vadd.f32 %v1523, %v1536
  %v1622 = vadd.f32 %v1524, %v1536
  %v1623 = vadd.f32 %v1525, %v1536
  %v1624 = vadd.f32 %v1526, %v1536
  %v1625 = vadd.f32 %v1527, %v1536
  %v1626 = vadd.f32 %v1528, %v1536
  %v1627 = vadd.f32 %v1529, %v1536
  %v1628 = vadd.f32 %v1530, %v1536
  %v1629 = vadd.f32 %v1531, %v1536
  %v1630 = vmax.f32 %v1538, 0.0
  %v1631 = vmax.f32 %v1539, 0.0
  %v1632 = vmax.f32 %v1540, 0.0
  %v1633 = vmax.f32 %v1541, 0.0
  %v1634 = vmax.f32 %v1542, 0.0
  %v1635 = vmax.f32 %v1543, 0.0
  %v1636 = vmax.f32 %v1544, 0.0
  %v1637 = vmax.f32 %v1545, 0.0
  %v1638 = vmax.f32 %v1546, 0.0
  %v1639 = vmax.f32 %v1547, 0.0
  %v1640 = vmax.f32 %v1548, 0.0
  %v1641 = vmax.f32 %v1549, 0.0
  %v1642 = vmax.f32 %v1550, 0.0
  %v1643 = vmax.f32 %v1551, 0.0
  %v1644 = vmax.f32 %v1552, 0.0
  %v1645 = vmax.f32 %v1553, 0.0
  %v1646 = vmax.f32 %v1554, 0.0
  %v1647 = vmax.f32 %v1555, 0.0
  %v1648 = vmax.f32 %v1556, 0.0
  %v1649 = vmax.f32 %v1557, 0.0
  %v1650 = vmax.f32 %v1558, 0.0
  %v1651 = vmax.f32 %v1559, 0.0
  %v1652 = vmax.f32 %v1560, 0.0
  %v1653 = vmax.f32 %v1561, 0.0
  %v1654 = vmax.f32 %v1562, 0.0
  %v1655 = vmax.f32 %v1563, 0.0
  %v1656 = vmax.f32 %v1564, 0.0
  %v1657 = vmax.f32 %v1565, 0.0
  %v1658 = vmax.f32 %v1566, 0.0
  %v1659 = vmax.f32 %v1567, 0.0
  %v1660 = vmax.f32 %v1568, 0.0
  %v1661 = vmax.f32 %v1569, 0.0
  %v1662 = vmax.f32 %v1570, 0.0
  %v1663 = vmax.f32 %v1571, 0.0
  %v1664 = vmax.f32 %v1572, 0.0
  %v1665 = vmax.f32 %v1573, 0.0
  %v1666 = vmax.f32 %v1574, 0.0
  %v1667 = vmax.f32 %v1575, 0.0
  %v1668 = vmax.f32 %v1576, 0.0
  %v1669 = vmax.f32 %v1577, 0.0
  %v1670 = vmax.f32 %v1578, 0.0
  %v1671 = vmax.f32 %v1579, 0.0
  %v1672 = vmax.f32 %v1580, 0.0
  %v1673 = vmax.f32 %v1581, 0.0
  %v1674 = vmax.f32 %v1582, 0.0
  %v1675 = vmax.f32 %v1583, 0.0
  %v1676 = vmax.f32 %v1584, 0.0
  %v1677 = vmax.f32 %v1585, 0.0
  %v1678 = vmax.f32 %v1586, 0.0
  %v1679 = vmax.f32 %v1587, 0.0
  %v1680 = vmax.f32 %v1588, 0.0
  %v1681 = vmax.f32 %v1589, 0.0
  %v1682 = vmax.f32 %v1590, 0.0
  %v1683 = vmax.f32 %v1591, 0.0
  %v1684 = vmax.f32 %v1592, 0.0
  %v1685 = vmax.f32 %v1593, 0.0
  %v1686 = vmax.f32 %v1594, 0.0
  %v1687 = vmax.f32 %v1595, 0.0
  %v1688 = vmax.f32 %v1596, 0.0
  %v1689 = vmax.f32 %v1597, 0.0
  %v1690 = vmax.f32 %v1598, 0.0
  %v1691 = vmax.f32 %v1599, 0.0
  %v1692 = vmax.f32 %v1600, 0.0
  %v1693 = vmax.f32 %v1601, 0.0
  %v1694 = vmax.f32 %v1602, 0.0
  %v1695 = vmax.f32 %v1603, 0.0
  %v1696 = vmax.f32 %v1604, 0.0
  %v1697 = vmax.f32 %v1605, 0.0
  %v1698 = vmax.f32 %v1606, 0.0
  %v1699 = vmax.f32 %v1607, 0.0
  %v1700 = vmax.f32 %v1608, 0.0
  %v1701 = vmax.f32 %v1609, 0.0
  %v1702 = vmax.f32 %v1610, 0.0
  %v1703 = vmax.f32 %v1611, 0.0
  %v1704 = vmax.f32 %v1612, 0.0
  %v1705 = vmax.f32 %v1613, 0.0
  %v1706 = vmax.f32 %v1614, 0.0
  %v1707 = vmax.f32 %v1615, 0.0
  %v1708 = vmax.f32 %v1616, 0.0
  %v1709 = vmax.f32 %v1617, 0.0
  %v1710 = vmax.f32 %v1618, 0.0
  %v1711 = vmax.f32 %v1619, 0.0
  %v1712 = vmax.f32 %v1620, 0.0
  %v1713 = vmax.f32 %v1621, 0.0
  %v1714 = vmax.f32 %v1622, 0.0
  %v1715 = vmax.f32 %v1623, 0.0
  %v1716 = vmax.f32 %v1624, 0.0
  %v1717 = vmax.f32 %v1625, 0.0
  %v1718 = vmax.f32 %v1626, 0.0
  %v1719 = vmax.f32 %v1627, 0.0
  %v1720 = vmax.f32 %v1628, 0.0
  %v1721 = vmax.f32 %v1629, 0.0
  %v1722 = vpack.c.bf16 %v1631, %v1630
  %v1723 = vpack.c.bf16 %v1633, %v1632
  %v1724 = vpack.c.bf16 %v1635, %v1634
  %v1725 = vpack.c.bf16 %v1637, %v1636
  %v1726 = vpack.c.bf16 %v1639, %v1638
  %v1727 = vpack.c.bf16 %v1641, %v1640
  %v1728 = vpack.c.bf16 %v1643, %v1642
  %v1729 = vpack.c.bf16 %v1645, %v1644
  %v1730 = vpack.c.bf16 %v1647, %v1646
  %v1731 = vpack.c.bf16 %v1649, %v1648
  %v1732 = vpack.c.bf16 %v1651, %v1650
  %v1733 = vpack.c.bf16 %v1653, %v1652
  %v1734 = vpack.c.bf16 %v1655, %v1654
  %v1735 = vpack.c.bf16 %v1657, %v1656
  %v1736 = vpack.c.bf16 %v1659, %v1658
  %v1737 = vpack.c.bf16 %v1661, %v1660
  %v1738 = vpack.c.bf16 %v1663, %v1662
  %v1739 = vpack.c.bf16 %v1665, %v1664
  %v1740 = vpack.c.bf16 %v1667, %v1666
  %v1741 = vpack.c.bf16 %v1669, %v1668
  %v1742 = vpack.c.bf16 %v1671, %v1670
  %v1743 = vpack.c.bf16 %v1673, %v1672
  %v1744 = vpack.c.bf16 %v1675, %v1674
  %v1745 = vpack.c.bf16 %v1677, %v1676
  %v1746 = vpack.c.bf16 %v1679, %v1678
  %v1747 = vpack.c.bf16 %v1681, %v1680
  %v1748 = vpack.c.bf16 %v1683, %v1682
  %v1749 = vpack.c.bf16 %v1685, %v1684
  %v1750 = vpack.c.bf16 %v1687, %v1686
  %v1751 = vpack.c.bf16 %v1689, %v1688
  %v1752 = vpack.c.bf16 %v1691, %v1690
  %v1753 = vpack.c.bf16 %v1693, %v1692
  %v1754 = vpack.c.bf16 %v1695, %v1694
  %v1755 = vpack.c.bf16 %v1697, %v1696
  %v1756 = vpack.c.bf16 %v1699, %v1698
  %v1757 = vpack.c.bf16 %v1701, %v1700
  %v1758 = vpack.c.bf16 %v1703, %v1702
  %v1759 = vpack.c.bf16 %v1705, %v1704
  %v1760 = vpack.c.bf16 %v1707, %v1706
  %v1761 = vpack.c.bf16 %v1709, %v1708
  %v1762 = vpack.c.bf16 %v1711, %v1710
  %v1763 = vpack.c.bf16 %v1713, %v1712
  %v1764 = vpack.c.bf16 %v1715, %v1714
  %v1765 = vpack.c.bf16 %v1717, %v1716
  %v1766 = vpack.c.bf16 %v1719, %v1718
  %v1767 = vpack.c.bf16 %v1721, %v1720
  %v1814 = vunpack.c.l.b16 %v1722
  %v1815 = vunpack.c.h.b16 %v1722
  %v1816 = vunpack.c.l.b16 %v1723
  %v1817 = vunpack.c.h.b16 %v1723
  %v1818 = vunpack.c.l.b16 %v1724
  %v1819 = vunpack.c.h.b16 %v1724
  %v1820 = vunpack.c.l.b16 %v1725
  %v1821 = vunpack.c.h.b16 %v1725
  %v1822 = vunpack.c.l.b16 %v1726
  %v1823 = vunpack.c.h.b16 %v1726
  %v1824 = vunpack.c.l.b16 %v1727
  %v1825 = vunpack.c.h.b16 %v1727
  %v1826 = vunpack.c.l.b16 %v1728
  %v1827 = vunpack.c.h.b16 %v1728
  %v1828 = vunpack.c.l.b16 %v1729
  %v1829 = vunpack.c.h.b16 %v1729
  %v1830 = vunpack.c.l.b16 %v1730
  %v1831 = vunpack.c.h.b16 %v1730
  %v1832 = vunpack.c.l.b16 %v1731
  %v1833 = vunpack.c.h.b16 %v1731
  %v1834 = vunpack.c.l.b16 %v1732
  %v1835 = vunpack.c.h.b16 %v1732
  %v1836 = vunpack.c.l.b16 %v1733
  %v1837 = vunpack.c.h.b16 %v1733
  %v1838 = vunpack.c.l.b16 %v1734
  %v1839 = vunpack.c.h.b16 %v1734
  %v1840 = vunpack.c.l.b16 %v1735
  %v1841 = vunpack.c.h.b16 %v1735
  %v1842 = vunpack.c.l.b16 %v1736
  %v1843 = vunpack.c.h.b16 %v1736
  %v1844 = vunpack.c.l.b16 %v1737
  %v1845 = vunpack.c.h.b16 %v1737
  %v1846 = vunpack.c.l.b16 %v1738
  %v1847 = vunpack.c.h.b16 %v1738
  %v1848 = vunpack.c.l.b16 %v1739
  %v1849 = vunpack.c.h.b16 %v1739
  %v1850 = vunpack.c.l.b16 %v1740
  %v1851 = vunpack.c.h.b16 %v1740
  %v1852 = vunpack.c.l.b16 %v1741
  %v1853 = vunpack.c.h.b16 %v1741
  %v1854 = vunpack.c.l.b16 %v1742
  %v1855 = vunpack.c.h.b16 %v1742
  %v1856 = vunpack.c.l.b16 %v1743
  %v1857 = vunpack.c.h.b16 %v1743
  %v1858 = vunpack.c.l.b16 %v1744
  %v1859 = vunpack.c.h.b16 %v1744
  %v1860 = vunpack.c.l.b16 %v1745
  %v1861 = vunpack.c.h.b16 %v1745
  %v1862 = vunpack.c.l.b16 %v1746
  %v1863 = vunpack.c.h.b16 %v1746
  %v1864 = vunpack.c.l.b16 %v1747
  %v1865 = vunpack.c.h.b16 %v1747
  %v1866 = vunpack.c.l.b16 %v1748
  %v1867 = vunpack.c.h.b16 %v1748
  %v1868 = vunpack.c.l.b16 %v1749
  %v1869 = vunpack.c.h.b16 %v1749
  %v1870 = vunpack.c.l.b16 %v1750
  %v1871 = vunpack.c.h.b16 %v1750
  %v1872 = vunpack.c.l.b16 %v1751
  %v1873 = vunpack.c.h.b16 %v1751
  %v1874 = vunpack.c.l.b16 %v1752
  %v1875 = vunpack.c.h.b16 %v1752
  %v1876 = vunpack.c.l.b16 %v1753
  %v1877 = vunpack.c.h.b16 %v1753
  %v1878 = vunpack.c.l.b16 %v1754
  %v1879 = vunpack.c.h.b16 %v1754
  %v1880 = vunpack.c.l.b16 %v1755
  %v1881 = vunpack.c.h.b16 %v1755
  %v1882 = vunpack.c.l.b16 %v1756
  %v1883 = vunpack.c.h.b16 %v1756
  %v1884 = vunpack.c.l.b16 %v1757
  %v1885 = vunpack.c.h.b16 %v1757
  %v1886 = vunpack.c.l.b16 %v1758
  %v1887 = vunpack.c.h.b16 %v1758
  %v1888 = vunpack.c.l.b16 %v1759
  %v1889 = vunpack.c.h.b16 %v1759
  %v1890 = vunpack.c.l.b16 %v1760
  %v1891 = vunpack.c.h.b16 %v1760
  %v1892 = vunpack.c.l.b16 %v1761
  %v1893 = vunpack.c.h.b16 %v1761
  %v1894 = vunpack.c.l.b16 %v1762
  %v1895 = vunpack.c.h.b16 %v1762
  %v1896 = vunpack.c.l.b16 %v1763
  %v1897 = vunpack.c.h.b16 %v1763
  %v1898 = vunpack.c.l.b16 %v1764
  %v1899 = vunpack.c.h.b16 %v1764
  %v1900 = vunpack.c.l.b16 %v1765
  %v1901 = vunpack.c.h.b16 %v1765
  %v1902 = vunpack.c.l.b16 %v1766
  %v1903 = vunpack.c.h.b16 %v1766
  %v1904 = vunpack.c.l.b16 %v1767
  %v1905 = vunpack.c.h.b16 %v1767
  %v1906 = vpack.c.b16 %v1814, %v1814
  %v1907 = vpack.c.b16 %v1815, %v1815
  %v1908 = vpack.c.b16 %v1816, %v1816
  %v1909 = vpack.c.b16 %v1817, %v1817
  %v1910 = vpack.c.b16 %v1818, %v1818
  %v1911 = vpack.c.b16 %v1819, %v1819
  %v1912 = vpack.c.b16 %v1820, %v1820
  %v1913 = vpack.c.b16 %v1821, %v1821
  %v1914 = vpack.c.b16 %v1822, %v1822
  %v1915 = vpack.c.b16 %v1823, %v1823
  %v1916 = vpack.c.b16 %v1824, %v1824
  %v1917 = vpack.c.b16 %v1825, %v1825
  %v1918 = vpack.c.b16 %v1826, %v1826
  %v1919 = vpack.c.b16 %v1827, %v1827
  %v1920 = vpack.c.b16 %v1828, %v1828
  %v1921 = vpack.c.b16 %v1829, %v1829
  %v1922 = vpack.c.b16 %v1830, %v1830
  %v1923 = vpack.c.b16 %v1831, %v1831
  %v1924 = vpack.c.b16 %v1832, %v1832
  %v1925 = vpack.c.b16 %v1833, %v1833
  %v1926 = vpack.c.b16 %v1834, %v1834
  %v1927 = vpack.c.b16 %v1835, %v1835
  %v1928 = vpack.c.b16 %v1836, %v1836
  %v1929 = vpack.c.b16 %v1837, %v1837
  %v1930 = vpack.c.b16 %v1838, %v1838
  %v1931 = vpack.c.b16 %v1839, %v1839
  %v1932 = vpack.c.b16 %v1840, %v1840
  %v1933 = vpack.c.b16 %v1841, %v1841
  %v1934 = vpack.c.b16 %v1842, %v1842
  %v1935 = vpack.c.b16 %v1843, %v1843
  %v1936 = vpack.c.b16 %v1844, %v1844
  %v1937 = vpack.c.b16 %v1845, %v1845
  %v1938 = vpack.c.b16 %v1846, %v1846
  %v1939 = vpack.c.b16 %v1847, %v1847
  %v1940 = vpack.c.b16 %v1848, %v1848
  %v1941 = vpack.c.b16 %v1849, %v1849
  %v1942 = vpack.c.b16 %v1850, %v1850
  %v1943 = vpack.c.b16 %v1851, %v1851
  %v1944 = vpack.c.b16 %v1852, %v1852
  %v1945 = vpack.c.b16 %v1853, %v1853
  %v1946 = vpack.c.b16 %v1854, %v1854
  %v1947 = vpack.c.b16 %v1855, %v1855
  %v1948 = vpack.c.b16 %v1856, %v1856
  %v1949 = vpack.c.b16 %v1857, %v1857
  %v1950 = vpack.c.b16 %v1858, %v1858
  %v1951 = vpack.c.b16 %v1859, %v1859
  %v1952 = vpack.c.b16 %v1860, %v1860
  %v1953 = vpack.c.b16 %v1861, %v1861
  %v1954 = vpack.c.b16 %v1862, %v1862
  %v1955 = vpack.c.b16 %v1863, %v1863
  %v1956 = vpack.c.b16 %v1864, %v1864
  %v1957 = vpack.c.b16 %v1865, %v1865
  %v1958 = vpack.c.b16 %v1866, %v1866
  %v1959 = vpack.c.b16 %v1867, %v1867
  %v1960 = vpack.c.b16 %v1868, %v1868
  %v1961 = vpack.c.b16 %v1869, %v1869
  %v1962 = vpack.c.b16 %v1870, %v1870
  %v1963 = vpack.c.b16 %v1871, %v1871
  %v1964 = vpack.c.b16 %v1872, %v1872
  %v1965 = vpack.c.b16 %v1873, %v1873
  %v1966 = vpack.c.b16 %v1874, %v1874
  %v1967 = vpack.c.b16 %v1875, %v1875
  %v1968 = vpack.c.b16 %v1876, %v1876
  %v1969 = vpack.c.b16 %v1877, %v1877
  %v1970 = vpack.c.b16 %v1878, %v1878
  %v1971 = vpack.c.b16 %v1879, %v1879
  %v1972 = vpack.c.b16 %v1880, %v1880
  %v1973 = vpack.c.b16 %v1881, %v1881
  %v1974 = vpack.c.b16 %v1882, %v1882
  %v1975 = vpack.c.b16 %v1883, %v1883
  %v1976 = vpack.c.b16 %v1884, %v1884
  %v1977 = vpack.c.b16 %v1885, %v1885
  %v1978 = vpack.c.b16 %v1886, %v1886
  %v1979 = vpack.c.b16 %v1887, %v1887
  %v1980 = vpack.c.b16 %v1888, %v1888
  %v1981 = vpack.c.b16 %v1889, %v1889
  %v1982 = vpack.c.b16 %v1890, %v1890
  %v1983 = vpack.c.b16 %v1891, %v1891
  %v1984 = vpack.c.b16 %v1892, %v1892
  %v1985 = vpack.c.b16 %v1893, %v1893
  %v1986 = vpack.c.b16 %v1894, %v1894
  %v1987 = vpack.c.b16 %v1895, %v1895
  %v1988 = vpack.c.b16 %v1896, %v1896
  %v1989 = vpack.c.b16 %v1897, %v1897
  %v1990 = vpack.c.b16 %v1898, %v1898
  %v1991 = vpack.c.b16 %v1899, %v1899
  %v1992 = vpack.c.b16 %v1900, %v1900
  %v1993 = vpack.c.b16 %v1901, %v1901
  %v1994 = vpack.c.b16 %v1902, %v1902
  %v1995 = vpack.c.b16 %v1903, %v1903
  %v1996 = vpack.c.b16 %v1904, %v1904
  %v1997 = vpack.c.b16 %v1905, %v1905
  %2090 = vst [vmem:[%s5] sm:$0xf] %v1906
  %2091 = vst [vmem:[%s5 + $0x4] sm:$0xf] %v1907
  %2092 = vst [vmem:[%s5 + $0x8] sm:$0xf] %v1908
  %2093 = vst [vmem:[%s5 + $0xc] sm:$0xf] %v1909
  %2094 = vst [vmem:[%s5 + $0x10] sm:$0xf] %v1910
  %2095 = vst [vmem:[%s5 + $0x14] sm:$0xf] %v1911
  %2096 = vst [vmem:[%s5 + $0x18] sm:$0xf] %v1912
  %2097 = vst [vmem:[%s5 + $0x1c] sm:$0xf] %v1913
  %2098 = vst [vmem:[%s5 + $0x20] sm:$0xf] %v1914
  %2099 = vst [vmem:[%s5 + $0x24] sm:$0xf] %v1915
  %2100 = vst [vmem:[%s5 + $0x28] sm:$0xf] %v1916
  %2101 = vst [vmem:[%s5 + $0x2c] sm:$0xf] %v1917
  %2102 = vst [vmem:[%s5 + $0x30] sm:$0xf] %v1918
  %2103 = vst [vmem:[%s5 + $0x34] sm:$0xf] %v1919
  %2104 = vst [vmem:[%s5 + $0x38] sm:$0xf] %v1920
  %2105 = vst [vmem:[%s5 + $0x3c] sm:$0xf] %v1921
  %2106 = vst [vmem:[%s5 + $0x40] sm:$0xf] %v1922
  %2107 = vst [vmem:[%s5 + $0x44] sm:$0xf] %v1923
  %2108 = vst [vmem:[%s5 + $0x48] sm:$0xf] %v1924
  %2109 = vst [vmem:[%s5 + $0x4c] sm:$0xf] %v1925
  %2110 = vst [vmem:[%s5 + $0x50] sm:$0xf] %v1926
  %2111 = vst [vmem:[%s5 + $0x54] sm:$0xf] %v1927
  %2112 = vst [vmem:[%s5 + $0x58] sm:$0xf] %v1928
  %2113 = vst [vmem:[%s5 + $0x5c] sm:$0xf] %v1929
  %2114 = vst [vmem:[%s5 + $0x60] sm:$0xf] %v1930
  %2115 = vst [vmem:[%s5 + $0x64] sm:$0xf] %v1931
  %2116 = vst [vmem:[%s5 + $0x68] sm:$0xf] %v1932
  %2117 = vst [vmem:[%s5 + $0x6c] sm:$0xf] %v1933
  %2118 = vst [vmem:[%s5 + $0x70] sm:$0xf] %v1934
  %2119 = vst [vmem:[%s5 + $0x74] sm:$0xf] %v1935
  %2120 = vst [vmem:[%s5 + $0x78] sm:$0xf] %v1936
  %2121 = vst [vmem:[%s5 + $0x7c] sm:$0xf] %v1937
  %2122 = vst [vmem:[%s5 + $0x80] sm:$0xf] %v1938
  %2123 = vst [vmem:[%s5 + $0x84] sm:$0xf] %v1939
  %2124 = vst [vmem:[%s5 + $0x88] sm:$0xf] %v1940
  %2125 = vst [vmem:[%s5 + $0x8c] sm:$0xf] %v1941
  %2126 = vst [vmem:[%s5 + $0x90] sm:$0xf] %v1942
  %2127 = vst [vmem:[%s5 + $0x94] sm:$0xf] %v1943
  %2128 = vst [vmem:[%s5 + $0x98] sm:$0xf] %v1944
  %2129 = vst [vmem:[%s5 + $0x9c] sm:$0xf] %v1945
  %2130 = vst [vmem:[%s5 + $0xa0] sm:$0xf] %v1946
  %2131 = vst [vmem:[%s5 + $0xa4] sm:$0xf] %v1947
  %2132 = vst [vmem:[%s5 + $0xa8] sm:$0xf] %v1948
  %2133 = vst [vmem:[%s5 + $0xac] sm:$0xf] %v1949
  %2134 = vst [vmem:[%s5 + $0xb0] sm:$0xf] %v1950
  %2135 = vst [vmem:[%s5 + $0xb4] sm:$0xf] %v1951
  %2136 = vst [vmem:[%s5 + $0xb8] sm:$0xf] %v1952
  %2137 = vst [vmem:[%s5 + $0xbc] sm:$0xf] %v1953
  %2138 = vst [vmem:[%s5 + $0xc0] sm:$0xf] %v1954
  %2139 = vst [vmem:[%s5 + $0xc4] sm:$0xf] %v1955
  %2140 = vst [vmem:[%s5 + $0xc8] sm:$0xf] %v1956
  %2141 = vst [vmem:[%s5 + $0xcc] sm:$0xf] %v1957
  %2142 = vst [vmem:[%s5 + $0xd0] sm:$0xf] %v1958
  %2143 = vst [vmem:[%s5 + $0xd4] sm:$0xf] %v1959
  %2144 = vst [vmem:[%s5 + $0xd8] sm:$0xf] %v1960
  %2145 = vst [vmem:[%s5 + $0xdc] sm:$0xf] %v1961
  %2146 = vst [vmem:[%s5 + $0xe0] sm:$0xf] %v1962
  %2147 = vst [vmem:[%s5 + $0xe4] sm:$0xf] %v1963
  %2148 = vst [vmem:[%s5 + $0xe8] sm:$0xf] %v1964
  %2149 = vst [vmem:[%s5 + $0xec] sm:$0xf] %v1965
  %2150 = vst [vmem:[%s5 + $0xf0] sm:$0xf] %v1966
  %2151 = vst [vmem:[%s5 + $0xf4] sm:$0xf] %v1967
  %2152 = vst [vmem:[%s5 + $0xf8] sm:$0xf] %v1968
  %2153 = vst [vmem:[%s5 + $0xfc] sm:$0xf] %v1969
  %2154 = vst [vmem:[%s5 + $0x100] sm:$0xf] %v1970
  %2155 = vst [vmem:[%s5 + $0x104] sm:$0xf] %v1971
  %2156 = vst [vmem:[%s5 + $0x108] sm:$0xf] %v1972
  %2157 = vst [vmem:[%s5 + $0x10c] sm:$0xf] %v1973
  %2158 = vst [vmem:[%s5 + $0x110] sm:$0xf] %v1974
  %2159 = vst [vmem:[%s5 + $0x114] sm:$0xf] %v1975
  %2160 = vst [vmem:[%s5 + $0x118] sm:$0xf] %v1976
  %2161 = vst [vmem:[%s5 + $0x11c] sm:$0xf] %v1977
  %2162 = vst [vmem:[%s5 + $0x120] sm:$0xf] %v1978
  %2163 = vst [vmem:[%s5 + $0x124] sm:$0xf] %v1979
  %2164 = vst [vmem:[%s5 + $0x128] sm:$0xf] %v1980
  %2165 = vst [vmem:[%s5 + $0x12c] sm:$0xf] %v1981
  %2166 = vst [vmem:[%s5 + $0x130] sm:$0xf] %v1982
  %2167 = vst [vmem:[%s5 + $0x134] sm:$0xf] %v1983
  %2168 = vst [vmem:[%s5 + $0x138] sm:$0xf] %v1984
  %2169 = vst [vmem:[%s5 + $0x13c] sm:$0xf] %v1985
  %2170 = vst [vmem:[%s5 + $0x140] sm:$0xf] %v1986
  %2171 = vst [vmem:[%s5 + $0x144] sm:$0xf] %v1987
  %2172 = vst [vmem:[%s5 + $0x148] sm:$0xf] %v1988
  %2173 = vst [vmem:[%s5 + $0x14c] sm:$0xf] %v1989
  %2174 = vst [vmem:[%s5 + $0x150] sm:$0xf] %v1990
  %2175 = vst [vmem:[%s5 + $0x154] sm:$0xf] %v1991
  %2176 = vst [vmem:[%s5 + $0x158] sm:$0xf] %v1992
  %2177 = vst [vmem:[%s5 + $0x15c] sm:$0xf] %v1993
  %2178 = vst [vmem:[%s5 + $0x160] sm:$0xf] %v1994
  %2179 = vst [vmem:[%s5 + $0x164] sm:$0xf] %v1995
  %2180 = vst [vmem:[%s5 + $0x168] sm:$0xf] %v1996
  %2181 = vst [vmem:[%s5 + $0x16c] sm:$0xf] %v1997
  // Predicated region
  $region22: #{network_forward.4} parent=0 // pred_check
    _
  $region23: #{network_forward.4} parent=0 // pred_check_branch
    %2183 = sbr.rel (0) target = $region25
  $region24: #{network_forward.4} parent=0 // pred_region
    _
  $region25: #{network_forward.4} parent=0 // pred_fallthru
    _
  // Predicated region
  $region26: #{network_forward.4} parent=0 // pred_check
    _
  $region27: #{network_forward.4} parent=0 // pred_check_branch
    %2185 = sbr.rel (0) target = $region29
  $region28: #{network_forward.4} parent=0 // pred_region
    _
  $region29: #{network_forward.4} parent=0 // pred_fallthru
    _

// kernel: sub.1
$region0: #{sub.1}
  #allocation0 [shape = 's32[1]{0}', space=sflag, size = 0x4, scoped, tag = 'scoped memory for sub.1']
  %s0 = inlined_call_operand.vmem [shape: f32[24,4], index: 0, kind: input, shape index: {}]
  %s1 = inlined_call_operand.vmem [shape: f32[24,4], index: 1, kind: input, shape index: {}]
  %s2 = inlined_call_operand.vmem [shape: bf16[24,4], index: 2, kind: output, shape index: {}]
  %v3 = vld [vmem:[%s0] sm:$0xf]
  %v4 = vld [vmem:[%s1] sm:$0xf]
  %5 = xla_tuple %v3, %v4
  %6 = xla_tuple %5
  %v7 = vsub.f32 %v3, %v4
  %8 = xla_tuple %v7
  %v9 = vpack.c.bf16 0.0, %v7
  %10 = vst [vmem:[%s2] sm:$0x3] %v9

// kernel: network_forward.5
$region0: #{network_forward.5}
  #allocation0 [shape = 'u32[]', space=smem, size = 0x4, offset = 0x4, fixed_abs, tag = 'smem constant byte address 0x4 - core index']
  #allocation1 [shape = 'u32[144,128]{1,0:T(1,128)}', space=vmem, size = 0x12000, scoped, tag = 'internal scratch']
  %s0 = inlined_call_operand.vmem [shape: bf16[72,128], index: 0, kind: input, shape index: {}]
  %s1 = inlined_call_operand.vmem [shape: bf16[128,128], index: 1, kind: input, shape index: {}]
  %s2 = inlined_call_operand.vmem [shape: f32[1,128], index: 2, kind: input, shape index: {}]
  %s3 = inlined_call_operand.vmem [shape: bf16[128,128], index: 3, kind: input, shape index: {}]
  %s4 = inlined_call_operand.vmem [shape: f32[1,128], index: 4, kind: input, shape index: {}]
  %s5 = inlined_call_operand.vmem [shape: f32[1,128], index: 5, kind: input, shape index: {}]
  %s6 = inlined_call_operand.vmem [shape: f32[1,128], index: 6, kind: input, shape index: {}]
  %s7 = inlined_call_operand.vmem [shape: bf16[4,128,128], index: 7, kind: input, shape index: {}]
  %s8 = inlined_call_operand.vmem [shape: bf16[128,128], index: 8, kind: input, shape index: {}]
  %s9 = inlined_call_operand.vmem [shape: f32[1,128], index: 9, kind: input, shape index: {}]
  %s10 = inlined_call_operand.hbm [shape: f32[2,128], index: 10, kind: output, shape index: {}]
  %s11 = sld [smem:[#allocation0]]
  $region50: #{network_forward.5} parent=0
    _
  %s13 = ssub.s32 1, %s11
  %s14 = scalar_select 0, %s13, %s11
  $region1: #{network_forward.5} parent=0
    #allocation2 [shape = 'u8[1024]{0}', space=vmem, size = 0x400, scoped, tag = 'output window, operand 0, single buffered']
    #allocation3 [shape = 's32[1]{0}', space=sflag, size = 0x4, scoped, tag = 'scoped memory for network_forward.5']
    %15 = vsyncpa [#allocation3], 0
    // Predicated region
    $region2: #{network_forward.5} parent=1 // pred_check
      _
    $region3: #{network_forward.5} parent=1 // pred_check_branch
      %17 = sbr.rel (0) target = $region5
    $region4: #{network_forward.5} parent=1 // pred_region
      _
    $region5: #{network_forward.5} parent=1 // pred_fallthru
      _
    // Predicated region
    $region6: #{network_forward.5} parent=1 // pred_check
      _
    $region7: #{network_forward.5} parent=1 // pred_check_branch
      %19 = sbr.rel (0) target = $region9
    $region8: #{network_forward.5} parent=1 // pred_region
      _
    $region9: #{network_forward.5} parent=1 // pred_fallthru
      _
    // Predicated region
    $region10: #{network_forward.5} parent=1 // pred_check
      _
    $region11: #{network_forward.5} parent=1 // pred_check_branch
      %21 = sbr.rel (0) target = $region13
    $region12: #{network_forward.5} parent=1 // pred_region
      _
    $region13: #{network_forward.5} parent=1 // pred_fallthru
      _
    // Predicated region
    $region14: #{network_forward.5} parent=1 // pred_check
      _
    $region15: #{network_forward.5} parent=1 // pred_check_branch
      %23 = sbr.rel (0) target = $region17
    $region16: #{network_forward.5} parent=1 // pred_region
      _
    $region17: #{network_forward.5} parent=1 // pred_fallthru
      _
    // Predicated region
    $region18: #{network_forward.5} parent=1 // pred_check
      _
    $region19: #{network_forward.5} parent=1 // pred_check_branch
      %25 = sbr.rel (0) target = $region21
    $region20: #{network_forward.5} parent=1 // pred_region
      _
    $region21: #{network_forward.5} parent=1 // pred_fallthru
      _
    // Predicated region
    $region22: #{network_forward.5} parent=1 // pred_check
      _
    $region23: #{network_forward.5} parent=1 // pred_check_branch
      %27 = sbr.rel (0) target = $region25
    $region24: #{network_forward.5} parent=1 // pred_region
      _
    $region25: #{network_forward.5} parent=1 // pred_fallthru
      _
    // Predicated region
    $region26: #{network_forward.5} parent=1 // pred_check
      _
    $region27: #{network_forward.5} parent=1 // pred_check_branch
      %29 = sbr.rel (0) target = $region29
    $region28: #{network_forward.5} parent=1 // pred_region
      _
    $region29: #{network_forward.5} parent=1 // pred_fallthru
      _
    // Predicated region
    $region30: #{network_forward.5} parent=1 // pred_check
      _
    $region31: #{network_forward.5} parent=1 // pred_check_branch
      %31 = sbr.rel (0) target = $region33
    $region32: #{network_forward.5} parent=1 // pred_region
      _
    $region33: #{network_forward.5} parent=1 // pred_fallthru
      _
    // Predicated region
    $region34: #{network_forward.5} parent=1 // pred_check
      _
    $region35: #{network_forward.5} parent=1 // pred_check_branch
      %33 = sbr.rel (0) target = $region37
    $region36: #{network_forward.5} parent=1 // pred_region
      _
    $region37: #{network_forward.5} parent=1 // pred_fallthru
      _
    // Predicated region
    $region38: #{network_forward.5} parent=1 // pred_check
      _
    $region39: #{network_forward.5} parent=1 // pred_check_branch
      %35 = sbr.rel (0) target = $region41
    $region40: #{network_forward.5} parent=1 // pred_region
      _
    $region41: #{network_forward.5} parent=1 // pred_fallthru
      _
    %v37 = vld [vmem:[%s0] sm:$0xf]
    %v38 = vld [vmem:[%s0 + $0x4] sm:$0xf]
    %v39 = vld [vmem:[%s0 + $0x8] sm:$0xf]
    %v40 = vld [vmem:[%s0 + $0xc] sm:$0xf]
    %v41 = vld [vmem:[%s0 + $0x10] sm:$0xf]
    %v42 = vld [vmem:[%s0 + $0x14] sm:$0xf]
    %v43 = vld [vmem:[%s0 + $0x18] sm:$0xf]
    %v44 = vld [vmem:[%s0 + $0x1c] sm:$0xf]
    %v45 = vld [vmem:[%s0 + $0x20] sm:$0xf]
    %v46 = vld [vmem:[%s1] sm:$0xf]
    %v47 = vld [vmem:[%s1 + $0x4] sm:$0xf]
    %v48 = vld [vmem:[%s1 + $0x8] sm:$0xf]
    %v49 = vld [vmem:[%s1 + $0xc] sm:$0xf]
    %v50 = vld [vmem:[%s1 + $0x10] sm:$0xf]
    %v51 = vld [vmem:[%s1 + $0x14] sm:$0xf]
    %v52 = vld [vmem:[%s1 + $0x18] sm:$0xf]
    %v53 = vld [vmem:[%s1 + $0x1c] sm:$0xf]
    %v54 = vld [vmem:[%s1 + $0x20] sm:$0xf]
    %v55 = vld [vmem:[%s1 + $0x24] sm:$0xf]
    %v56 = vld [vmem:[%s1 + $0x28] sm:$0xf]
    %v57 = vld [vmem:[%s1 + $0x2c] sm:$0xf]
    %v58 = vld [vmem:[%s1 + $0x30] sm:$0xf]
    %v59 = vld [vmem:[%s1 + $0x34] sm:$0xf]
    %v60 = vld [vmem:[%s1 + $0x38] sm:$0xf]
    %v61 = vld [vmem:[%s1 + $0x3c] sm:$0xf]
    %v71 = vunpack.c.l.b16 %v37
    %v72 = vunpack.c.l.b16 %v38
    %v73 = vunpack.c.l.b16 %v39
    %v74 = vunpack.c.l.b16 %v40
    %v75 = vunpack.c.l.b16 %v41
    %v76 = vunpack.c.l.b16 %v42
    %v77 = vunpack.c.l.b16 %v43
    %v78 = vunpack.c.l.b16 %v44
    %v79 = vunpack.c.l.b16 %v45
    %v80 = vpack.c.b16 %v72, %v71
    %v81 = vpack.c.b16 %v74, %v73
    %v82 = vpack.c.b16 %v76, %v75
    %v83 = vpack.c.b16 %v78, %v77
    %v84 = vpack.c.b16 %v79, %v79
    %v106 = vunpack.c.l.b16 %v46
    %v107 = vunpack.c.l.b16 %v47
    %v108 = vunpack.c.l.b16 %v48
    %v109 = vunpack.c.l.b16 %v49
    %v110 = vunpack.c.l.b16 %v50
    %v111 = vunpack.c.l.b16 %v51
    %v112 = vunpack.c.l.b16 %v52
    %v113 = vunpack.c.l.b16 %v53
    %v114 = vunpack.c.l.b16 %v54
    %v115 = vunpack.c.l.b16 %v55
    %v116 = vunpack.c.l.b16 %v56
    %v117 = vunpack.c.l.b16 %v57
    %v118 = vunpack.c.l.b16 %v58
    %v119 = vunpack.c.l.b16 %v59
    %v120 = vunpack.c.l.b16 %v60
    %v121 = vunpack.c.l.b16 %v61
    %v122 = vpack.c.b16 %v107, %v106
    %v123 = vpack.c.b16 %v109, %v108
    %v124 = vpack.c.b16 %v111, %v110
    %v125 = vpack.c.b16 %v113, %v112
    %v126 = vpack.c.b16 %v115, %v114
    %v127 = vpack.c.b16 %v117, %v116
    %v128 = vpack.c.b16 %v119, %v118
    %v129 = vpack.c.b16 %v121, %v120
    %138 = vmatprep.subr.bf16.mxu0 0
    %139 = vmatpush1.bf16.msra.mxu0 %v122
    %140 = vmatprep.subr.bf16.mxu0 0
    %141 = vmatpush1.bf16.msra.mxu0 %v123
    %142 = vmatprep.subr.bf16.mxu0 0
    %143 = vmatpush1.bf16.msra.mxu0 %v124
    %144 = vmatprep.subr.bf16.mxu0 0
    %145 = vmatpush1.bf16.msra.mxu0 %v125
    %146 = vmatprep.subr.bf16.mxu0 0
    %147 = vmatpush1.bf16.msra.mxu0 %v126
    %148 = vmatprep.subr.bf16.mxu0 0
    %149 = vmatpush1.bf16.msra.mxu0 %v127
    %150 = vmatprep.subr.bf16.mxu0 0
    %151 = vmatpush1.bf16.msra.mxu0 %v128
    %152 = vmatprep.subr.bf16.mxu0 0
    %153 = vmatpush1.bf16.msra.mxu0 %v129
    %154 = vmatprep.subr.bf16.mxu0 0
    %155 = vmatpush1.bf16.msra.mxu0 0
    %156 = vmatprep.subr.bf16.mxu0 0
    %157 = vmatpush1.bf16.msra.mxu0 0
    %158 = vmatprep.subr.bf16.mxu0 0
    %159 = vmatpush1.bf16.msra.mxu0 0
    %160 = vmatprep.subr.bf16.mxu0 0
    %161 = vmatpush1.bf16.msra.mxu0 0
    %162 = vmatprep.subr.bf16.mxu0 0
    %163 = vmatpush1.bf16.msra.mxu0 0
    %164 = vmatprep.subr.bf16.mxu0 0
    %165 = vmatpush1.bf16.msra.mxu0 0
    %166 = vmatprep.subr.bf16.mxu0 0
    %167 = vmatpush1.bf16.msra.mxu0 0
    %168 = vmatprep.subr.bf16.mxu0 0
    %169 = vmatpush1.bf16.msra.mxu0 0
    %170 = vmatprep.mubr.bf16.mxu0 0
    %171 = vmatmul.mubr.bf16.gmra.mrb[0].mxu0 %v80
    %v172 = vpop.f32.mrb[0].mxu0
    %v173 = vadd.f32 0.0, %v172
    %v174 = vpop.f32.mrb[0].mxu0
    %v175 = vpop.f32.mrb[0].mxu0
    %v176 = vadd.f32 0.0, %v175
    %v177 = vpop.f32.mrb[0].mxu0
    %178 = vmatprep.mubr.bf16.mxu0 0
    %179 = vmatmul.mubr.bf16.gmra.mrb[0].mxu0 %v81
    %v180 = vpop.f32.mrb[0].mxu0
    %v181 = vadd.f32 0.0, %v180
    %v182 = vpop.f32.mrb[0].mxu0
    %v183 = vpop.f32.mrb[0].mxu0
    %v184 = vadd.f32 0.0, %v183
    %v185 = vpop.f32.mrb[0].mxu0
    %186 = vmatprep.mubr.bf16.mxu0 0
    %187 = vmatmul.mubr.bf16.gmra.mrb[0].mxu0 %v82
    %v188 = vpop.f32.mrb[0].mxu0
    %v189 = vadd.f32 0.0, %v188
    %v190 = vpop.f32.mrb[0].mxu0
    %v191 = vpop.f32.mrb[0].mxu0
    %v192 = vadd.f32 0.0, %v191
    %v193 = vpop.f32.mrb[0].mxu0
    %194 = vmatprep.mubr.bf16.mxu0 0
    %195 = vmatmul.mubr.bf16.gmra.mrb[0].mxu0 %v83
    %v196 = vpop.f32.mrb[0].mxu0
    %v197 = vadd.f32 0.0, %v196
    %v198 = vpop.f32.mrb[0].mxu0
    %v199 = vpop.f32.mrb[0].mxu0
    %v200 = vadd.f32 0.0, %v199
    %v201 = vpop.f32.mrb[0].mxu0
    %202 = vmatprep.mubr.bf16.mxu0 0
    %203 = vmatmul.mubr.bf16.gmra.mrb[0].mxu0 %v84
    %v204 = vpop.f32.mrb[0].mxu0
    %v205 = vadd.f32 0.0, %v204
    %v206 = vpop.f32.mrb[0].mxu0
    %v207 = vpop.f32.mrb[0].mxu0
    %v208 = vpop.f32.mrb[0].mxu0
    %209 = vdwg.mxu0
    %v210 = vmax.f32 %v173, %v176
    %v211 = vmax.f32 %v210, %v181
    %v212 = vmax.f32 %v211, %v184
    %v213 = vmax.f32 %v212, %v189
    %v214 = vmax.f32 %v213, %v192
    %v215 = vmax.f32 %v214, %v197
    %v216 = vmax.f32 %v215, %v200
    %v217 = vmax.f32 %v216, %v205
    %v218 = vld [vmem:[%s2] sm:$0x1]
    %v220 = vlaneseq
    %v221 = vshrl.u32 %v220, 7
    %v222 = vsub.s32 0, %v221
    %v223 = vrot.slane %v218, %v222
    %v225 = vadd.f32 %v217, %v223
    %v226 = vmax.f32 %v225, 0.0
    %v227 = vld [vmem:[%s4] sm:$0x1]
    %v228 = vpack.c.bf16 %v226, %v226
    %v229 = vld [vmem:[%s3] sm:$0xf]
    %v230 = vld [vmem:[%s3 + $0x4] sm:$0xf]
    %v231 = vld [vmem:[%s3 + $0x8] sm:$0xf]
    %v232 = vld [vmem:[%s3 + $0xc] sm:$0xf]
    %v233 = vld [vmem:[%s3 + $0x10] sm:$0xf]
    %v234 = vld [vmem:[%s3 + $0x14] sm:$0xf]
    %v235 = vld [vmem:[%s3 + $0x18] sm:$0xf]
    %v236 = vld [vmem:[%s3 + $0x1c] sm:$0xf]
    %v237 = vld [vmem:[%s3 + $0x20] sm:$0xf]
    %v238 = vld [vmem:[%s3 + $0x24] sm:$0xf]
    %v239 = vld [vmem:[%s3 + $0x28] sm:$0xf]
    %v240 = vld [vmem:[%s3 + $0x2c] sm:$0xf]
    %v241 = vld [vmem:[%s3 + $0x30] sm:$0xf]
    %v242 = vld [vmem:[%s3 + $0x34] sm:$0xf]
    %v243 = vld [vmem:[%s3 + $0x38] sm:$0xf]
    %v244 = vld [vmem:[%s3 + $0x3c] sm:$0xf]
    %v246 = vlaneseq
    %v247 = vshrl.u32 %v246, 7
    %v248 = vsub.s32 0, %v247
    %v249 = vrot.slane %v227, %v248
    %v267 = vunpack.c.l.b16 %v229
    %v268 = vunpack.c.l.b16 %v230
    %v269 = vunpack.c.l.b16 %v231
    %v270 = vunpack.c.l.b16 %v232
    %v271 = vunpack.c.l.b16 %v233
    %v272 = vunpack.c.l.b16 %v234
    %v273 = vunpack.c.l.b16 %v235
    %v274 = vunpack.c.l.b16 %v236
    %v275 = vunpack.c.l.b16 %v237
    %v276 = vunpack.c.l.b16 %v238
    %v277 = vunpack.c.l.b16 %v239
    %v278 = vunpack.c.l.b16 %v240
    %v279 = vunpack.c.l.b16 %v241
    %v280 = vunpack.c.l.b16 %v242
    %v281 = vunpack.c.l.b16 %v243
    %v282 = vunpack.c.l.b16 %v244
    %v283 = vpack.c.b16 %v268, %v267
    %v284 = vpack.c.b16 %v270, %v269
    %v285 = vpack.c.b16 %v272, %v271
    %v286 = vpack.c.b16 %v274, %v273
    %v287 = vpack.c.b16 %v276, %v275
    %v288 = vpack.c.b16 %v278, %v277
    %v289 = vpack.c.b16 %v280, %v279
    %v290 = vpack.c.b16 %v282, %v281
    %299 = vmatprep.subr.bf16.mxu0 0
    %300 = vmatpush1.bf16.msra.mxu0 %v283
    %301 = vmatprep.subr.bf16.mxu0 0
    %302 = vmatpush1.bf16.msra.mxu0 %v284
    %303 = vmatprep.subr.bf16.mxu0 0
    %304 = vmatpush1.bf16.msra.mxu0 %v285
    %305 = vmatprep.subr.bf16.mxu0 0
    %306 = vmatpush1.bf16.msra.mxu0 %v286
    %307 = vmatprep.subr.bf16.mxu0 0
    %308 = vmatpush1.bf16.msra.mxu0 %v287
    %309 = vmatprep.subr.bf16.mxu0 0
    %310 = vmatpush1.bf16.msra.mxu0 %v288
    %311 = vmatprep.subr.bf16.mxu0 0
    %312 = vmatpush1.bf16.msra.mxu0 %v289
    %313 = vmatprep.subr.bf16.mxu0 0
    %314 = vmatpush1.bf16.msra.mxu0 %v290
    %315 = vmatprep.subr.bf16.mxu0 0
    %316 = vmatpush1.bf16.msra.mxu0 0
    %317 = vmatprep.subr.bf16.mxu0 0
    %318 = vmatpush1.bf16.msra.mxu0 0
    %319 = vmatprep.subr.bf16.mxu0 0
    %320 = vmatpush1.bf16.msra.mxu0 0
    %321 = vmatprep.subr.bf16.mxu0 0
    %322 = vmatpush1.bf16.msra.mxu0 0
    %323 = vmatprep.subr.bf16.mxu0 0
    %324 = vmatpush1.bf16.msra.mxu0 0
    %325 = vmatprep.subr.bf16.mxu0 0
    %326 = vmatpush1.bf16.msra.mxu0 0
    %327 = vmatprep.subr.bf16.mxu0 0
    %328 = vmatpush1.bf16.msra.mxu0 0
    %329 = vmatprep.subr.bf16.mxu0 0
    %330 = vmatpush1.bf16.msra.mxu0 0
    %331 = vmatprep.mubr.bf16.mxu0 0
    %332 = vmatmul.mubr.bf16.gmra.mrb[0].mxu0 %v228
    %v333 = vpop.f32.mrb[0].mxu0
    %v334 = vadd.f32 %v249, %v333
    %v335 = vpop.f32.mrb[0].mxu0
    %v336 = vpop.f32.mrb[0].mxu0
    %v337 = vpop.f32.mrb[0].mxu0
    %338 = vdwg.mxu0
    %v339 = vrot.slane %v334, 4
    %v340 = vadd.f32 %v334, %v339
    %v341 = vrot.slane %v340, 2
    %v342 = vadd.f32 %v340, %v341
    %v343 = vrot.slane %v342, 1
    %v344 = vadd.f32 %v342, %v343
    %v345 = vmul.f32 %v227, 24.0
    %v346 = vadd.f32 %v344, %v345
    %v347 = vmul.f32 %v334, %v334
    %v348 = vrot.slane %v347, 4
    %v349 = vadd.f32 %v347, %v348
    %v350 = vrot.slane %v349, 2
    %v351 = vadd.f32 %v349, %v350
    %v352 = vrot.slane %v351, 1
    %v353 = vadd.f32 %v351, %v352
    %v354 = vmul.f32 %v227, %v227
    %v355 = vmul.f32 %v354, 24.0
    %v356 = vadd.f32 %v353, %v355
    %v357 = vmul.f32 %v346, 0.03125
    %v358 = vmul.f32 %v356, 0.03125
    %v359 = vmul.f32 %v357, %v357
    %v360 = vsub.f32 %v358, %v359
    %v361 = vmax.f32 %v360, 0.0
    %v362 = vadd.f32 %v361, 1e-05
    %v363 = vrsqrt.pop %v362
    %v364 = vld [vmem:[%s5] sm:$0x1]
    %v365 = vmul.f32 %v363, %v364
    %v366 = vld [vmem:[%s6] sm:$0x1]
    %v367 = vmul.f32 %v357, %v365
    %v368 = vsub.f32 %v366, %v367
    %v369 = vlaneseq
    %v370 = vshrl.u32 %v369, 7
    %v371 = vsub.s32 0, %v370
    %v372 = vrot.slane %v365, %v371
    %v373 = vmul.f32 %v334, %v372
    %v375 = vlaneseq
    %v376 = vshrl.u32 %v375, 7
    %v377 = vsub.s32 0, %v376
    %v378 = vrot.slane %v368, %v377
    %v380 = vadd.f32 %v373, %v378
    %v381 = vmax.f32 %v380, 0.0
    %v382 = vmul.f32 %v227, %v365
    %v383 = vadd.f32 %v382, %v368
    %v384 = vmax.f32 %v383, 0.0
    %v385 = vpack.c.bf16 %v381, %v381
    %v386 = vld [vmem:[%s7] sm:$0xf]
    %v387 = vld [vmem:[%s7 + $0x4] sm:$0xf]
    %v388 = vld [vmem:[%s7 + $0x8] sm:$0xf]
    %v389 = vld [vmem:[%s7 + $0xc] sm:$0xf]
    %v390 = vld [vmem:[%s7 + $0x10] sm:$0xf]
    %v391 = vld [vmem:[%s7 + $0x14] sm:$0xf]
    %v392 = vld [vmem:[%s7 + $0x18] sm:$0xf]
    %v393 = vld [vmem:[%s7 + $0x1c] sm:$0xf]
    %v394 = vld [vmem:[%s7 + $0x20] sm:$0xf]
    %v395 = vld [vmem:[%s7 + $0x24] sm:$0xf]
    %v396 = vld [vmem:[%s7 + $0x28] sm:$0xf]
    %v397 = vld [vmem:[%s7 + $0x2c] sm:$0xf]
    %v398 = vld [vmem:[%s7 + $0x30] sm:$0xf]
    %v399 = vld [vmem:[%s7 + $0x34] sm:$0xf]
    %v400 = vld [vmem:[%s7 + $0x38] sm:$0xf]
    %v401 = vld [vmem:[%s7 + $0x3c] sm:$0xf]
    %s402 = scalar_lea.vmem %s7, 64
    %v403 = vld [vmem:[%s402] sm:$0xf]
    %v404 = vld [vmem:[%s402 + $0x4] sm:$0xf]
    %v405 = vld [vmem:[%s402 + $0x8] sm:$0xf]
    %v406 = vld [vmem:[%s402 + $0xc] sm:$0xf]
    %v407 = vld [vmem:[%s402 + $0x10] sm:$0xf]
    %v408 = vld [vmem:[%s402 + $0x14] sm:$0xf]
    %v409 = vld [vmem:[%s402 + $0x18] sm:$0xf]
    %v410 = vld [vmem:[%s402 + $0x1c] sm:$0xf]
    %v411 = vld [vmem:[%s402 + $0x20] sm:$0xf]
    %v412 = vld [vmem:[%s402 + $0x24] sm:$0xf]
    %v413 = vld [vmem:[%s402 + $0x28] sm:$0xf]
    %v414 = vld [vmem:[%s402 + $0x2c] sm:$0xf]
    %v415 = vld [vmem:[%s402 + $0x30] sm:$0xf]
    %v416 = vld [vmem:[%s402 + $0x34] sm:$0xf]
    %v417 = vld [vmem:[%s402 + $0x38] sm:$0xf]
    %v418 = vld [vmem:[%s402 + $0x3c] sm:$0xf]
    %v420 = vrot.slane %v385, 1
    %v438 = vunpack.c.l.b16 %v403
    %v439 = vunpack.c.l.b16 %v404
    %v440 = vunpack.c.l.b16 %v405
    %v441 = vunpack.c.l.b16 %v406
    %v442 = vunpack.c.l.b16 %v407
    %v443 = vunpack.c.l.b16 %v408
    %v444 = vunpack.c.l.b16 %v409
    %v445 = vunpack.c.l.b16 %v410
    %v446 = vunpack.c.l.b16 %v411
    %v447 = vunpack.c.l.b16 %v412
    %v448 = vunpack.c.l.b16 %v413
    %v449 = vunpack.c.l.b16 %v414
    %v450 = vunpack.c.l.b16 %v415
    %v451 = vunpack.c.l.b16 %v416
    %v452 = vunpack.c.l.b16 %v417
    %v453 = vunpack.c.l.b16 %v418
    %v454 = vpack.c.b16 %v439, %v438
    %v455 = vpack.c.b16 %v441, %v440
    %v456 = vpack.c.b16 %v443, %v442
    %v457 = vpack.c.b16 %v445, %v444
    %v458 = vpack.c.b16 %v447, %v446
    %v459 = vpack.c.b16 %v449, %v448
    %v460 = vpack.c.b16 %v451, %v450
    %v461 = vpack.c.b16 %v453, %v452
    %470 = vmatprep.subr.bf16.mxu0 0
    %471 = vmatpush1.bf16.msra.mxu0 %v454
    %472 = vmatprep.subr.bf16.mxu0 0
    %473 = vmatpush1.bf16.msra.mxu0 %v455
    %474 = vmatprep.subr.bf16.mxu0 0
    %475 = vmatpush1.bf16.msra.mxu0 %v456
    %476 = vmatprep.subr.bf16.mxu0 0
    %477 = vmatpush1.bf16.msra.mxu0 %v457
    %478 = vmatprep.subr.bf16.mxu0 0
    %479 = vmatpush1.bf16.msra.mxu0 %v458
    %480 = vmatprep.subr.bf16.mxu0 0
    %481 = vmatpush1.bf16.msra.mxu0 %v459
    %482 = vmatprep.subr.bf16.mxu0 0
    %483 = vmatpush1.bf16.msra.mxu0 %v460
    %484 = vmatprep.subr.bf16.mxu0 0
    %485 = vmatpush1.bf16.msra.mxu0 %v461
    %486 = vmatprep.subr.bf16.mxu0 0
    %487 = vmatpush1.bf16.msra.mxu0 0
    %488 = vmatprep.subr.bf16.mxu0 0
    %489 = vmatpush1.bf16.msra.mxu0 0
    %490 = vmatprep.subr.bf16.mxu0 0
    %491 = vmatpush1.bf16.msra.mxu0 0
    %492 = vmatprep.subr.bf16.mxu0 0
    %493 = vmatpush1.bf16.msra.mxu0 0
    %494 = vmatprep.subr.bf16.mxu0 0
    %495 = vmatpush1.bf16.msra.mxu0 0
    %496 = vmatprep.subr.bf16.mxu0 0
    %497 = vmatpush1.bf16.msra.mxu0 0
    %498 = vmatprep.subr.bf16.mxu0 0
    %499 = vmatpush1.bf16.msra.mxu0 0
    %500 = vmatprep.subr.bf16.mxu0 0
    %501 = vmatpush1.bf16.msra.mxu0 0
    %502 = vmatprep.mubr.bf16.mxu0 0
    %503 = vmatmul.mubr.bf16.gmra.mrb[0].mxu0 %v420
    %v504 = vpop.f32.mrb[0].mxu0
    %v505 = vadd.f32 0.0, %v504
    %v506 = vpop.f32.mrb[0].mxu0
    %v507 = vpop.f32.mrb[0].mxu0
    %v508 = vpop.f32.mrb[0].mxu0
    %509 = vdwg.mxu0
    %v526 = vunpack.c.l.b16 %v386
    %v527 = vunpack.c.l.b16 %v387
    %v528 = vunpack.c.l.b16 %v388
    %v529 = vunpack.c.l.b16 %v389
    %v530 = vunpack.c.l.b16 %v390
    %v531 = vunpack.c.l.b16 %v391
    %v532 = vunpack.c.l.b16 %v392
    %v533 = vunpack.c.l.b16 %v393
    %v534 = vunpack.c.l.b16 %v394
    %v535 = vunpack.c.l.b16 %v395
    %v536 = vunpack.c.l.b16 %v396
    %v537 = vunpack.c.l.b16 %v397
    %v538 = vunpack.c.l.b16 %v398
    %v539 = vunpack.c.l.b16 %v399
    %v540 = vunpack.c.l.b16 %v400
    %v541 = vunpack.c.l.b16 %v401
    %v542 = vpack.c.b16 %v527, %v526
    %v543 = vpack.c.b16 %v529, %v528
    %v544 = vpack.c.b16 %v531, %v530
    %v545 = vpack.c.b16 %v533, %v532
    %v546 = vpack.c.b16 %v535, %v534
    %v547 = vpack.c.b16 %v537, %v536
    %v548 = vpack.c.b16 %v539, %v538
    %v549 = vpack.c.b16 %v541, %v540
    %558 = vmatprep.subr.bf16.mxu0 0
    %559 = vmatpush1.bf16.msra.mxu0 %v542
    %560 = vmatprep.subr.bf16.mxu0 0
    %561 = vmatpush1.bf16.msra.mxu0 %v543
    %562 = vmatprep.subr.bf16.mxu0 0
    %563 = vmatpush1.bf16.msra.mxu0 %v544
    %564 = vmatprep.subr.bf16.mxu0 0
    %565 = vmatpush1.bf16.msra.mxu0 %v545
    %566 = vmatprep.subr.bf16.mxu0 0
    %567 = vmatpush1.bf16.msra.mxu0 %v546
    %568 = vmatprep.subr.bf16.mxu0 0
    %569 = vmatpush1.bf16.msra.mxu0 %v547
    %570 = vmatprep.subr.bf16.mxu0 0
    %571 = vmatpush1.bf16.msra.mxu0 %v548
    %572 = vmatprep.subr.bf16.mxu0 0
    %573 = vmatpush1.bf16.msra.mxu0 %v549
    %574 = vmatprep.subr.bf16.mxu0 0
    %575 = vmatpush1.bf16.msra.mxu0 0
    %576 = vmatprep.subr.bf16.mxu0 0
    %577 = vmatpush1.bf16.msra.mxu0 0
    %578 = vmatprep.subr.bf16.mxu0 0
    %579 = vmatpush1.bf16.msra.mxu0 0
    %580 = vmatprep.subr.bf16.mxu0 0
    %581 = vmatpush1.bf16.msra.mxu0 0
    %582 = vmatprep.subr.bf16.mxu0 0
    %583 = vmatpush1.bf16.msra.mxu0 0
    %584 = vmatprep.subr.bf16.mxu0 0
    %585 = vmatpush1.bf16.msra.mxu0 0
    %586 = vmatprep.subr.bf16.mxu0 0
    %587 = vmatpush1.bf16.msra.mxu0 0
    %588 = vmatprep.subr.bf16.mxu0 0
    %589 = vmatpush1.bf16.msra.mxu0 0
    %590 = vmatprep.mubr.bf16.mxu0 0
    %591 = vmatmul.mubr.bf16.gmra.mrb[0].mxu0 %v385
    %v592 = vpop.f32.mrb[0].mxu0
    %v593 = vadd.f32 %v505, %v592
    %v594 = vpop.f32.mrb[0].mxu0
    %v595 = vpop.f32.mrb[0].mxu0
    %v596 = vpop.f32.mrb[0].mxu0
    %597 = vdwg.mxu0
    %s598 = scalar_lea.vmem %s7, 128
    %v599 = vld [vmem:[%s598] sm:$0xf]
    %v600 = vld [vmem:[%s598 + $0x4] sm:$0xf]
    %v601 = vld [vmem:[%s598 + $0x8] sm:$0xf]
    %v602 = vld [vmem:[%s598 + $0xc] sm:$0xf]
    %v603 = vld [vmem:[%s598 + $0x10] sm:$0xf]
    %v604 = vld [vmem:[%s598 + $0x14] sm:$0xf]
    %v605 = vld [vmem:[%s598 + $0x18] sm:$0xf]
    %v606 = vld [vmem:[%s598 + $0x1c] sm:$0xf]
    %v607 = vld [vmem:[%s598 + $0x20] sm:$0xf]
    %v608 = vld [vmem:[%s598 + $0x24] sm:$0xf]
    %v609 = vld [vmem:[%s598 + $0x28] sm:$0xf]
    %v610 = vld [vmem:[%s598 + $0x2c] sm:$0xf]
    %v611 = vld [vmem:[%s598 + $0x30] sm:$0xf]
    %v612 = vld [vmem:[%s598 + $0x34] sm:$0xf]
    %v613 = vld [vmem:[%s598 + $0x38] sm:$0xf]
    %v614 = vld [vmem:[%s598 + $0x3c] sm:$0xf]
    %v615 = vrot.slane %v385, 2
    %v633 = vunpack.c.l.b16 %v599
    %v634 = vunpack.c.l.b16 %v600
    %v635 = vunpack.c.l.b16 %v601
    %v636 = vunpack.c.l.b16 %v602
    %v637 = vunpack.c.l.b16 %v603
    %v638 = vunpack.c.l.b16 %v604
    %v639 = vunpack.c.l.b16 %v605
    %v640 = vunpack.c.l.b16 %v606
    %v641 = vunpack.c.l.b16 %v607
    %v642 = vunpack.c.l.b16 %v608
    %v643 = vunpack.c.l.b16 %v609
    %v644 = vunpack.c.l.b16 %v610
    %v645 = vunpack.c.l.b16 %v611
    %v646 = vunpack.c.l.b16 %v612
    %v647 = vunpack.c.l.b16 %v613
    %v648 = vunpack.c.l.b16 %v614
    %v649 = vpack.c.b16 %v634, %v633
    %v650 = vpack.c.b16 %v636, %v635
    %v651 = vpack.c.b16 %v638, %v637
    %v652 = vpack.c.b16 %v640, %v639
    %v653 = vpack.c.b16 %v642, %v641
    %v654 = vpack.c.b16 %v644, %v643
    %v655 = vpack.c.b16 %v646, %v645
    %v656 = vpack.c.b16 %v648, %v647
    %665 = vmatprep.subr.bf16.mxu0 0
    %666 = vmatpush1.bf16.msra.mxu0 %v649
    %667 = vmatprep.subr.bf16.mxu0 0
    %668 = vmatpush1.bf16.msra.mxu0 %v650
    %669 = vmatprep.subr.bf16.mxu0 0
    %670 = vmatpush1.bf16.msra.mxu0 %v651
    %671 = vmatprep.subr.bf16.mxu0 0
    %672 = vmatpush1.bf16.msra.mxu0 %v652
    %673 = vmatprep.subr.bf16.mxu0 0
    %674 = vmatpush1.bf16.msra.mxu0 %v653
    %675 = vmatprep.subr.bf16.mxu0 0
    %676 = vmatpush1.bf16.msra.mxu0 %v654
    %677 = vmatprep.subr.bf16.mxu0 0
    %678 = vmatpush1.bf16.msra.mxu0 %v655
    %679 = vmatprep.subr.bf16.mxu0 0
    %680 = vmatpush1.bf16.msra.mxu0 %v656
    %681 = vmatprep.subr.bf16.mxu0 0
    %682 = vmatpush1.bf16.msra.mxu0 0
    %683 = vmatprep.subr.bf16.mxu0 0
    %684 = vmatpush1.bf16.msra.mxu0 0
    %685 = vmatprep.subr.bf16.mxu0 0
    %686 = vmatpush1.bf16.msra.mxu0 0
    %687 = vmatprep.subr.bf16.mxu0 0
    %688 = vmatpush1.bf16.msra.mxu0 0
    %689 = vmatprep.subr.bf16.mxu0 0
    %690 = vmatpush1.bf16.msra.mxu0 0
    %691 = vmatprep.subr.bf16.mxu0 0
    %692 = vmatpush1.bf16.msra.mxu0 0
    %693 = vmatprep.subr.bf16.mxu0 0
    %694 = vmatpush1.bf16.msra.mxu0 0
    %695 = vmatprep.subr.bf16.mxu0 0
    %696 = vmatpush1.bf16.msra.mxu0 0
    %697 = vmatprep.mubr.bf16.mxu0 0
    %698 = vmatmul.mubr.bf16.gmra.mrb[0].mxu0 %v615
    %v699 = vpop.f32.mrb[0].mxu0
    %v700 = vadd.f32 0.0, %v699
    %v701 = vpop.f32.mrb[0].mxu0
    %v702 = vpop.f32.mrb[0].mxu0
    %v703 = vpop.f32.mrb[0].mxu0
    %704 = vdwg.mxu0
    %v705 = vadd.f32 %v593, %v700
    %s706 = scalar_lea.vmem %s7, 192
    %v707 = vld [vmem:[%s706] sm:$0xf]
    %v708 = vld [vmem:[%s706 + $0x4] sm:$0xf]
    %v709 = vld [vmem:[%s706 + $0x8] sm:$0xf]
    %v710 = vld [vmem:[%s706 + $0xc] sm:$0xf]
    %v711 = vld [vmem:[%s706 + $0x10] sm:$0xf]
    %v712 = vld [vmem:[%s706 + $0x14] sm:$0xf]
    %v713 = vld [vmem:[%s706 + $0x18] sm:$0xf]
    %v714 = vld [vmem:[%s706 + $0x1c] sm:$0xf]
    %v715 = vld [vmem:[%s706 + $0x20] sm:$0xf]
    %v716 = vld [vmem:[%s706 + $0x24] sm:$0xf]
    %v717 = vld [vmem:[%s706 + $0x28] sm:$0xf]
    %v718 = vld [vmem:[%s706 + $0x2c] sm:$0xf]
    %v719 = vld [vmem:[%s706 + $0x30] sm:$0xf]
    %v720 = vld [vmem:[%s706 + $0x34] sm:$0xf]
    %v721 = vld [vmem:[%s706 + $0x38] sm:$0xf]
    %v722 = vld [vmem:[%s706 + $0x3c] sm:$0xf]
    %v723 = vrot.slane %v385, 3
    %v741 = vunpack.c.l.b16 %v707
    %v742 = vunpack.c.l.b16 %v708
    %v743 = vunpack.c.l.b16 %v709
    %v744 = vunpack.c.l.b16 %v710
    %v745 = vunpack.c.l.b16 %v711
    %v746 = vunpack.c.l.b16 %v712
    %v747 = vunpack.c.l.b16 %v713
    %v748 = vunpack.c.l.b16 %v714
    %v749 = vunpack.c.l.b16 %v715
    %v750 = vunpack.c.l.b16 %v716
    %v751 = vunpack.c.l.b16 %v717
    %v752 = vunpack.c.l.b16 %v718
    %v753 = vunpack.c.l.b16 %v719
    %v754 = vunpack.c.l.b16 %v720
    %v755 = vunpack.c.l.b16 %v721
    %v756 = vunpack.c.l.b16 %v722
    %v757 = vpack.c.b16 %v742, %v741
    %v758 = vpack.c.b16 %v744, %v743
    %v759 = vpack.c.b16 %v746, %v745
    %v760 = vpack.c.b16 %v748, %v747
    %v761 = vpack.c.b16 %v750, %v749
    %v762 = vpack.c.b16 %v752, %v751
    %v763 = vpack.c.b16 %v754, %v753
    %v764 = vpack.c.b16 %v756, %v755
    %773 = vmatprep.subr.bf16.mxu0 0
    %774 = vmatpush1.bf16.msra.mxu0 %v757
    %775 = vmatprep.subr.bf16.mxu0 0
    %776 = vmatpush1.bf16.msra.mxu0 %v758
    %777 = vmatprep.subr.bf16.mxu0 0
    %778 = vmatpush1.bf16.msra.mxu0 %v759
    %779 = vmatprep.subr.bf16.mxu0 0
    %780 = vmatpush1.bf16.msra.mxu0 %v760
    %781 = vmatprep.subr.bf16.mxu0 0
    %782 = vmatpush1.bf16.msra.mxu0 %v761
    %783 = vmatprep.subr.bf16.mxu0 0
    %784 = vmatpush1.bf16.msra.mxu0 %v762
    %785 = vmatprep.subr.bf16.mxu0 0
    %786 = vmatpush1.bf16.msra.mxu0 %v763
    %787 = vmatprep.subr.bf16.mxu0 0
    %788 = vmatpush1.bf16.msra.mxu0 %v764
    %789 = vmatprep.subr.bf16.mxu0 0
    %790 = vmatpush1.bf16.msra.mxu0 0
    %791 = vmatprep.subr.bf16.mxu0 0
    %792 = vmatpush1.bf16.msra.mxu0 0
    %793 = vmatprep.subr.bf16.mxu0 0
    %794 = vmatpush1.bf16.msra.mxu0 0
    %795 = vmatprep.subr.bf16.mxu0 0
    %796 = vmatpush1.bf16.msra.mxu0 0
    %797 = vmatprep.subr.bf16.mxu0 0
    %798 = vmatpush1.bf16.msra.mxu0 0
    %799 = vmatprep.subr.bf16.mxu0 0
    %800 = vmatpush1.bf16.msra.mxu0 0
    %801 = vmatprep.subr.bf16.mxu0 0
    %802 = vmatpush1.bf16.msra.mxu0 0
    %803 = vmatprep.subr.bf16.mxu0 0
    %804 = vmatpush1.bf16.msra.mxu0 0
    %805 = vmatprep.mubr.bf16.mxu0 0
    %806 = vmatmul.mubr.bf16.gmra.mrb[0].mxu0 %v723
    %v807 = vpop.f32.mrb[0].mxu0
    %v808 = vadd.f32 0.0, %v807
    %v809 = vpop.f32.mrb[0].mxu0
    %v810 = vpop.f32.mrb[0].mxu0
    %v811 = vpop.f32.mrb[0].mxu0
    %812 = vdwg.mxu0
    %v813 = vadd.f32 %v705, %v808
    %v815 = vlaneseq
    %v816 = vshrl.u32 %v815, 7
    %v817 = vsub.s32 0, %v816
    %v818 = vrot.slane %v384, %v817
    %v820 = vpack.c.bf16 %v818, %v818
    %v821 = vld [vmem:[%s8] sm:$0xf]
    %v822 = vld [vmem:[%s8 + $0x4] sm:$0xf]
    %v823 = vld [vmem:[%s8 + $0x8] sm:$0xf]
    %v824 = vld [vmem:[%s8 + $0xc] sm:$0xf]
    %v825 = vld [vmem:[%s8 + $0x10] sm:$0xf]
    %v826 = vld [vmem:[%s8 + $0x14] sm:$0xf]
    %v827 = vld [vmem:[%s8 + $0x18] sm:$0xf]
    %v828 = vld [vmem:[%s8 + $0x1c] sm:$0xf]
    %v829 = vld [vmem:[%s8 + $0x20] sm:$0xf]
    %v830 = vld [vmem:[%s8 + $0x24] sm:$0xf]
    %v831 = vld [vmem:[%s8 + $0x28] sm:$0xf]
    %v832 = vld [vmem:[%s8 + $0x2c] sm:$0xf]
    %v833 = vld [vmem:[%s8 + $0x30] sm:$0xf]
    %v834 = vld [vmem:[%s8 + $0x34] sm:$0xf]
    %v835 = vld [vmem:[%s8 + $0x38] sm:$0xf]
    %v836 = vld [vmem:[%s8 + $0x3c] sm:$0xf]
    %v853 = vunpack.c.l.b16 %v821
    %v854 = vunpack.c.l.b16 %v822
    %v855 = vunpack.c.l.b16 %v823
    %v856 = vunpack.c.l.b16 %v824
    %v857 = vunpack.c.l.b16 %v825
    %v858 = vunpack.c.l.b16 %v826
    %v859 = vunpack.c.l.b16 %v827
    %v860 = vunpack.c.l.b16 %v828
    %v861 = vunpack.c.l.b16 %v829
    %v862 = vunpack.c.l.b16 %v830
    %v863 = vunpack.c.l.b16 %v831
    %v864 = vunpack.c.l.b16 %v832
    %v865 = vunpack.c.l.b16 %v833
    %v866 = vunpack.c.l.b16 %v834
    %v867 = vunpack.c.l.b16 %v835
    %v868 = vunpack.c.l.b16 %v836
    %v869 = vpack.c.b16 %v854, %v853
    %v870 = vpack.c.b16 %v856, %v855
    %v871 = vpack.c.b16 %v858, %v857
    %v872 = vpack.c.b16 %v860, %v859
    %v873 = vpack.c.b16 %v862, %v861
    %v874 = vpack.c.b16 %v864, %v863
    %v875 = vpack.c.b16 %v866, %v865
    %v876 = vpack.c.b16 %v868, %v867
    %885 = vmatprep.subr.bf16.mxu0 0
    %886 = vmatpush1.bf16.msra.mxu0 %v869
    %887 = vmatprep.subr.bf16.mxu0 0
    %888 = vmatpush1.bf16.msra.mxu0 %v870
    %889 = vmatprep.subr.bf16.mxu0 0
    %890 = vmatpush1.bf16.msra.mxu0 %v871
    %891 = vmatprep.subr.bf16.mxu0 0
    %892 = vmatpush1.bf16.msra.mxu0 %v872
    %893 = vmatprep.subr.bf16.mxu0 0
    %894 = vmatpush1.bf16.msra.mxu0 %v873
    %895 = vmatprep.subr.bf16.mxu0 0
    %896 = vmatpush1.bf16.msra.mxu0 %v874
    %897 = vmatprep.subr.bf16.mxu0 0
    %898 = vmatpush1.bf16.msra.mxu0 %v875
    %899 = vmatprep.subr.bf16.mxu0 0
    %900 = vmatpush1.bf16.msra.mxu0 %v876
    %901 = vmatprep.subr.bf16.mxu0 0
    %902 = vmatpush1.bf16.msra.mxu0 0
    %903 = vmatprep.subr.bf16.mxu0 0
    %904 = vmatpush1.bf16.msra.mxu0 0
    %905 = vmatprep.subr.bf16.mxu0 0
    %906 = vmatpush1.bf16.msra.mxu0 0
    %907 = vmatprep.subr.bf16.mxu0 0
    %908 = vmatpush1.bf16.msra.mxu0 0
    %909 = vmatprep.subr.bf16.mxu0 0
    %910 = vmatpush1.bf16.msra.mxu0 0
    %911 = vmatprep.subr.bf16.mxu0 0
    %912 = vmatpush1.bf16.msra.mxu0 0
    %913 = vmatprep.subr.bf16.mxu0 0
    %914 = vmatpush1.bf16.msra.mxu0 0
    %915 = vmatprep.subr.bf16.mxu0 0
    %916 = vmatpush1.bf16.msra.mxu0 0
    %917 = vmatprep.mubr.bf16.mxu0 0
    %918 = vmatmul.mubr.bf16.gmra.mrb[0].mxu0 %v820
    %v919 = vpop.f32.mrb[0].mxu0
    %v920 = vadd.f32 0.0, %v919
    %v921 = vpop.f32.mrb[0].mxu0
    %v922 = vpop.f32.mrb[0].mxu0
    %v923 = vpop.f32.mrb[0].mxu0
    %924 = vdwg.mxu0
    %v925 = vadd.f32 %v813, %v920
    %v926 = vld [vmem:[%s9] sm:$0x1]
    %v928 = vlaneseq
    %v929 = vshrl.u32 %v928, 7
    %v930 = vsub.s32 0, %v929
    %v931 = vrot.slane %v926, %v930
    %v933 = vadd.f32 %v925, %v931
    %934 = vst [vmem:[#allocation2] sm:$0x3] %v933
    // Predicated region
    $region42: #{network_forward.5} parent=1 // pred_check
      _
    $region43: #{network_forward.5} parent=1 // pred_check_branch
      %936 = sbr.rel (0) target = $region45
    $region44: #{network_forward.5} parent=1 // pred_region
      %s938 = ssub.s32 32, 32
      %939 = vsyncadd [#allocation3], %s938
      %s941 = sshll.u32 [#allocation2], 4
      %s942 = int_to_ptr.vmem [resolvable:$true] %s941
      %944 = dma.vmem_to_hbm [thread:$0]  %s942, 32, %s10, [#allocation3]
    $region45: #{network_forward.5} parent=1 // pred_fallthru
      _
    // Predicated region
    $region46: #{network_forward.5} parent=1 // pred_check
      _
    $region47: #{network_forward.5} parent=1 // pred_check_branch
      %946 = sbr.rel (0) target = $region49
    $region48: #{network_forward.5} parent=1 // pred_region
      %947 = dma.done [#allocation3], 32
    $region49: #{network_forward.5} parent=1 // pred_fallthru
      _
    %948 = vsyncpa [#allocation3], 1

</llo_original>
